<compile_context>
chip_gen: v6e
topology: v6e:2x2x1
jax: 0.10.0
libtpu: 0.0.40
codegen_flags: <defaults>
</compile_context>

<pallas_src>
import functools

import jax
import jax.numpy as jnp
from jax.experimental import pallas as pl
from jax.experimental.pallas import tpu as pltpu

MEAN = 0.8849385890565288
STD = 0.2190219816947061
BN_EPS = 1e-5

# (Cin, Cout, kernel, stride) for the four ConvBlocks.
LAYERS = ((2, 4, 7, 3), (4, 16, 7, 3), (16, 64, 5, 2), (64, 128, 5, 2))
FEAT_DIM = sum(c for _, c, _, _ in LAYERS)  # 4 + 16 + 64 + 128 = 212


# ---------------- in-kernel ConvBlock helper ----------------

def _conv_bn_relu(act_ref, batch, win, cin, cout, k, s, w_ref, g_ref, b_ref):
    """One ConvBlock on a channels-last VMEM activation buffer.

    act_ref: (batch*win, cin) VMEM ref. w_ref: (k*cin, cout) matmul-ready weight with
    row order (tap, in_channel). Returns the (batch*wout, cout) post-ReLU value.
    """
    wout = (win - k) // s + 1
    acc = None
    for kk in range(k):
        cols = []
        for b in range(batch):
            start = b * win + kk
            if wout > 1:
                cols.append(act_ref[pl.ds(start, wout, stride=s), :])  # (wout, cin)
            else:
                cols.append(act_ref[pl.ds(start, 1), :])
        col = cols[0] if batch == 1 else jnp.concatenate(cols, axis=0)  # (batch*wout, cin)
        term = jnp.dot(col, w_ref[kk * cin:(kk + 1) * cin, :],
                       preferred_element_type=jnp.float32)              # (batch*wout, cout)
        acc = term if acc is None else acc + term
    # BatchNorm1d over (batch, width) per channel, train-mode batch statistics.
    mu = jnp.mean(acc, axis=0, keepdims=True)
    xc = acc - mu
    var = jnp.mean(xc * xc, axis=0, keepdims=True)   # biased var, as PyTorch BN fwd
    y = xc * jax.lax.rsqrt(var + BN_EPS) * g_ref[...] + b_ref[...]
    return jnp.maximum(y, 0.0), wout


# ---------------- fused forward kernel ----------------

def fused_net_kernel(xt_ref,
                     w1_ref, g1_ref, b1_ref,
                     w2_ref, g2_ref, b2_ref,
                     w3_ref, g3_ref, b3_ref,
                     w4_ref, g4_ref, b4_ref,
                     fc1_ref, gp_ref, bp_ref, fc2_ref, fb2_ref,
                     out_ref,
                     act0_ref, act1_ref, act2_ref, act3_ref):
    win, batch = xt_ref.shape

    # ---- prep: normalize, add batch-mean channel, store channels-last in VMEM ----
    xn = (xt_ref[...] - MEAN) / STD                    # (W, B)
    avg = jnp.mean(xn, axis=1, keepdims=True)          # (W, 1): mean over the batch
    for b in range(batch):
        act0_ref[b * win:(b + 1) * win, 0:1] = xn[:, b:b + 1]
        act0_ref[b * win:(b + 1) * win, 1:2] = avg

    conv_params = ((w1_ref, g1_ref, b1_ref), (w2_ref, g2_ref, b2_ref),
                   (w3_ref, g3_ref, b3_ref), (w4_ref, g4_ref, b4_ref))
    act_refs = (act0_ref, act1_ref, act2_ref, act3_ref)

    # ---- four ConvBlocks, all activations resident in VMEM ----
    feats = []
    w = win
    for li, (cin, cout, k, s) in enumerate(LAYERS):
        y, wout = _conv_bn_relu(act_refs[li], batch, w, cin, cout, k, s,
                                *conv_params[li])
        # x_l[:, :, 0] in channels-last layout == row b*wout of each sample.
        if batch == 1:
            feats.append(y[0:1, :])
        else:
            feats.append(jnp.concatenate(
                [y[b * wout:b * wout + 1, :] for b in range(batch)], axis=0))
        if li + 1 < len(LAYERS):
            act_refs[li + 1][...] = y
        w = wout

    # ---- head: Linear(212,212,no bias) as blockwise matmul over the feature groups
    #      (equivalent to concatenating feat), then BN + ReLU + Linear(212,1).
    h = None
    off = 0
    for f in feats:
        c = f.shape[1]
        part = jnp.dot(f, fc1_ref[off:off + c, :], preferred_element_type=jnp.float32)
        h = part if h is None else h + part
        off += c
    mu = jnp.mean(h, axis=0, keepdims=True)
    hc = h - mu
    var = jnp.mean(hc * hc, axis=0, keepdims=True)
    h = jnp.maximum(hc * jax.lax.rsqrt(var + BN_EPS) * gp_ref[...] + bp_ref[...], 0.0)
    out_ref[...] = jnp.dot(h, fc2_ref[...],
                           preferred_element_type=jnp.float32) + fb2_ref[...]


# ---------------- JAX glue ----------------

def _zero_index_map(i, *, ndim):
    return (0,) * ndim


def net_forward(x, prep):
    """x: (B, 1, W) float32; prep: matmul-ready parameters from prepare_params()."""
    B, C, W = x.shape
    assert C == 1  # forward concatenates the channel with its batch mean -> Cin=2

    widths = [W]
    for (_, _, k, s) in LAYERS:
        widths.append((widths[-1] - k) // s + 1)
    assert widths[-1] >= 1, "input too short for the four conv layers"

    xt = jnp.transpose(x[:, 0, :]).astype(jnp.float32)   # (W, B): width on sublanes

    inputs = [xt]
    for i in range(1, len(LAYERS) + 1):
        inputs += [prep[f"w{i}"], prep[f"g{i}"], prep[f"b{i}"]]
    inputs += [prep["fc1"], prep["gp"], prep["bp"], prep["fc2"], prep["fb2"]]

    in_specs = [
        pl.BlockSpec(a.shape, functools.partial(_zero_index_map, ndim=a.ndim))
        for a in inputs
    ]
    out_spec = pl.BlockSpec((B, 1), functools.partial(_zero_index_map, ndim=2))

    scratch_shapes = [
        pltpu.VMEM((B * widths[li], LAYERS[li][0]), jnp.float32)
        for li in range(len(LAYERS))
    ]

    return pl.pallas_call(
        fused_net_kernel,
        out_shape=jax.ShapeDtypeStruct((B, 1), jnp.float32),
        grid=(1,),
        in_specs=in_specs,
        out_specs=out_spec,
        scratch_shapes=scratch_shapes,
        compiler_params=pltpu.CompilerParams(dimension_semantics=("arbitrary",)),
    )(*inputs)


def prepare_params(params):
    """One-time conversion of PyTorch-layout parameters to matmul-ready layouts."""
    prep = {}
    for i, (cin, cout, k, _) in enumerate(LAYERS, start=1):
        w = params[f"conv{i}_w"]                                        # (Cout, Cin, K)
        prep[f"w{i}"] = jnp.transpose(w, (2, 1, 0)).reshape(k * cin, cout)  # rows=(tap,ci)
        prep[f"g{i}"] = params[f"bn{i}_g"].reshape(1, cout)
        prep[f"b{i}"] = params[f"bn{i}_b"].reshape(1, cout)
    prep["fc1"] = jnp.transpose(params["fc1_w"])                        # (212, 212): x @ W.T
    prep["gp"] = params["bnp_g"].reshape(1, FEAT_DIM)
    prep["bp"] = params["bnp_b"].reshape(1, FEAT_DIM)
    prep["fc2"] = jnp.transpose(params["fc2_w"])                        # (212, 1)
    prep["fb2"] = params["fc2_b"].reshape(1, 1)
    return prep


def init_params(key):
    keys = jax.random.split(key, len(LAYERS) + 3)
    params = {}
    for i, (cin, cout, k, _) in enumerate(LAYERS):
        fan_in = float(cin * k)
        params[f"conv{i+1}_w"] = (
            jax.random.normal(keys[i], (cout, cin, k), jnp.float32) / jnp.sqrt(fan_in)
        )
        params[f"bn{i+1}_g"] = jnp.ones((cout,), jnp.float32)   # PyTorch BN default init
        params[f"bn{i+1}_b"] = jnp.zeros((cout,), jnp.float32)
    params["fc1_w"] = (jax.random.normal(keys[-3], (FEAT_DIM, FEAT_DIM), jnp.float32)
                       / jnp.sqrt(float(FEAT_DIM)))
    params["bnp_g"] = jnp.ones((FEAT_DIM,), jnp.float32)
    params["bnp_b"] = jnp.zeros((FEAT_DIM,), jnp.float32)
    params["fc2_w"] = (jax.random.normal(keys[-2], (1, FEAT_DIM), jnp.float32)
                       / jnp.sqrt(float(FEAT_DIM)))
    params["fc2_b"] = jax.random.normal(keys[-1], (1,), jnp.float32) * 0.01
    return params


if __name__ == "__main__":
    key = jax.random.PRNGKey(0)
    k_param, k_x = jax.random.split(key)
    params = init_params(k_param)
    prep = prepare_params(params)   # one-time weight layout prep (hoisted out of forward)

    # W=160 -> conv output widths: 52, 16, 6, 1 (last layer keeps one position).
    B, C, W = 2, 1, 160
    x = MEAN + STD * jax.random.normal(k_x, (B, C, W), jnp.float32)

    fwd = jax.jit(net_forward)
    out = jax.block_until_ready(fwd(x, prep))
    assert out.shape == (B, 1)
    assert bool(jnp.all(jnp.isfinite(out)))
    print("KERNEL_OK")
</pallas_src>

<mosaic_0001>
module attributes {stable_mosaic.version = 11 : i64} {
  func.func @fused_net_kernel(%arg0: i32, %arg1: memref<160x2xf32, #tpu.memory_space<vmem>>, %arg2: memref<14x4xf32, #tpu.memory_space<vmem>>, %arg3: memref<1x4xf32, #tpu.memory_space<vmem>>, %arg4: memref<1x4xf32, #tpu.memory_space<vmem>>, %arg5: memref<28x16xf32, #tpu.memory_space<vmem>>, %arg6: memref<1x16xf32, #tpu.memory_space<vmem>>, %arg7: memref<1x16xf32, #tpu.memory_space<vmem>>, %arg8: memref<80x64xf32, #tpu.memory_space<vmem>>, %arg9: memref<1x64xf32, #tpu.memory_space<vmem>>, %arg10: memref<1x64xf32, #tpu.memory_space<vmem>>, %arg11: memref<320x128xf32, #tpu.memory_space<vmem>>, %arg12: memref<1x128xf32, #tpu.memory_space<vmem>>, %arg13: memref<1x128xf32, #tpu.memory_space<vmem>>, %arg14: memref<212x212xf32, #tpu.memory_space<vmem>>, %arg15: memref<1x212xf32, #tpu.memory_space<vmem>>, %arg16: memref<1x212xf32, #tpu.memory_space<vmem>>, %arg17: memref<212x1xf32, #tpu.memory_space<vmem>>, %arg18: memref<1x1xf32, #tpu.memory_space<vmem>>, %arg19: memref<2x1xf32, #tpu.memory_space<vmem>>, %arg20: memref<320x2xf32, #tpu.memory_space<vmem>>, %arg21: memref<104x4xf32, #tpu.memory_space<vmem>>, %arg22: memref<32x16xf32, #tpu.memory_space<vmem>>, %arg23: memref<12x64xf32, #tpu.memory_space<vmem>>) attributes {dimension_semantics = [#tpu.dimension_semantics<arbitrary>], iteration_bounds = array<i64: 1>, scalar_prefetch = 0 : i64, scratch_operands = 4 : i64, tpu.core_type = #tpu.core_type<tc>, window_params = [{pipeline_mode = #tpu.pipeline_mode<synchronous>, transform_indices = @transform_0, window_bounds = array<i64: 160, 2>}, {pipeline_mode = #tpu.pipeline_mode<synchronous>, transform_indices = @transform_1, window_bounds = array<i64: 14, 4>}, {pipeline_mode = #tpu.pipeline_mode<synchronous>, transform_indices = @transform_2, window_bounds = array<i64: 1, 4>}, {pipeline_mode = #tpu.pipeline_mode<synchronous>, transform_indices = @transform_3, window_bounds = array<i64: 1, 4>}, {pipeline_mode = #tpu.pipeline_mode<synchronous>, transform_indices = @transform_4, window_bounds = array<i64: 28, 16>}, {pipeline_mode = #tpu.pipeline_mode<synchronous>, transform_indices = @transform_5, window_bounds = array<i64: 1, 16>}, {pipeline_mode = #tpu.pipeline_mode<synchronous>, transform_indices = @transform_6, window_bounds = array<i64: 1, 16>}, {pipeline_mode = #tpu.pipeline_mode<synchronous>, transform_indices = @transform_7, window_bounds = array<i64: 80, 64>}, {pipeline_mode = #tpu.pipeline_mode<synchronous>, transform_indices = @transform_8, window_bounds = array<i64: 1, 64>}, {pipeline_mode = #tpu.pipeline_mode<synchronous>, transform_indices = @transform_9, window_bounds = array<i64: 1, 64>}, {pipeline_mode = #tpu.pipeline_mode<synchronous>, transform_indices = @transform_10, window_bounds = array<i64: 320, 128>}, {pipeline_mode = #tpu.pipeline_mode<synchronous>, transform_indices = @transform_11, window_bounds = array<i64: 1, 128>}, {pipeline_mode = #tpu.pipeline_mode<synchronous>, transform_indices = @transform_12, window_bounds = array<i64: 1, 128>}, {pipeline_mode = #tpu.pipeline_mode<synchronous>, transform_indices = @transform_13, window_bounds = array<i64: 212, 212>}, {pipeline_mode = #tpu.pipeline_mode<synchronous>, transform_indices = @transform_14, window_bounds = array<i64: 1, 212>}, {pipeline_mode = #tpu.pipeline_mode<synchronous>, transform_indices = @transform_15, window_bounds = array<i64: 1, 212>}, {pipeline_mode = #tpu.pipeline_mode<synchronous>, transform_indices = @transform_16, window_bounds = array<i64: 212, 1>}, {pipeline_mode = #tpu.pipeline_mode<synchronous>, transform_indices = @transform_17, window_bounds = array<i64: 1, 1>}, {pipeline_mode = #tpu.pipeline_mode<synchronous>, transform_indices = @transform_18, window_bounds = array<i64: 2, 1>}]} {
    %c0 = arith.constant 0 : index
    %c0_0 = arith.constant 0 : index
    %0 = vector.load %arg1[%c0, %c0_0] : memref<160x2xf32, #tpu.memory_space<vmem>>, vector<160x2xf32>
    %cst = arith.constant 0.884938597 : f32
    %1 = vector.broadcast %cst : f32 to vector<160x2xf32>
    %2 = arith.subf %0, %1 : vector<160x2xf32>
    %cst_1 = arith.constant 0.219021976 : f32
    %3 = vector.broadcast %cst_1 : f32 to vector<160x2xf32>
    %4 = arith.divf %2, %3 : vector<160x2xf32>
    %cst_2 = arith.constant dense<0.000000e+00> : vector<160xf32>
    %5 = vector.multi_reduction <add>, %4, %cst_2 [1] : vector<160x2xf32> to vector<160xf32>
    %6 = vector.shape_cast %5 : vector<160xf32> to vector<160x1xf32>
    %cst_3 = arith.constant 2.000000e+00 : f32
    %7 = vector.broadcast %cst_3 : f32 to vector<160x1xf32>
    %8 = arith.divf %6, %7 : vector<160x1xf32>
    %9 = vector.extract_strided_slice %4 {offsets = [0, 0], sizes = [160, 1], strides = [1, 1]} : vector<160x2xf32> to vector<160x1xf32>
    %c0_4 = arith.constant 0 : index
    %c0_5 = arith.constant 0 : index
    %10 = vector.load %arg20[%c0_4, %c0_5] : memref<320x2xf32, #tpu.memory_space<vmem>>, vector<160x1xf32>
    tpu.vector_store %arg20[%c0_4, %c0_5], %9 {strides = array<i32>} : memref<320x2xf32, #tpu.memory_space<vmem>>, vector<160x1xf32>,
    %c0_6 = arith.constant 0 : index
    %c1 = arith.constant 1 : index
    %11 = vector.load %arg20[%c0_6, %c1] : memref<320x2xf32, #tpu.memory_space<vmem>>, vector<160x1xf32>
    tpu.vector_store %arg20[%c0_6, %c1], %8 {strides = array<i32>} : memref<320x2xf32, #tpu.memory_space<vmem>>, vector<160x1xf32>,
    %12 = vector.extract_strided_slice %4 {offsets = [0, 1], sizes = [160, 1], strides = [1, 1]} : vector<160x2xf32> to vector<160x1xf32>
    %c160 = arith.constant 160 : index
    %c0_7 = arith.constant 0 : index
    %13 = vector.load %arg20[%c160, %c0_7] : memref<320x2xf32, #tpu.memory_space<vmem>>, vector<160x1xf32>
    tpu.vector_store %arg20[%c160, %c0_7], %12 {strides = array<i32>} : memref<320x2xf32, #tpu.memory_space<vmem>>, vector<160x1xf32>,
    %c160_8 = arith.constant 160 : index
    %c1_9 = arith.constant 1 : index
    %14 = vector.load %arg20[%c160_8, %c1_9] : memref<320x2xf32, #tpu.memory_space<vmem>>, vector<160x1xf32>
    tpu.vector_store %arg20[%c160_8, %c1_9], %8 {strides = array<i32>} : memref<320x2xf32, #tpu.memory_space<vmem>>, vector<160x1xf32>,
    %c0_10 = arith.constant 0 : index
    %c0_11 = arith.constant 0 : index
    %15 = tpu.strided_load %arg20[%c0_10, %c0_11] {strides = array<i32: 3, 1>} : memref<320x2xf32, #tpu.memory_space<vmem>>, vector<52x2xf32>
    %c160_12 = arith.constant 160 : index
    %c0_13 = arith.constant 0 : index
    %16 = tpu.strided_load %arg20[%c160_12, %c0_13] {strides = array<i32: 3, 1>} : memref<320x2xf32, #tpu.memory_space<vmem>>, vector<52x2xf32>
    %17 = tpu.concatenate %15, %16 in 0 : vector<52x2xf32>, vector<52x2xf32> -> vector<104x2xf32>
    %c0_14 = arith.constant 0 : index
    %c0_15 = arith.constant 0 : index
    %18 = vector.load %arg2[%c0_14, %c0_15] : memref<14x4xf32, #tpu.memory_space<vmem>>, vector<2x4xf32>
    %cst_16 = arith.constant dense<0.000000e+00> : vector<104x4xf32>
    %19 = tpu.matmul %17, %18, %cst_16 {dimension_numbers = #tpu.dot_dimension_numbers<[1], [0], [0], [1], [0, 0, 1, 1], [], []>} : vector<104x2xf32>, vector<2x4xf32>, vector<104x4xf32> -> vector<104x4xf32>
    %c1_17 = arith.constant 1 : index
    %c0_18 = arith.constant 0 : index
    %20 = tpu.strided_load %arg20[%c1_17, %c0_18] {strides = array<i32: 3, 1>} : memref<320x2xf32, #tpu.memory_space<vmem>>, vector<52x2xf32>
    %c161 = arith.constant 161 : index
    %c0_19 = arith.constant 0 : index
    %21 = tpu.strided_load %arg20[%c161, %c0_19] {strides = array<i32: 3, 1>} : memref<320x2xf32, #tpu.memory_space<vmem>>, vector<52x2xf32>
    %22 = tpu.concatenate %20, %21 in 0 : vector<52x2xf32>, vector<52x2xf32> -> vector<104x2xf32>
    %c2 = arith.constant 2 : index
    %c0_20 = arith.constant 0 : index
    %23 = vector.load %arg2[%c2, %c0_20] : memref<14x4xf32, #tpu.memory_space<vmem>>, vector<2x4xf32>
    %cst_21 = arith.constant dense<0.000000e+00> : vector<104x4xf32>
    %24 = tpu.matmul %22, %23, %cst_21 {dimension_numbers = #tpu.dot_dimension_numbers<[1], [0], [0], [1], [0, 0, 1, 1], [], []>} : vector<104x2xf32>, vector<2x4xf32>, vector<104x4xf32> -> vector<104x4xf32>
    %25 = arith.addf %19, %24 : vector<104x4xf32>
    %c2_22 = arith.constant 2 : index
    %c0_23 = arith.constant 0 : index
    %26 = tpu.strided_load %arg20[%c2_22, %c0_23] {strides = array<i32: 3, 1>} : memref<320x2xf32, #tpu.memory_space<vmem>>, vector<52x2xf32>
    %c162 = arith.constant 162 : index
    %c0_24 = arith.constant 0 : index
    %27 = tpu.strided_load %arg20[%c162, %c0_24] {strides = array<i32: 3, 1>} : memref<320x2xf32, #tpu.memory_space<vmem>>, vector<52x2xf32>
    %28 = tpu.concatenate %26, %27 in 0 : vector<52x2xf32>, vector<52x2xf32> -> vector<104x2xf32>
    %c4 = arith.constant 4 : index
    %c0_25 = arith.constant 0 : index
    %29 = vector.load %arg2[%c4, %c0_25] : memref<14x4xf32, #tpu.memory_space<vmem>>, vector<2x4xf32>
    %cst_26 = arith.constant dense<0.000000e+00> : vector<104x4xf32>
    %30 = tpu.matmul %28, %29, %cst_26 {dimension_numbers = #tpu.dot_dimension_numbers<[1], [0], [0], [1], [0, 0, 1, 1], [], []>} : vector<104x2xf32>, vector<2x4xf32>, vector<104x4xf32> -> vector<104x4xf32>
    %31 = arith.addf %25, %30 : vector<104x4xf32>
    %c3 = arith.constant 3 : index
    %c0_27 = arith.constant 0 : index
    %32 = tpu.strided_load %arg20[%c3, %c0_27] {strides = array<i32: 3, 1>} : memref<320x2xf32, #tpu.memory_space<vmem>>, vector<52x2xf32>
    %c163 = arith.constant 163 : index
    %c0_28 = arith.constant 0 : index
    %33 = tpu.strided_load %arg20[%c163, %c0_28] {strides = array<i32: 3, 1>} : memref<320x2xf32, #tpu.memory_space<vmem>>, vector<52x2xf32>
    %34 = tpu.concatenate %32, %33 in 0 : vector<52x2xf32>, vector<52x2xf32> -> vector<104x2xf32>
    %c6 = arith.constant 6 : index
    %c0_29 = arith.constant 0 : index
    %35 = vector.load %arg2[%c6, %c0_29] : memref<14x4xf32, #tpu.memory_space<vmem>>, vector<2x4xf32>
    %cst_30 = arith.constant dense<0.000000e+00> : vector<104x4xf32>
    %36 = tpu.matmul %34, %35, %cst_30 {dimension_numbers = #tpu.dot_dimension_numbers<[1], [0], [0], [1], [0, 0, 1, 1], [], []>} : vector<104x2xf32>, vector<2x4xf32>, vector<104x4xf32> -> vector<104x4xf32>
    %37 = arith.addf %31, %36 : vector<104x4xf32>
    %c4_31 = arith.constant 4 : index
    %c0_32 = arith.constant 0 : index
    %38 = tpu.strided_load %arg20[%c4_31, %c0_32] {strides = array<i32: 3, 1>} : memref<320x2xf32, #tpu.memory_space<vmem>>, vector<52x2xf32>
    %c164 = arith.constant 164 : index
    %c0_33 = arith.constant 0 : index
    %39 = tpu.strided_load %arg20[%c164, %c0_33] {strides = array<i32: 3, 1>} : memref<320x2xf32, #tpu.memory_space<vmem>>, vector<52x2xf32>
    %40 = tpu.concatenate %38, %39 in 0 : vector<52x2xf32>, vector<52x2xf32> -> vector<104x2xf32>
    %c8 = arith.constant 8 : index
    %c0_34 = arith.constant 0 : index
    %41 = vector.load %arg2[%c8, %c0_34] : memref<14x4xf32, #tpu.memory_space<vmem>>, vector<2x4xf32>
    %cst_35 = arith.constant dense<0.000000e+00> : vector<104x4xf32>
    %42 = tpu.matmul %40, %41, %cst_35 {dimension_numbers = #tpu.dot_dimension_numbers<[1], [0], [0], [1], [0, 0, 1, 1], [], []>} : vector<104x2xf32>, vector<2x4xf32>, vector<104x4xf32> -> vector<104x4xf32>
    %43 = arith.addf %37, %42 : vector<104x4xf32>
    %c5 = arith.constant 5 : index
    %c0_36 = arith.constant 0 : index
    %44 = tpu.strided_load %arg20[%c5, %c0_36] {strides = array<i32: 3, 1>} : memref<320x2xf32, #tpu.memory_space<vmem>>, vector<52x2xf32>
    %c165 = arith.constant 165 : index
    %c0_37 = arith.constant 0 : index
    %45 = tpu.strided_load %arg20[%c165, %c0_37] {strides = array<i32: 3, 1>} : memref<320x2xf32, #tpu.memory_space<vmem>>, vector<52x2xf32>
    %46 = tpu.concatenate %44, %45 in 0 : vector<52x2xf32>, vector<52x2xf32> -> vector<104x2xf32>
    %c10 = arith.constant 10 : index
    %c0_38 = arith.constant 0 : index
    %47 = vector.load %arg2[%c10, %c0_38] : memref<14x4xf32, #tpu.memory_space<vmem>>, vector<2x4xf32>
    %cst_39 = arith.constant dense<0.000000e+00> : vector<104x4xf32>
    %48 = tpu.matmul %46, %47, %cst_39 {dimension_numbers = #tpu.dot_dimension_numbers<[1], [0], [0], [1], [0, 0, 1, 1], [], []>} : vector<104x2xf32>, vector<2x4xf32>, vector<104x4xf32> -> vector<104x4xf32>
    %49 = arith.addf %43, %48 : vector<104x4xf32>
    %c6_40 = arith.constant 6 : index
    %c0_41 = arith.constant 0 : index
    %50 = tpu.strided_load %arg20[%c6_40, %c0_41] {strides = array<i32: 3, 1>} : memref<320x2xf32, #tpu.memory_space<vmem>>, vector<52x2xf32>
    %c166 = arith.constant 166 : index
    %c0_42 = arith.constant 0 : index
    %51 = tpu.strided_load %arg20[%c166, %c0_42] {strides = array<i32: 3, 1>} : memref<320x2xf32, #tpu.memory_space<vmem>>, vector<52x2xf32>
    %52 = tpu.concatenate %50, %51 in 0 : vector<52x2xf32>, vector<52x2xf32> -> vector<104x2xf32>
    %c12 = arith.constant 12 : index
    %c0_43 = arith.constant 0 : index
    %53 = vector.load %arg2[%c12, %c0_43] : memref<14x4xf32, #tpu.memory_space<vmem>>, vector<2x4xf32>
    %cst_44 = arith.constant dense<0.000000e+00> : vector<104x4xf32>
    %54 = tpu.matmul %52, %53, %cst_44 {dimension_numbers = #tpu.dot_dimension_numbers<[1], [0], [0], [1], [0, 0, 1, 1], [], []>} : vector<104x2xf32>, vector<2x4xf32>, vector<104x4xf32> -> vector<104x4xf32>
    %55 = arith.addf %49, %54 : vector<104x4xf32>
    %cst_45 = arith.constant dense<0.000000e+00> : vector<4xf32>
    %56 = vector.multi_reduction <add>, %55, %cst_45 [0] : vector<104x4xf32> to vector<4xf32>
    %57 = vector.shape_cast %56 : vector<4xf32> to vector<1x4xf32>
    %cst_46 = arith.constant 1.040000e+02 : f32
    %58 = vector.broadcast %cst_46 : f32 to vector<1x4xf32>
    %59 = arith.divf %57, %58 : vector<1x4xf32>
    %60 = vector.broadcast %59 : vector<1x4xf32> to vector<104x4xf32>
    %61 = arith.subf %55, %60 : vector<104x4xf32>
    %62 = arith.mulf %61, %61 : vector<104x4xf32>
    %cst_47 = arith.constant dense<0.000000e+00> : vector<4xf32>
    %63 = vector.multi_reduction <add>, %62, %cst_47 [0] : vector<104x4xf32> to vector<4xf32>
    %64 = vector.shape_cast %63 : vector<4xf32> to vector<1x4xf32>
    %cst_48 = arith.constant 1.040000e+02 : f32
    %65 = vector.broadcast %cst_48 : f32 to vector<1x4xf32>
    %66 = arith.divf %64, %65 : vector<1x4xf32>
    %cst_49 = arith.constant 9.99999974E-6 : f32
    %67 = vector.broadcast %cst_49 : f32 to vector<1x4xf32>
    %68 = arith.addf %66, %67 : vector<1x4xf32>
    %69 = math.rsqrt %68 : vector<1x4xf32>
    %70 = vector.broadcast %69 : vector<1x4xf32> to vector<104x4xf32>
    %71 = arith.mulf %61, %70 : vector<104x4xf32>
    %c0_50 = arith.constant 0 : index
    %c0_51 = arith.constant 0 : index
    %72 = vector.load %arg3[%c0_50, %c0_51] : memref<1x4xf32, #tpu.memory_space<vmem>>, vector<1x4xf32>
    %73 = vector.broadcast %72 : vector<1x4xf32> to vector<104x4xf32>
    %74 = arith.mulf %71, %73 : vector<104x4xf32>
    %c0_52 = arith.constant 0 : index
    %c0_53 = arith.constant 0 : index
    %75 = vector.load %arg4[%c0_52, %c0_53] : memref<1x4xf32, #tpu.memory_space<vmem>>, vector<1x4xf32>
    %76 = vector.broadcast %75 : vector<1x4xf32> to vector<104x4xf32>
    %77 = arith.addf %74, %76 : vector<104x4xf32>
    %cst_54 = arith.constant 0.000000e+00 : f32
    %78 = vector.broadcast %cst_54 : f32 to vector<104x4xf32>
    %79 = arith.maximumf %77, %78 : vector<104x4xf32>
    %80 = vector.extract_strided_slice %79 {offsets = [0, 0], sizes = [1, 4], strides = [1, 1]} : vector<104x4xf32> to vector<1x4xf32>
    %81 = vector.extract_strided_slice %79 {offsets = [52, 0], sizes = [1, 4], strides = [1, 1]} : vector<104x4xf32> to vector<1x4xf32>
    %82 = tpu.concatenate %80, %81 in 0 : vector<1x4xf32>, vector<1x4xf32> -> vector<2x4xf32>
    %c0_55 = arith.constant 0 : index
    %c0_56 = arith.constant 0 : index
    %83 = vector.load %arg21[%c0_55, %c0_56] : memref<104x4xf32, #tpu.memory_space<vmem>>, vector<104x4xf32>
    tpu.vector_store %arg21[%c0_55, %c0_56], %79 {strides = array<i32>} : memref<104x4xf32, #tpu.memory_space<vmem>>, vector<104x4xf32>,
    %c0_57 = arith.constant 0 : index
    %c0_58 = arith.constant 0 : index
    %84 = tpu.strided_load %arg21[%c0_57, %c0_58] {strides = array<i32: 3, 1>} : memref<104x4xf32, #tpu.memory_space<vmem>>, vector<16x4xf32>
    %c52 = arith.constant 52 : index
    %c0_59 = arith.constant 0 : index
    %85 = tpu.strided_load %arg21[%c52, %c0_59] {strides = array<i32: 3, 1>} : memref<104x4xf32, #tpu.memory_space<vmem>>, vector<16x4xf32>
    %86 = tpu.concatenate %84, %85 in 0 : vector<16x4xf32>, vector<16x4xf32> -> vector<32x4xf32>
    %c0_60 = arith.constant 0 : index
    %c0_61 = arith.constant 0 : index
    %87 = vector.load %arg5[%c0_60, %c0_61] : memref<28x16xf32, #tpu.memory_space<vmem>>, vector<4x16xf32>
    %cst_62 = arith.constant dense<0.000000e+00> : vector<32x16xf32>
    %88 = tpu.matmul %86, %87, %cst_62 {dimension_numbers = #tpu.dot_dimension_numbers<[1], [0], [0], [1], [0, 0, 1, 1], [], []>} : vector<32x4xf32>, vector<4x16xf32>, vector<32x16xf32> -> vector<32x16xf32>
    %c1_63 = arith.constant 1 : index
    %c0_64 = arith.constant 0 : index
    %89 = tpu.strided_load %arg21[%c1_63, %c0_64] {strides = array<i32: 3, 1>} : memref<104x4xf32, #tpu.memory_space<vmem>>, vector<16x4xf32>
    %c53 = arith.constant 53 : index
    %c0_65 = arith.constant 0 : index
    %90 = tpu.strided_load %arg21[%c53, %c0_65] {strides = array<i32: 3, 1>} : memref<104x4xf32, #tpu.memory_space<vmem>>, vector<16x4xf32>
    %91 = tpu.concatenate %89, %90 in 0 : vector<16x4xf32>, vector<16x4xf32> -> vector<32x4xf32>
    %c4_66 = arith.constant 4 : index
    %c0_67 = arith.constant 0 : index
    %92 = vector.load %arg5[%c4_66, %c0_67] : memref<28x16xf32, #tpu.memory_space<vmem>>, vector<4x16xf32>
    %cst_68 = arith.constant dense<0.000000e+00> : vector<32x16xf32>
    %93 = tpu.matmul %91, %92, %cst_68 {dimension_numbers = #tpu.dot_dimension_numbers<[1], [0], [0], [1], [0, 0, 1, 1], [], []>} : vector<32x4xf32>, vector<4x16xf32>, vector<32x16xf32> -> vector<32x16xf32>
    %94 = arith.addf %88, %93 : vector<32x16xf32>
    %c2_69 = arith.constant 2 : index
    %c0_70 = arith.constant 0 : index
    %95 = tpu.strided_load %arg21[%c2_69, %c0_70] {strides = array<i32: 3, 1>} : memref<104x4xf32, #tpu.memory_space<vmem>>, vector<16x4xf32>
    %c54 = arith.constant 54 : index
    %c0_71 = arith.constant 0 : index
    %96 = tpu.strided_load %arg21[%c54, %c0_71] {strides = array<i32: 3, 1>} : memref<104x4xf32, #tpu.memory_space<vmem>>, vector<16x4xf32>
    %97 = tpu.concatenate %95, %96 in 0 : vector<16x4xf32>, vector<16x4xf32> -> vector<32x4xf32>
    %c8_72 = arith.constant 8 : index
    %c0_73 = arith.constant 0 : index
    %98 = vector.load %arg5[%c8_72, %c0_73] : memref<28x16xf32, #tpu.memory_space<vmem>>, vector<4x16xf32>
    %cst_74 = arith.constant dense<0.000000e+00> : vector<32x16xf32>
    %99 = tpu.matmul %97, %98, %cst_74 {dimension_numbers = #tpu.dot_dimension_numbers<[1], [0], [0], [1], [0, 0, 1, 1], [], []>} : vector<32x4xf32>, vector<4x16xf32>, vector<32x16xf32> -> vector<32x16xf32>
    %100 = arith.addf %94, %99 : vector<32x16xf32>
    %c3_75 = arith.constant 3 : index
    %c0_76 = arith.constant 0 : index
    %101 = tpu.strided_load %arg21[%c3_75, %c0_76] {strides = array<i32: 3, 1>} : memref<104x4xf32, #tpu.memory_space<vmem>>, vector<16x4xf32>
    %c55 = arith.constant 55 : index
    %c0_77 = arith.constant 0 : index
    %102 = tpu.strided_load %arg21[%c55, %c0_77] {strides = array<i32: 3, 1>} : memref<104x4xf32, #tpu.memory_space<vmem>>, vector<16x4xf32>
    %103 = tpu.concatenate %101, %102 in 0 : vector<16x4xf32>, vector<16x4xf32> -> vector<32x4xf32>
    %c12_78 = arith.constant 12 : index
    %c0_79 = arith.constant 0 : index
    %104 = vector.load %arg5[%c12_78, %c0_79] : memref<28x16xf32, #tpu.memory_space<vmem>>, vector<4x16xf32>
    %cst_80 = arith.constant dense<0.000000e+00> : vector<32x16xf32>
    %105 = tpu.matmul %103, %104, %cst_80 {dimension_numbers = #tpu.dot_dimension_numbers<[1], [0], [0], [1], [0, 0, 1, 1], [], []>} : vector<32x4xf32>, vector<4x16xf32>, vector<32x16xf32> -> vector<32x16xf32>
    %106 = arith.addf %100, %105 : vector<32x16xf32>
    %c4_81 = arith.constant 4 : index
    %c0_82 = arith.constant 0 : index
    %107 = tpu.strided_load %arg21[%c4_81, %c0_82] {strides = array<i32: 3, 1>} : memref<104x4xf32, #tpu.memory_space<vmem>>, vector<16x4xf32>
    %c56 = arith.constant 56 : index
    %c0_83 = arith.constant 0 : index
    %108 = tpu.strided_load %arg21[%c56, %c0_83] {strides = array<i32: 3, 1>} : memref<104x4xf32, #tpu.memory_space<vmem>>, vector<16x4xf32>
    %109 = tpu.concatenate %107, %108 in 0 : vector<16x4xf32>, vector<16x4xf32> -> vector<32x4xf32>
    %c16 = arith.constant 16 : index
    %c0_84 = arith.constant 0 : index
    %110 = vector.load %arg5[%c16, %c0_84] : memref<28x16xf32, #tpu.memory_space<vmem>>, vector<4x16xf32>
    %cst_85 = arith.constant dense<0.000000e+00> : vector<32x16xf32>
    %111 = tpu.matmul %109, %110, %cst_85 {dimension_numbers = #tpu.dot_dimension_numbers<[1], [0], [0], [1], [0, 0, 1, 1], [], []>} : vector<32x4xf32>, vector<4x16xf32>, vector<32x16xf32> -> vector<32x16xf32>
    %112 = arith.addf %106, %111 : vector<32x16xf32>
    %c5_86 = arith.constant 5 : index
    %c0_87 = arith.constant 0 : index
    %113 = tpu.strided_load %arg21[%c5_86, %c0_87] {strides = array<i32: 3, 1>} : memref<104x4xf32, #tpu.memory_space<vmem>>, vector<16x4xf32>
    %c57 = arith.constant 57 : index
    %c0_88 = arith.constant 0 : index
    %114 = tpu.strided_load %arg21[%c57, %c0_88] {strides = array<i32: 3, 1>} : memref<104x4xf32, #tpu.memory_space<vmem>>, vector<16x4xf32>
    %115 = tpu.concatenate %113, %114 in 0 : vector<16x4xf32>, vector<16x4xf32> -> vector<32x4xf32>
    %c20 = arith.constant 20 : index
    %c0_89 = arith.constant 0 : index
    %116 = vector.load %arg5[%c20, %c0_89] : memref<28x16xf32, #tpu.memory_space<vmem>>, vector<4x16xf32>
    %cst_90 = arith.constant dense<0.000000e+00> : vector<32x16xf32>
    %117 = tpu.matmul %115, %116, %cst_90 {dimension_numbers = #tpu.dot_dimension_numbers<[1], [0], [0], [1], [0, 0, 1, 1], [], []>} : vector<32x4xf32>, vector<4x16xf32>, vector<32x16xf32> -> vector<32x16xf32>
    %118 = arith.addf %112, %117 : vector<32x16xf32>
    %c6_91 = arith.constant 6 : index
    %c0_92 = arith.constant 0 : index
    %119 = tpu.strided_load %arg21[%c6_91, %c0_92] {strides = array<i32: 3, 1>} : memref<104x4xf32, #tpu.memory_space<vmem>>, vector<16x4xf32>
    %c58 = arith.constant 58 : index
    %c0_93 = arith.constant 0 : index
    %120 = tpu.strided_load %arg21[%c58, %c0_93] {strides = array<i32: 3, 1>} : memref<104x4xf32, #tpu.memory_space<vmem>>, vector<16x4xf32>
    %121 = tpu.concatenate %119, %120 in 0 : vector<16x4xf32>, vector<16x4xf32> -> vector<32x4xf32>
    %c24 = arith.constant 24 : index
    %c0_94 = arith.constant 0 : index
    %122 = vector.load %arg5[%c24, %c0_94] : memref<28x16xf32, #tpu.memory_space<vmem>>, vector<4x16xf32>
    %cst_95 = arith.constant dense<0.000000e+00> : vector<32x16xf32>
    %123 = tpu.matmul %121, %122, %cst_95 {dimension_numbers = #tpu.dot_dimension_numbers<[1], [0], [0], [1], [0, 0, 1, 1], [], []>} : vector<32x4xf32>, vector<4x16xf32>, vector<32x16xf32> -> vector<32x16xf32>
    %124 = arith.addf %118, %123 : vector<32x16xf32>
    %cst_96 = arith.constant dense<0.000000e+00> : vector<16xf32>
    %125 = vector.multi_reduction <add>, %124, %cst_96 [0] : vector<32x16xf32> to vector<16xf32>
    %126 = vector.shape_cast %125 : vector<16xf32> to vector<1x16xf32>
    %cst_97 = arith.constant 3.200000e+01 : f32
    %127 = vector.broadcast %cst_97 : f32 to vector<1x16xf32>
    %128 = arith.divf %126, %127 : vector<1x16xf32>
    %129 = vector.broadcast %128 : vector<1x16xf32> to vector<32x16xf32>
    %130 = arith.subf %124, %129 : vector<32x16xf32>
    %131 = arith.mulf %130, %130 : vector<32x16xf32>
    %cst_98 = arith.constant dense<0.000000e+00> : vector<16xf32>
    %132 = vector.multi_reduction <add>, %131, %cst_98 [0] : vector<32x16xf32> to vector<16xf32>
    %133 = vector.shape_cast %132 : vector<16xf32> to vector<1x16xf32>
    %cst_99 = arith.constant 3.200000e+01 : f32
    %134 = vector.broadcast %cst_99 : f32 to vector<1x16xf32>
    %135 = arith.divf %133, %134 : vector<1x16xf32>
    %cst_100 = arith.constant 9.99999974E-6 : f32
    %136 = vector.broadcast %cst_100 : f32 to vector<1x16xf32>
    %137 = arith.addf %135, %136 : vector<1x16xf32>
    %138 = math.rsqrt %137 : vector<1x16xf32>
    %139 = vector.broadcast %138 : vector<1x16xf32> to vector<32x16xf32>
    %140 = arith.mulf %130, %139 : vector<32x16xf32>
    %c0_101 = arith.constant 0 : index
    %c0_102 = arith.constant 0 : index
    %141 = vector.load %arg6[%c0_101, %c0_102] : memref<1x16xf32, #tpu.memory_space<vmem>>, vector<1x16xf32>
    %142 = vector.broadcast %141 : vector<1x16xf32> to vector<32x16xf32>
    %143 = arith.mulf %140, %142 : vector<32x16xf32>
    %c0_103 = arith.constant 0 : index
    %c0_104 = arith.constant 0 : index
    %144 = vector.load %arg7[%c0_103, %c0_104] : memref<1x16xf32, #tpu.memory_space<vmem>>, vector<1x16xf32>
    %145 = vector.broadcast %144 : vector<1x16xf32> to vector<32x16xf32>
    %146 = arith.addf %143, %145 : vector<32x16xf32>
    %cst_105 = arith.constant 0.000000e+00 : f32
    %147 = vector.broadcast %cst_105 : f32 to vector<32x16xf32>
    %148 = arith.maximumf %146, %147 : vector<32x16xf32>
    %149 = vector.extract_strided_slice %148 {offsets = [0, 0], sizes = [1, 16], strides = [1, 1]} : vector<32x16xf32> to vector<1x16xf32>
    %150 = vector.extract_strided_slice %148 {offsets = [16, 0], sizes = [1, 16], strides = [1, 1]} : vector<32x16xf32> to vector<1x16xf32>
    %151 = tpu.concatenate %149, %150 in 0 : vector<1x16xf32>, vector<1x16xf32> -> vector<2x16xf32>
    %c0_106 = arith.constant 0 : index
    %c0_107 = arith.constant 0 : index
    %152 = vector.load %arg22[%c0_106, %c0_107] : memref<32x16xf32, #tpu.memory_space<vmem>>, vector<32x16xf32>
    tpu.vector_store %arg22[%c0_106, %c0_107], %148 {strides = array<i32>} : memref<32x16xf32, #tpu.memory_space<vmem>>, vector<32x16xf32>,
    %c0_108 = arith.constant 0 : index
    %c0_109 = arith.constant 0 : index
    %153 = tpu.strided_load %arg22[%c0_108, %c0_109] {strides = array<i32: 2, 1>} : memref<32x16xf32, #tpu.memory_space<vmem>>, vector<6x16xf32>
    %c16_110 = arith.constant 16 : index
    %c0_111 = arith.constant 0 : index
    %154 = tpu.strided_load %arg22[%c16_110, %c0_111] {strides = array<i32: 2, 1>} : memref<32x16xf32, #tpu.memory_space<vmem>>, vector<6x16xf32>
    %155 = tpu.concatenate %153, %154 in 0 : vector<6x16xf32>, vector<6x16xf32> -> vector<12x16xf32>
    %c0_112 = arith.constant 0 : index
    %c0_113 = arith.constant 0 : index
    %156 = vector.load %arg8[%c0_112, %c0_113] : memref<80x64xf32, #tpu.memory_space<vmem>>, vector<16x64xf32>
    %cst_114 = arith.constant dense<0.000000e+00> : vector<12x64xf32>
    %157 = tpu.matmul %155, %156, %cst_114 {dimension_numbers = #tpu.dot_dimension_numbers<[1], [0], [0], [1], [0, 0, 1, 1], [], []>} : vector<12x16xf32>, vector<16x64xf32>, vector<12x64xf32> -> vector<12x64xf32>
    %c1_115 = arith.constant 1 : index
    %c0_116 = arith.constant 0 : index
    %158 = tpu.strided_load %arg22[%c1_115, %c0_116] {strides = array<i32: 2, 1>} : memref<32x16xf32, #tpu.memory_space<vmem>>, vector<6x16xf32>
    %c17 = arith.constant 17 : index
    %c0_117 = arith.constant 0 : index
    %159 = tpu.strided_load %arg22[%c17, %c0_117] {strides = array<i32: 2, 1>} : memref<32x16xf32, #tpu.memory_space<vmem>>, vector<6x16xf32>
    %160 = tpu.concatenate %158, %159 in 0 : vector<6x16xf32>, vector<6x16xf32> -> vector<12x16xf32>
    %c16_118 = arith.constant 16 : index
    %c0_119 = arith.constant 0 : index
    %161 = vector.load %arg8[%c16_118, %c0_119] : memref<80x64xf32, #tpu.memory_space<vmem>>, vector<16x64xf32>
    %cst_120 = arith.constant dense<0.000000e+00> : vector<12x64xf32>
    %162 = tpu.matmul %160, %161, %cst_120 {dimension_numbers = #tpu.dot_dimension_numbers<[1], [0], [0], [1], [0, 0, 1, 1], [], []>} : vector<12x16xf32>, vector<16x64xf32>, vector<12x64xf32> -> vector<12x64xf32>
    %163 = arith.addf %157, %162 : vector<12x64xf32>
    %c2_121 = arith.constant 2 : index
    %c0_122 = arith.constant 0 : index
    %164 = tpu.strided_load %arg22[%c2_121, %c0_122] {strides = array<i32: 2, 1>} : memref<32x16xf32, #tpu.memory_space<vmem>>, vector<6x16xf32>
    %c18 = arith.constant 18 : index
    %c0_123 = arith.constant 0 : index
    %165 = tpu.strided_load %arg22[%c18, %c0_123] {strides = array<i32: 2, 1>} : memref<32x16xf32, #tpu.memory_space<vmem>>, vector<6x16xf32>
    %166 = tpu.concatenate %164, %165 in 0 : vector<6x16xf32>, vector<6x16xf32> -> vector<12x16xf32>
    %c32 = arith.constant 32 : index
    %c0_124 = arith.constant 0 : index
    %167 = vector.load %arg8[%c32, %c0_124] : memref<80x64xf32, #tpu.memory_space<vmem>>, vector<16x64xf32>
    %cst_125 = arith.constant dense<0.000000e+00> : vector<12x64xf32>
    %168 = tpu.matmul %166, %167, %cst_125 {dimension_numbers = #tpu.dot_dimension_numbers<[1], [0], [0], [1], [0, 0, 1, 1], [], []>} : vector<12x16xf32>, vector<16x64xf32>, vector<12x64xf32> -> vector<12x64xf32>
    %169 = arith.addf %163, %168 : vector<12x64xf32>
    %c3_126 = arith.constant 3 : index
    %c0_127 = arith.constant 0 : index
    %170 = tpu.strided_load %arg22[%c3_126, %c0_127] {strides = array<i32: 2, 1>} : memref<32x16xf32, #tpu.memory_space<vmem>>, vector<6x16xf32>
    %c19 = arith.constant 19 : index
    %c0_128 = arith.constant 0 : index
    %171 = tpu.strided_load %arg22[%c19, %c0_128] {strides = array<i32: 2, 1>} : memref<32x16xf32, #tpu.memory_space<vmem>>, vector<6x16xf32>
    %172 = tpu.concatenate %170, %171 in 0 : vector<6x16xf32>, vector<6x16xf32> -> vector<12x16xf32>
    %c48 = arith.constant 48 : index
    %c0_129 = arith.constant 0 : index
    %173 = vector.load %arg8[%c48, %c0_129] : memref<80x64xf32, #tpu.memory_space<vmem>>, vector<16x64xf32>
    %cst_130 = arith.constant dense<0.000000e+00> : vector<12x64xf32>
    %174 = tpu.matmul %172, %173, %cst_130 {dimension_numbers = #tpu.dot_dimension_numbers<[1], [0], [0], [1], [0, 0, 1, 1], [], []>} : vector<12x16xf32>, vector<16x64xf32>, vector<12x64xf32> -> vector<12x64xf32>
    %175 = arith.addf %169, %174 : vector<12x64xf32>
    %c4_131 = arith.constant 4 : index
    %c0_132 = arith.constant 0 : index
    %176 = tpu.strided_load %arg22[%c4_131, %c0_132] {strides = array<i32: 2, 1>} : memref<32x16xf32, #tpu.memory_space<vmem>>, vector<6x16xf32>
    %c20_133 = arith.constant 20 : index
    %c0_134 = arith.constant 0 : index
    %177 = tpu.strided_load %arg22[%c20_133, %c0_134] {strides = array<i32: 2, 1>} : memref<32x16xf32, #tpu.memory_space<vmem>>, vector<6x16xf32>
    %178 = tpu.concatenate %176, %177 in 0 : vector<6x16xf32>, vector<6x16xf32> -> vector<12x16xf32>
    %c64 = arith.constant 64 : index
    %c0_135 = arith.constant 0 : index
    %179 = vector.load %arg8[%c64, %c0_135] : memref<80x64xf32, #tpu.memory_space<vmem>>, vector<16x64xf32>
    %cst_136 = arith.constant dense<0.000000e+00> : vector<12x64xf32>
    %180 = tpu.matmul %178, %179, %cst_136 {dimension_numbers = #tpu.dot_dimension_numbers<[1], [0], [0], [1], [0, 0, 1, 1], [], []>} : vector<12x16xf32>, vector<16x64xf32>, vector<12x64xf32> -> vector<12x64xf32>
    %181 = arith.addf %175, %180 : vector<12x64xf32>
    %cst_137 = arith.constant dense<0.000000e+00> : vector<64xf32>
    %182 = vector.multi_reduction <add>, %181, %cst_137 [0] : vector<12x64xf32> to vector<64xf32>
    %183 = vector.shape_cast %182 : vector<64xf32> to vector<1x64xf32>
    %cst_138 = arith.constant 1.200000e+01 : f32
    %184 = vector.broadcast %cst_138 : f32 to vector<1x64xf32>
    %185 = arith.divf %183, %184 : vector<1x64xf32>
    %186 = vector.broadcast %185 : vector<1x64xf32> to vector<12x64xf32>
    %187 = arith.subf %181, %186 : vector<12x64xf32>
    %188 = arith.mulf %187, %187 : vector<12x64xf32>
    %cst_139 = arith.constant dense<0.000000e+00> : vector<64xf32>
    %189 = vector.multi_reduction <add>, %188, %cst_139 [0] : vector<12x64xf32> to vector<64xf32>
    %190 = vector.shape_cast %189 : vector<64xf32> to vector<1x64xf32>
    %cst_140 = arith.constant 1.200000e+01 : f32
    %191 = vector.broadcast %cst_140 : f32 to vector<1x64xf32>
    %192 = arith.divf %190, %191 : vector<1x64xf32>
    %cst_141 = arith.constant 9.99999974E-6 : f32
    %193 = vector.broadcast %cst_141 : f32 to vector<1x64xf32>
    %194 = arith.addf %192, %193 : vector<1x64xf32>
    %195 = math.rsqrt %194 : vector<1x64xf32>
    %196 = vector.broadcast %195 : vector<1x64xf32> to vector<12x64xf32>
    %197 = arith.mulf %187, %196 : vector<12x64xf32>
    %c0_142 = arith.constant 0 : index
    %c0_143 = arith.constant 0 : index
    %198 = vector.load %arg9[%c0_142, %c0_143] : memref<1x64xf32, #tpu.memory_space<vmem>>, vector<1x64xf32>
    %199 = vector.broadcast %198 : vector<1x64xf32> to vector<12x64xf32>
    %200 = arith.mulf %197, %199 : vector<12x64xf32>
    %c0_144 = arith.constant 0 : index
    %c0_145 = arith.constant 0 : index
    %201 = vector.load %arg10[%c0_144, %c0_145] : memref<1x64xf32, #tpu.memory_space<vmem>>, vector<1x64xf32>
    %202 = vector.broadcast %201 : vector<1x64xf32> to vector<12x64xf32>
    %203 = arith.addf %200, %202 : vector<12x64xf32>
    %cst_146 = arith.constant 0.000000e+00 : f32
    %204 = vector.broadcast %cst_146 : f32 to vector<12x64xf32>
    %205 = arith.maximumf %203, %204 : vector<12x64xf32>
    %206 = vector.extract_strided_slice %205 {offsets = [0, 0], sizes = [1, 64], strides = [1, 1]} : vector<12x64xf32> to vector<1x64xf32>
    %207 = vector.extract_strided_slice %205 {offsets = [6, 0], sizes = [1, 64], strides = [1, 1]} : vector<12x64xf32> to vector<1x64xf32>
    %208 = tpu.concatenate %206, %207 in 0 : vector<1x64xf32>, vector<1x64xf32> -> vector<2x64xf32>
    %c0_147 = arith.constant 0 : index
    %c0_148 = arith.constant 0 : index
    %209 = vector.load %arg23[%c0_147, %c0_148] : memref<12x64xf32, #tpu.memory_space<vmem>>, vector<12x64xf32>
    tpu.vector_store %arg23[%c0_147, %c0_148], %205 {strides = array<i32>} : memref<12x64xf32, #tpu.memory_space<vmem>>, vector<12x64xf32>,
    %c0_149 = arith.constant 0 : index
    %c0_150 = arith.constant 0 : index
    %210 = vector.load %arg23[%c0_149, %c0_150] : memref<12x64xf32, #tpu.memory_space<vmem>>, vector<1x64xf32>
    %c6_151 = arith.constant 6 : index
    %c0_152 = arith.constant 0 : index
    %211 = vector.load %arg23[%c6_151, %c0_152] : memref<12x64xf32, #tpu.memory_space<vmem>>, vector<1x64xf32>
    %212 = tpu.concatenate %210, %211 in 0 : vector<1x64xf32>, vector<1x64xf32> -> vector<2x64xf32>
    %c0_153 = arith.constant 0 : index
    %c0_154 = arith.constant 0 : index
    %213 = vector.load %arg11[%c0_153, %c0_154] : memref<320x128xf32, #tpu.memory_space<vmem>>, vector<64x128xf32>
    %cst_155 = arith.constant dense<0.000000e+00> : vector<2x128xf32>
    %214 = tpu.matmul %212, %213, %cst_155 {dimension_numbers = #tpu.dot_dimension_numbers<[1], [0], [0], [1], [0, 0, 1, 1], [], []>} : vector<2x64xf32>, vector<64x128xf32>, vector<2x128xf32> -> vector<2x128xf32>
    %c1_156 = arith.constant 1 : index
    %c0_157 = arith.constant 0 : index
    %215 = vector.load %arg23[%c1_156, %c0_157] : memref<12x64xf32, #tpu.memory_space<vmem>>, vector<1x64xf32>
    %c7 = arith.constant 7 : index
    %c0_158 = arith.constant 0 : index
    %216 = vector.load %arg23[%c7, %c0_158] : memref<12x64xf32, #tpu.memory_space<vmem>>, vector<1x64xf32>
    %217 = tpu.concatenate %215, %216 in 0 : vector<1x64xf32>, vector<1x64xf32> -> vector<2x64xf32>
    %c64_159 = arith.constant 64 : index
    %c0_160 = arith.constant 0 : index
    %218 = vector.load %arg11[%c64_159, %c0_160] : memref<320x128xf32, #tpu.memory_space<vmem>>, vector<64x128xf32>
    %cst_161 = arith.constant dense<0.000000e+00> : vector<2x128xf32>
    %219 = tpu.matmul %217, %218, %cst_161 {dimension_numbers = #tpu.dot_dimension_numbers<[1], [0], [0], [1], [0, 0, 1, 1], [], []>} : vector<2x64xf32>, vector<64x128xf32>, vector<2x128xf32> -> vector<2x128xf32>
    %220 = arith.addf %214, %219 : vector<2x128xf32>
    %c2_162 = arith.constant 2 : index
    %c0_163 = arith.constant 0 : index
    %221 = vector.load %arg23[%c2_162, %c0_163] : memref<12x64xf32, #tpu.memory_space<vmem>>, vector<1x64xf32>
    %c8_164 = arith.constant 8 : index
    %c0_165 = arith.constant 0 : index
    %222 = vector.load %arg23[%c8_164, %c0_165] : memref<12x64xf32, #tpu.memory_space<vmem>>, vector<1x64xf32>
    %223 = tpu.concatenate %221, %222 in 0 : vector<1x64xf32>, vector<1x64xf32> -> vector<2x64xf32>
    %c128 = arith.constant 128 : index
    %c0_166 = arith.constant 0 : index
    %224 = vector.load %arg11[%c128, %c0_166] : memref<320x128xf32, #tpu.memory_space<vmem>>, vector<64x128xf32>
    %cst_167 = arith.constant dense<0.000000e+00> : vector<2x128xf32>
    %225 = tpu.matmul %223, %224, %cst_167 {dimension_numbers = #tpu.dot_dimension_numbers<[1], [0], [0], [1], [0, 0, 1, 1], [], []>} : vector<2x64xf32>, vector<64x128xf32>, vector<2x128xf32> -> vector<2x128xf32>
    %226 = arith.addf %220, %225 : vector<2x128xf32>
    %c3_168 = arith.constant 3 : index
    %c0_169 = arith.constant 0 : index
    %227 = vector.load %arg23[%c3_168, %c0_169] : memref<12x64xf32, #tpu.memory_space<vmem>>, vector<1x64xf32>
    %c9 = arith.constant 9 : index
    %c0_170 = arith.constant 0 : index
    %228 = vector.load %arg23[%c9, %c0_170] : memref<12x64xf32, #tpu.memory_space<vmem>>, vector<1x64xf32>
    %229 = tpu.concatenate %227, %228 in 0 : vector<1x64xf32>, vector<1x64xf32> -> vector<2x64xf32>
    %c192 = arith.constant 192 : index
    %c0_171 = arith.constant 0 : index
    %230 = vector.load %arg11[%c192, %c0_171] : memref<320x128xf32, #tpu.memory_space<vmem>>, vector<64x128xf32>
    %cst_172 = arith.constant dense<0.000000e+00> : vector<2x128xf32>
    %231 = tpu.matmul %229, %230, %cst_172 {dimension_numbers = #tpu.dot_dimension_numbers<[1], [0], [0], [1], [0, 0, 1, 1], [], []>} : vector<2x64xf32>, vector<64x128xf32>, vector<2x128xf32> -> vector<2x128xf32>
    %232 = arith.addf %226, %231 : vector<2x128xf32>
    %c4_173 = arith.constant 4 : index
    %c0_174 = arith.constant 0 : index
    %233 = vector.load %arg23[%c4_173, %c0_174] : memref<12x64xf32, #tpu.memory_space<vmem>>, vector<1x64xf32>
    %c10_175 = arith.constant 10 : index
    %c0_176 = arith.constant 0 : index
    %234 = vector.load %arg23[%c10_175, %c0_176] : memref<12x64xf32, #tpu.memory_space<vmem>>, vector<1x64xf32>
    %235 = tpu.concatenate %233, %234 in 0 : vector<1x64xf32>, vector<1x64xf32> -> vector<2x64xf32>
    %c256 = arith.constant 256 : index
    %c0_177 = arith.constant 0 : index
    %236 = vector.load %arg11[%c256, %c0_177] : memref<320x128xf32, #tpu.memory_space<vmem>>, vector<64x128xf32>
    %cst_178 = arith.constant dense<0.000000e+00> : vector<2x128xf32>
    %237 = tpu.matmul %235, %236, %cst_178 {dimension_numbers = #tpu.dot_dimension_numbers<[1], [0], [0], [1], [0, 0, 1, 1], [], []>} : vector<2x64xf32>, vector<64x128xf32>, vector<2x128xf32> -> vector<2x128xf32>
    %238 = arith.addf %232, %237 : vector<2x128xf32>
    %cst_179 = arith.constant dense<0.000000e+00> : vector<128xf32>
    %239 = vector.multi_reduction <add>, %238, %cst_179 [0] : vector<2x128xf32> to vector<128xf32>
    %240 = vector.shape_cast %239 : vector<128xf32> to vector<1x128xf32>
    %cst_180 = arith.constant 2.000000e+00 : f32
    %241 = vector.broadcast %cst_180 : f32 to vector<1x128xf32>
    %242 = arith.divf %240, %241 : vector<1x128xf32>
    %243 = vector.broadcast %242 : vector<1x128xf32> to vector<2x128xf32>
    %244 = arith.subf %238, %243 : vector<2x128xf32>
    %245 = arith.mulf %244, %244 : vector<2x128xf32>
    %cst_181 = arith.constant dense<0.000000e+00> : vector<128xf32>
    %246 = vector.multi_reduction <add>, %245, %cst_181 [0] : vector<2x128xf32> to vector<128xf32>
    %247 = vector.shape_cast %246 : vector<128xf32> to vector<1x128xf32>
    %cst_182 = arith.constant 2.000000e+00 : f32
    %248 = vector.broadcast %cst_182 : f32 to vector<1x128xf32>
    %249 = arith.divf %247, %248 : vector<1x128xf32>
    %cst_183 = arith.constant 9.99999974E-6 : f32
    %250 = vector.broadcast %cst_183 : f32 to vector<1x128xf32>
    %251 = arith.addf %249, %250 : vector<1x128xf32>
    %252 = math.rsqrt %251 : vector<1x128xf32>
    %253 = vector.broadcast %252 : vector<1x128xf32> to vector<2x128xf32>
    %254 = arith.mulf %244, %253 : vector<2x128xf32>
    %c0_184 = arith.constant 0 : index
    %c0_185 = arith.constant 0 : index
    %255 = vector.load %arg12[%c0_184, %c0_185] : memref<1x128xf32, #tpu.memory_space<vmem>>, vector<1x128xf32>
    %256 = vector.broadcast %255 : vector<1x128xf32> to vector<2x128xf32>
    %257 = arith.mulf %254, %256 : vector<2x128xf32>
    %c0_186 = arith.constant 0 : index
    %c0_187 = arith.constant 0 : index
    %258 = vector.load %arg13[%c0_186, %c0_187] : memref<1x128xf32, #tpu.memory_space<vmem>>, vector<1x128xf32>
    %259 = vector.broadcast %258 : vector<1x128xf32> to vector<2x128xf32>
    %260 = arith.addf %257, %259 : vector<2x128xf32>
    %cst_188 = arith.constant 0.000000e+00 : f32
    %261 = vector.broadcast %cst_188 : f32 to vector<2x128xf32>
    %262 = arith.maximumf %260, %261 : vector<2x128xf32>
    %263 = vector.extract_strided_slice %262 {offsets = [0, 0], sizes = [1, 128], strides = [1, 1]} : vector<2x128xf32> to vector<1x128xf32>
    %264 = vector.extract_strided_slice %262 {offsets = [1, 0], sizes = [1, 128], strides = [1, 1]} : vector<2x128xf32> to vector<1x128xf32>
    %265 = tpu.concatenate %263, %264 in 0 : vector<1x128xf32>, vector<1x128xf32> -> vector<2x128xf32>
    %c0_189 = arith.constant 0 : index
    %c0_190 = arith.constant 0 : index
    %266 = vector.load %arg14[%c0_189, %c0_190] : memref<212x212xf32, #tpu.memory_space<vmem>>, vector<4x212xf32>
    %cst_191 = arith.constant dense<0.000000e+00> : vector<2x212xf32>
    %267 = tpu.matmul %82, %266, %cst_191 {dimension_numbers = #tpu.dot_dimension_numbers<[1], [0], [0], [1], [0, 0, 1, 1], [], []>} : vector<2x4xf32>, vector<4x212xf32>, vector<2x212xf32> -> vector<2x212xf32>
    %c4_192 = arith.constant 4 : index
    %c0_193 = arith.constant 0 : index
    %268 = vector.load %arg14[%c4_192, %c0_193] : memref<212x212xf32, #tpu.memory_space<vmem>>, vector<16x212xf32>
    %cst_194 = arith.constant dense<0.000000e+00> : vector<2x212xf32>
    %269 = tpu.matmul %151, %268, %cst_194 {dimension_numbers = #tpu.dot_dimension_numbers<[1], [0], [0], [1], [0, 0, 1, 1], [], []>} : vector<2x16xf32>, vector<16x212xf32>, vector<2x212xf32> -> vector<2x212xf32>
    %270 = arith.addf %267, %269 : vector<2x212xf32>
    %c20_195 = arith.constant 20 : index
    %c0_196 = arith.constant 0 : index
    %271 = vector.load %arg14[%c20_195, %c0_196] : memref<212x212xf32, #tpu.memory_space<vmem>>, vector<64x212xf32>
    %cst_197 = arith.constant dense<0.000000e+00> : vector<2x212xf32>
    %272 = tpu.matmul %208, %271, %cst_197 {dimension_numbers = #tpu.dot_dimension_numbers<[1], [0], [0], [1], [0, 0, 1, 1], [], []>} : vector<2x64xf32>, vector<64x212xf32>, vector<2x212xf32> -> vector<2x212xf32>
    %273 = arith.addf %270, %272 : vector<2x212xf32>
    %c84 = arith.constant 84 : index
    %c0_198 = arith.constant 0 : index
    %274 = vector.load %arg14[%c84, %c0_198] : memref<212x212xf32, #tpu.memory_space<vmem>>, vector<128x212xf32>
    %cst_199 = arith.constant dense<0.000000e+00> : vector<2x212xf32>
    %275 = tpu.matmul %265, %274, %cst_199 {dimension_numbers = #tpu.dot_dimension_numbers<[1], [0], [0], [1], [0, 0, 1, 1], [], []>} : vector<2x128xf32>, vector<128x212xf32>, vector<2x212xf32> -> vector<2x212xf32>
    %276 = arith.addf %273, %275 : vector<2x212xf32>
    %cst_200 = arith.constant dense<0.000000e+00> : vector<212xf32>
    %277 = vector.multi_reduction <add>, %276, %cst_200 [0] : vector<2x212xf32> to vector<212xf32>
    %278 = vector.shape_cast %277 : vector<212xf32> to vector<1x212xf32>
    %cst_201 = arith.constant 2.000000e+00 : f32
    %279 = vector.broadcast %cst_201 : f32 to vector<1x212xf32>
    %280 = arith.divf %278, %279 : vector<1x212xf32>
    %281 = vector.broadcast %280 : vector<1x212xf32> to vector<2x212xf32>
    %282 = arith.subf %276, %281 : vector<2x212xf32>
    %283 = arith.mulf %282, %282 : vector<2x212xf32>
    %cst_202 = arith.constant dense<0.000000e+00> : vector<212xf32>
    %284 = vector.multi_reduction <add>, %283, %cst_202 [0] : vector<2x212xf32> to vector<212xf32>
    %285 = vector.shape_cast %284 : vector<212xf32> to vector<1x212xf32>
    %cst_203 = arith.constant 2.000000e+00 : f32
    %286 = vector.broadcast %cst_203 : f32 to vector<1x212xf32>
    %287 = arith.divf %285, %286 : vector<1x212xf32>
    %cst_204 = arith.constant 9.99999974E-6 : f32
    %288 = vector.broadcast %cst_204 : f32 to vector<1x212xf32>
    %289 = arith.addf %287, %288 : vector<1x212xf32>
    %290 = math.rsqrt %289 : vector<1x212xf32>
    %291 = vector.broadcast %290 : vector<1x212xf32> to vector<2x212xf32>
    %292 = arith.mulf %282, %291 : vector<2x212xf32>
    %c0_205 = arith.constant 0 : index
    %c0_206 = arith.constant 0 : index
    %293 = vector.load %arg15[%c0_205, %c0_206] : memref<1x212xf32, #tpu.memory_space<vmem>>, vector<1x212xf32>
    %294 = vector.broadcast %293 : vector<1x212xf32> to vector<2x212xf32>
    %295 = arith.mulf %292, %294 : vector<2x212xf32>
    %c0_207 = arith.constant 0 : index
    %c0_208 = arith.constant 0 : index
    %296 = vector.load %arg16[%c0_207, %c0_208] : memref<1x212xf32, #tpu.memory_space<vmem>>, vector<1x212xf32>
    %297 = vector.broadcast %296 : vector<1x212xf32> to vector<2x212xf32>
    %298 = arith.addf %295, %297 : vector<2x212xf32>
    %cst_209 = arith.constant 0.000000e+00 : f32
    %299 = vector.broadcast %cst_209 : f32 to vector<2x212xf32>
    %300 = arith.maximumf %298, %299 : vector<2x212xf32>
    %c0_210 = arith.constant 0 : index
    %c0_211 = arith.constant 0 : index
    %301 = vector.load %arg17[%c0_210, %c0_211] : memref<212x1xf32, #tpu.memory_space<vmem>>, vector<212x1xf32>
    %cst_212 = arith.constant dense<0.000000e+00> : vector<2x1xf32>
    %302 = tpu.matmul %300, %301, %cst_212 {dimension_numbers = #tpu.dot_dimension_numbers<[1], [0], [0], [1], [0, 0, 1, 1], [], []>} : vector<2x212xf32>, vector<212x1xf32>, vector<2x1xf32> -> vector<2x1xf32>
    %c0_213 = arith.constant 0 : index
    %c0_214 = arith.constant 0 : index
    %303 = vector.load %arg18[%c0_213, %c0_214] : memref<1x1xf32, #tpu.memory_space<vmem>>, vector<1x1xf32>
    %304 = vector.broadcast %303 : vector<1x1xf32> to vector<2x1xf32>
    %305 = arith.addf %302, %304 : vector<2x1xf32>
    %c0_215 = arith.constant 0 : index
    %c0_216 = arith.constant 0 : index
    %306 = vector.load %arg19[%c0_215, %c0_216] : memref<2x1xf32, #tpu.memory_space<vmem>>, vector<2x1xf32>
    tpu.vector_store %arg19[%c0_215, %c0_216], %305 {strides = array<i32>} : memref<2x1xf32, #tpu.memory_space<vmem>>, vector<2x1xf32>,
    return
  }
  func.func @transform_0(%arg0: i32) -> (i32, i32) {
    %c0_i32 = arith.constant 0 : i32
    %c0_i32_0 = arith.constant 0 : i32
    %c0_i32_1 = arith.constant 0 : i32
    return %c0_i32, %c0_i32_0 : i32, i32
  }
  func.func @transform_1(%arg0: i32) -> (i32, i32) {
    %c0_i32 = arith.constant 0 : i32
    %c0_i32_0 = arith.constant 0 : i32
    %c0_i32_1 = arith.constant 0 : i32
    return %c0_i32, %c0_i32_0 : i32, i32
  }
  func.func @transform_2(%arg0: i32) -> (i32, i32) {
    %c0_i32 = arith.constant 0 : i32
    %c0_i32_0 = arith.constant 0 : i32
    %c0_i32_1 = arith.constant 0 : i32
    return %c0_i32, %c0_i32_0 : i32, i32
  }
  func.func @transform_3(%arg0: i32) -> (i32, i32) {
    %c0_i32 = arith.constant 0 : i32
    %c0_i32_0 = arith.constant 0 : i32
    %c0_i32_1 = arith.constant 0 : i32
    return %c0_i32, %c0_i32_0 : i32, i32
  }
  func.func @transform_4(%arg0: i32) -> (i32, i32) {
    %c0_i32 = arith.constant 0 : i32
    %c0_i32_0 = arith.constant 0 : i32
    %c0_i32_1 = arith.constant 0 : i32
    return %c0_i32, %c0_i32_0 : i32, i32
  }
  func.func @transform_5(%arg0: i32) -> (i32, i32) {
    %c0_i32 = arith.constant 0 : i32
    %c0_i32_0 = arith.constant 0 : i32
    %c0_i32_1 = arith.constant 0 : i32
    return %c0_i32, %c0_i32_0 : i32, i32
  }
  func.func @transform_6(%arg0: i32) -> (i32, i32) {
    %c0_i32 = arith.constant 0 : i32
    %c0_i32_0 = arith.constant 0 : i32
    %c0_i32_1 = arith.constant 0 : i32
    return %c0_i32, %c0_i32_0 : i32, i32
  }
  func.func @transform_7(%arg0: i32) -> (i32, i32) {
    %c0_i32 = arith.constant 0 : i32
    %c0_i32_0 = arith.constant 0 : i32
    %c0_i32_1 = arith.constant 0 : i32
    return %c0_i32, %c0_i32_0 : i32, i32
  }
  func.func @transform_8(%arg0: i32) -> (i32, i32) {
    %c0_i32 = arith.constant 0 : i32
    %c0_i32_0 = arith.constant 0 : i32
    %c0_i32_1 = arith.constant 0 : i32
    return %c0_i32, %c0_i32_0 : i32, i32
  }
  func.func @transform_9(%arg0: i32) -> (i32, i32) {
    %c0_i32 = arith.constant 0 : i32
    %c0_i32_0 = arith.constant 0 : i32
    %c0_i32_1 = arith.constant 0 : i32
    return %c0_i32, %c0_i32_0 : i32, i32
  }
  func.func @transform_10(%arg0: i32) -> (i32, i32) {
    %c0_i32 = arith.constant 0 : i32
    %c0_i32_0 = arith.constant 0 : i32
    %c0_i32_1 = arith.constant 0 : i32
    return %c0_i32, %c0_i32_0 : i32, i32
  }
  func.func @transform_11(%arg0: i32) -> (i32, i32) {
    %c0_i32 = arith.constant 0 : i32
    %c0_i32_0 = arith.constant 0 : i32
    %c0_i32_1 = arith.constant 0 : i32
    return %c0_i32, %c0_i32_0 : i32, i32
  }
  func.func @transform_12(%arg0: i32) -> (i32, i32) {
    %c0_i32 = arith.constant 0 : i32
    %c0_i32_0 = arith.constant 0 : i32
    %c0_i32_1 = arith.constant 0 : i32
    return %c0_i32, %c0_i32_0 : i32, i32
  }
  func.func @transform_13(%arg0: i32) -> (i32, i32) {
    %c0_i32 = arith.constant 0 : i32
    %c0_i32_0 = arith.constant 0 : i32
    %c0_i32_1 = arith.constant 0 : i32
    return %c0_i32, %c0_i32_0 : i32, i32
  }
  func.func @transform_14(%arg0: i32) -> (i32, i32) {
    %c0_i32 = arith.constant 0 : i32
    %c0_i32_0 = arith.constant 0 : i32
    %c0_i32_1 = arith.constant 0 : i32
    return %c0_i32, %c0_i32_0 : i32, i32
  }
  func.func @transform_15(%arg0: i32) -> (i32, i32) {
    %c0_i32 = arith.constant 0 : i32
    %c0_i32_0 = arith.constant 0 : i32
    %c0_i32_1 = arith.constant 0 : i32
    return %c0_i32, %c0_i32_0 : i32, i32
  }
  func.func @transform_16(%arg0: i32) -> (i32, i32) {
    %c0_i32 = arith.constant 0 : i32
    %c0_i32_0 = arith.constant 0 : i32
    %c0_i32_1 = arith.constant 0 : i32
    return %c0_i32, %c0_i32_0 : i32, i32
  }
  func.func @transform_17(%arg0: i32) -> (i32, i32) {
    %c0_i32 = arith.constant 0 : i32
    %c0_i32_0 = arith.constant 0 : i32
    %c0_i32_1 = arith.constant 0 : i32
    return %c0_i32, %c0_i32_0 : i32, i32
  }
  func.func @transform_18(%arg0: i32) -> (i32, i32) {
    %c0_i32 = arith.constant 0 : i32
    %c0_i32_0 = arith.constant 0 : i32
    %c0_i32_1 = arith.constant 0 : i32
    return %c0_i32, %c0_i32_0 : i32, i32
  }
}

</mosaic_0001>

<llo_original>
// kernel: net_forward.1
$region0: #{net_forward.1}
  #allocation0 [shape = 'u32[]', space=smem, size = 0x4, offset = 0x4, fixed_abs, tag = 'smem constant byte address 0x4 - core index']
  #allocation1 [shape = 'u32[144,128]{1,0:T(1,128)}', space=vmem, size = 0x12000, scoped, tag = 'internal scratch']
  #allocation2 [shape = 'f32[320,2]{1,0:T(8,128)}', space=vmem, size = 0x28000, scoped, tag = 'scratch operand']
  #allocation3 [shape = 'f32[104,4]{1,0:T(8,128)}', space=vmem, size = 0xd000, scoped, tag = 'scratch operand']
  #allocation4 [shape = 'f32[32,16]{1,0:T(8,128)}', space=vmem, size = 0x4000, scoped, tag = 'scratch operand']
  #allocation5 [shape = 'f32[12,64]{1,0:T(8,128)}', space=vmem, size = 0x2000, scoped, tag = 'scratch operand']
  #allocation6 [shape = 'f32[1,1]{1,0:T(1,128)S(1)}', space=vmem, size = 0x200, scoped, tag = 'scoped memory for net_forward.1']
  %s0 = inlined_call_operand.vmem [shape: f32[160,2], index: 0, kind: input, shape index: {}]
  %s1 = inlined_call_operand.vmem [shape: f32[14,4], index: 1, kind: input, shape index: {}]
  %s2 = inlined_call_operand.vmem [shape: f32[1,4], index: 2, kind: input, shape index: {}]
  %s3 = inlined_call_operand.vmem [shape: f32[1,4], index: 3, kind: input, shape index: {}]
  %s4 = inlined_call_operand.vmem [shape: f32[28,16], index: 4, kind: input, shape index: {}]
  %s5 = inlined_call_operand.vmem [shape: f32[1,16], index: 5, kind: input, shape index: {}]
  %s6 = inlined_call_operand.vmem [shape: f32[1,16], index: 6, kind: input, shape index: {}]
  %s7 = inlined_call_operand.vmem [shape: f32[80,64], index: 7, kind: input, shape index: {}]
  %s8 = inlined_call_operand.vmem [shape: f32[1,64], index: 8, kind: input, shape index: {}]
  %s9 = inlined_call_operand.vmem [shape: f32[1,64], index: 9, kind: input, shape index: {}]
  %s10 = inlined_call_operand.hbm [shape: f32[320,128], index: 10, kind: input, shape index: {}]
  %s11 = inlined_call_operand.vmem [shape: f32[1,128], index: 11, kind: input, shape index: {}]
  %s12 = inlined_call_operand.vmem [shape: f32[1,128], index: 12, kind: input, shape index: {}]
  %s13 = inlined_call_operand.vmem [shape: f32[212,212], index: 13, kind: input, shape index: {}]
  %s14 = inlined_call_operand.vmem [shape: f32[1,212], index: 14, kind: input, shape index: {}]
  %s15 = inlined_call_operand.vmem [shape: f32[1,212], index: 15, kind: input, shape index: {}]
  %s16 = inlined_call_operand.vmem [shape: f32[212,1], index: 16, kind: input, shape index: {}]
  %s17 = inlined_call_operand.<no memory space> [shape: f32[1,1], index: 17, kind: input, shape index: {}]
  %s18 = inlined_call_operand.vmem [shape: f32[2,1], index: 18, kind: output, shape index: {}]
  %s19 = sld [smem:[#allocation0]]
  $region86: #{net_forward.1} parent=0
    _
  %s21 = ssub.s32 1, %s19
  %s22 = scalar_select 0, %s21, %s19
  %v23 = vstv %s17
  %24 = vst [vmem:[#allocation6] sm:$0x1] %v23
  $region1: #{net_forward.1} parent=0
    #allocation7 [shape = 'u8[163840]{0}', space=vmem, size = 0x28000, scoped, tag = 'input window, operand 10, single buffered']
    #allocation8 [shape = 's32[1]{0}', space=sflag, size = 0x4, scoped, tag = 'scoped memory for net_forward.1']
    %25 = vsyncpa [#allocation8], 0
    // Predicated region
    $region2: #{net_forward.1} parent=1 // pred_check
      _
    $region3: #{net_forward.1} parent=1 // pred_check_branch
      %27 = sbr.rel (0) target = $region5
    $region4: #{net_forward.1} parent=1 // pred_region
      _
    $region5: #{net_forward.1} parent=1 // pred_fallthru
      _
    // Predicated region
    $region6: #{net_forward.1} parent=1 // pred_check
      _
    $region7: #{net_forward.1} parent=1 // pred_check_branch
      %29 = sbr.rel (0) target = $region9
    $region8: #{net_forward.1} parent=1 // pred_region
      _
    $region9: #{net_forward.1} parent=1 // pred_fallthru
      _
    // Predicated region
    $region10: #{net_forward.1} parent=1 // pred_check
      _
    $region11: #{net_forward.1} parent=1 // pred_check_branch
      %31 = sbr.rel (0) target = $region13
    $region12: #{net_forward.1} parent=1 // pred_region
      _
    $region13: #{net_forward.1} parent=1 // pred_fallthru
      _
    // Predicated region
    $region14: #{net_forward.1} parent=1 // pred_check
      _
    $region15: #{net_forward.1} parent=1 // pred_check_branch
      %33 = sbr.rel (0) target = $region17
    $region16: #{net_forward.1} parent=1 // pred_region
      _
    $region17: #{net_forward.1} parent=1 // pred_fallthru
      _
    // Predicated region
    $region18: #{net_forward.1} parent=1 // pred_check
      _
    $region19: #{net_forward.1} parent=1 // pred_check_branch
      %35 = sbr.rel (0) target = $region21
    $region20: #{net_forward.1} parent=1 // pred_region
      _
    $region21: #{net_forward.1} parent=1 // pred_fallthru
      _
    // Predicated region
    $region22: #{net_forward.1} parent=1 // pred_check
      _
    $region23: #{net_forward.1} parent=1 // pred_check_branch
      %37 = sbr.rel (0) target = $region25
    $region24: #{net_forward.1} parent=1 // pred_region
      _
    $region25: #{net_forward.1} parent=1 // pred_fallthru
      _
    // Predicated region
    $region26: #{net_forward.1} parent=1 // pred_check
      _
    $region27: #{net_forward.1} parent=1 // pred_check_branch
      %39 = sbr.rel (0) target = $region29
    $region28: #{net_forward.1} parent=1 // pred_region
      _
    $region29: #{net_forward.1} parent=1 // pred_fallthru
      _
    // Predicated region
    $region30: #{net_forward.1} parent=1 // pred_check
      _
    $region31: #{net_forward.1} parent=1 // pred_check_branch
      %41 = sbr.rel (0) target = $region33
    $region32: #{net_forward.1} parent=1 // pred_region
      _
    $region33: #{net_forward.1} parent=1 // pred_fallthru
      _
    // Predicated region
    $region34: #{net_forward.1} parent=1 // pred_check
      _
    $region35: #{net_forward.1} parent=1 // pred_check_branch
      %43 = sbr.rel (0) target = $region37
    $region36: #{net_forward.1} parent=1 // pred_region
      _
    $region37: #{net_forward.1} parent=1 // pred_fallthru
      _
    // Predicated region
    $region38: #{net_forward.1} parent=1 // pred_check
      _
    $region39: #{net_forward.1} parent=1 // pred_check_branch
      %45 = sbr.rel (0) target = $region41
    $region40: #{net_forward.1} parent=1 // pred_region
      _
    $region41: #{net_forward.1} parent=1 // pred_fallthru
      _
    // Predicated region
    $region42: #{net_forward.1} parent=1 // pred_check
      _
    $region43: #{net_forward.1} parent=1 // pred_check_branch
      %47 = sbr.rel (0) target = $region45
    $region44: #{net_forward.1} parent=1 // pred_region
      %s49 = ssub.s32 5120, 5120
      %50 = vsyncadd [#allocation8], %s49
      %s51 = sshll.u32 [#allocation7], 4
      %s52 = int_to_ptr.vmem [resolvable:$true] %s51
      %57 = dma.hbm_to_vmem [thread:$0]  %s10, 5120, %s52, [#allocation8], 128, 128, 8
    $region45: #{net_forward.1} parent=1 // pred_fallthru
      _
    // Predicated region
    $region46: #{net_forward.1} parent=1 // pred_check
      _
    $region47: #{net_forward.1} parent=1 // pred_check_branch
      %59 = sbr.rel (0) target = $region49
    $region48: #{net_forward.1} parent=1 // pred_region
      _
    $region49: #{net_forward.1} parent=1 // pred_fallthru
      _
    // Predicated region
    $region50: #{net_forward.1} parent=1 // pred_check
      _
    $region51: #{net_forward.1} parent=1 // pred_check_branch
      %61 = sbr.rel (0) target = $region53
    $region52: #{net_forward.1} parent=1 // pred_region
      _
    $region53: #{net_forward.1} parent=1 // pred_fallthru
      _
    // Predicated region
    $region54: #{net_forward.1} parent=1 // pred_check
      _
    $region55: #{net_forward.1} parent=1 // pred_check_branch
      %63 = sbr.rel (0) target = $region57
    $region56: #{net_forward.1} parent=1 // pred_region
      _
    $region57: #{net_forward.1} parent=1 // pred_fallthru
      _
    // Predicated region
    $region58: #{net_forward.1} parent=1 // pred_check
      _
    $region59: #{net_forward.1} parent=1 // pred_check_branch
      %65 = sbr.rel (0) target = $region61
    $region60: #{net_forward.1} parent=1 // pred_region
      _
    $region61: #{net_forward.1} parent=1 // pred_fallthru
      _
    // Predicated region
    $region62: #{net_forward.1} parent=1 // pred_check
      _
    $region63: #{net_forward.1} parent=1 // pred_check_branch
      %67 = sbr.rel (0) target = $region65
    $region64: #{net_forward.1} parent=1 // pred_region
      _
    $region65: #{net_forward.1} parent=1 // pred_fallthru
      _
    // Predicated region
    $region66: #{net_forward.1} parent=1 // pred_check
      _
    $region67: #{net_forward.1} parent=1 // pred_check_branch
      %69 = sbr.rel (0) target = $region69
    $region68: #{net_forward.1} parent=1 // pred_region
      _
    $region69: #{net_forward.1} parent=1 // pred_fallthru
      _
    // Predicated region
    $region70: #{net_forward.1} parent=1 // pred_check
      _
    $region71: #{net_forward.1} parent=1 // pred_check_branch
      %71 = sbr.rel (0) target = $region73
    $region72: #{net_forward.1} parent=1 // pred_region
      _
    $region73: #{net_forward.1} parent=1 // pred_fallthru
      _
    // Predicated region
    $region74: #{net_forward.1} parent=1 // pred_check
      _
    $region75: #{net_forward.1} parent=1 // pred_check_branch
      %73 = sbr.rel (0) target = $region77
    $region76: #{net_forward.1} parent=1 // pred_region
      %74 = dma.done [#allocation8], 5120
    $region77: #{net_forward.1} parent=1 // pred_fallthru
      _
    %v75 = vld [vmem:[%s0] sm:$0xff]
    %v76 = vld [vmem:[%s0 + $0x8] sm:$0xff]
    %v77 = vld [vmem:[%s0 + $0x10] sm:$0xff]
    %v78 = vld [vmem:[%s0 + $0x18] sm:$0xff]
    %v79 = vld [vmem:[%s0 + $0x20] sm:$0xff]
    %v80 = vld [vmem:[%s0 + $0x28] sm:$0xff]
    %v81 = vld [vmem:[%s0 + $0x30] sm:$0xff]
    %v82 = vld [vmem:[%s0 + $0x38] sm:$0xff]
    %v83 = vld [vmem:[%s0 + $0x40] sm:$0xff]
    %v84 = vld [vmem:[%s0 + $0x48] sm:$0xff]
    %v85 = vld [vmem:[%s0 + $0x50] sm:$0xff]
    %v86 = vld [vmem:[%s0 + $0x58] sm:$0xff]
    %v87 = vld [vmem:[%s0 + $0x60] sm:$0xff]
    %v88 = vld [vmem:[%s0 + $0x68] sm:$0xff]
    %v89 = vld [vmem:[%s0 + $0x70] sm:$0xff]
    %v90 = vld [vmem:[%s0 + $0x78] sm:$0xff]
    %v91 = vld [vmem:[%s0 + $0x80] sm:$0xff]
    %v92 = vld [vmem:[%s0 + $0x88] sm:$0xff]
    %v93 = vld [vmem:[%s0 + $0x90] sm:$0xff]
    %v94 = vld [vmem:[%s0 + $0x98] sm:$0xff]
    %v95 = vsub.f32 %v75, 0.8849386
    %v96 = vsub.f32 %v76, 0.8849386
    %v97 = vsub.f32 %v77, 0.8849386
    %v98 = vsub.f32 %v78, 0.8849386
    %v99 = vsub.f32 %v79, 0.8849386
    %v100 = vsub.f32 %v80, 0.8849386
    %v101 = vsub.f32 %v81, 0.8849386
    %v102 = vsub.f32 %v82, 0.8849386
    %v103 = vsub.f32 %v83, 0.8849386
    %v104 = vsub.f32 %v84, 0.8849386
    %v105 = vsub.f32 %v85, 0.8849386
    %v106 = vsub.f32 %v86, 0.8849386
    %v107 = vsub.f32 %v87, 0.8849386
    %v108 = vsub.f32 %v88, 0.8849386
    %v109 = vsub.f32 %v89, 0.8849386
    %v110 = vsub.f32 %v90, 0.8849386
    %v111 = vsub.f32 %v91, 0.8849386
    %v112 = vsub.f32 %v92, 0.8849386
    %v113 = vsub.f32 %v93, 0.8849386
    %v114 = vsub.f32 %v94, 0.8849386
    %v115 = vrcp.pop 0.21902198
    %v116 = vmul.f32 %v95, %v115
    %v117 = vmul.f32 %v96, %v115
    %v118 = vmul.f32 %v97, %v115
    %v119 = vmul.f32 %v98, %v115
    %v120 = vmul.f32 %v99, %v115
    %v121 = vmul.f32 %v100, %v115
    %v122 = vmul.f32 %v101, %v115
    %v123 = vmul.f32 %v102, %v115
    %v124 = vmul.f32 %v103, %v115
    %v125 = vmul.f32 %v104, %v115
    %v126 = vmul.f32 %v105, %v115
    %v127 = vmul.f32 %v106, %v115
    %v128 = vmul.f32 %v107, %v115
    %v129 = vmul.f32 %v108, %v115
    %v130 = vmul.f32 %v109, %v115
    %v131 = vmul.f32 %v110, %v115
    %v132 = vmul.f32 %v111, %v115
    %v133 = vmul.f32 %v112, %v115
    %v134 = vmul.f32 %v113, %v115
    %v135 = vmul.f32 %v114, %v115
    %vm136 = vcmask 15360
    %v137 = vsel %vm136, %v116, 0.0
    %138 = vadd.xlane.f32.xlu0 %v137
    %v139 = vpop.xlane.xlu0 %138
    %v140 = vsel %vm136, %v117, 0.0
    %141 = vadd.xlane.f32.xlu0 %v140
    %v142 = vpop.xlane.xlu0 %141
    %v143 = vsel %vm136, %v118, 0.0
    %144 = vadd.xlane.f32.xlu0 %v143
    %v145 = vpop.xlane.xlu0 %144
    %v146 = vsel %vm136, %v119, 0.0
    %147 = vadd.xlane.f32.xlu0 %v146
    %v148 = vpop.xlane.xlu0 %147
    %v149 = vsel %vm136, %v120, 0.0
    %150 = vadd.xlane.f32.xlu0 %v149
    %v151 = vpop.xlane.xlu0 %150
    %v152 = vsel %vm136, %v121, 0.0
    %153 = vadd.xlane.f32.xlu0 %v152
    %v154 = vpop.xlane.xlu0 %153
    %v155 = vsel %vm136, %v122, 0.0
    %156 = vadd.xlane.f32.xlu0 %v155
    %v157 = vpop.xlane.xlu0 %156
    %v158 = vsel %vm136, %v123, 0.0
    %159 = vadd.xlane.f32.xlu0 %v158
    %v160 = vpop.xlane.xlu0 %159
    %v161 = vsel %vm136, %v124, 0.0
    %162 = vadd.xlane.f32.xlu0 %v161
    %v163 = vpop.xlane.xlu0 %162
    %v164 = vsel %vm136, %v125, 0.0
    %165 = vadd.xlane.f32.xlu0 %v164
    %v166 = vpop.xlane.xlu0 %165
    %v167 = vsel %vm136, %v126, 0.0
    %168 = vadd.xlane.f32.xlu0 %v167
    %v169 = vpop.xlane.xlu0 %168
    %v170 = vsel %vm136, %v127, 0.0
    %171 = vadd.xlane.f32.xlu0 %v170
    %v172 = vpop.xlane.xlu0 %171
    %v173 = vsel %vm136, %v128, 0.0
    %174 = vadd.xlane.f32.xlu0 %v173
    %v175 = vpop.xlane.xlu0 %174
    %v176 = vsel %vm136, %v129, 0.0
    %177 = vadd.xlane.f32.xlu0 %v176
    %v178 = vpop.xlane.xlu0 %177
    %v179 = vsel %vm136, %v130, 0.0
    %180 = vadd.xlane.f32.xlu0 %v179
    %v181 = vpop.xlane.xlu0 %180
    %v182 = vsel %vm136, %v131, 0.0
    %183 = vadd.xlane.f32.xlu0 %v182
    %v184 = vpop.xlane.xlu0 %183
    %v185 = vsel %vm136, %v132, 0.0
    %186 = vadd.xlane.f32.xlu0 %v185
    %v187 = vpop.xlane.xlu0 %186
    %v188 = vsel %vm136, %v133, 0.0
    %189 = vadd.xlane.f32.xlu0 %v188
    %v190 = vpop.xlane.xlu0 %189
    %v191 = vsel %vm136, %v134, 0.0
    %192 = vadd.xlane.f32.xlu0 %v191
    %v193 = vpop.xlane.xlu0 %192
    %v194 = vsel %vm136, %v135, 0.0
    %195 = vadd.xlane.f32.xlu0 %v194
    %v196 = vpop.xlane.xlu0 %195
    %v197 = vrcp.pop 2.0
    %v198 = vmul.f32 %v139, %v197
    %v199 = vmul.f32 %v142, %v197
    %v200 = vmul.f32 %v145, %v197
    %v201 = vmul.f32 %v148, %v197
    %v202 = vmul.f32 %v151, %v197
    %v203 = vmul.f32 %v154, %v197
    %v204 = vmul.f32 %v157, %v197
    %v205 = vmul.f32 %v160, %v197
    %v206 = vmul.f32 %v163, %v197
    %v207 = vmul.f32 %v166, %v197
    %v208 = vmul.f32 %v169, %v197
    %v209 = vmul.f32 %v172, %v197
    %v210 = vmul.f32 %v175, %v197
    %v211 = vmul.f32 %v178, %v197
    %v212 = vmul.f32 %v181, %v197
    %v213 = vmul.f32 %v184, %v197
    %v214 = vmul.f32 %v187, %v197
    %v215 = vmul.f32 %v190, %v197
    %v216 = vmul.f32 %v193, %v197
    %v217 = vmul.f32 %v196, %v197
    %vm218 = vcmask 7168
    %219 = vst.msk [vmem:[#allocation2] sm:$0xff] %vm218, %v116
    %220 = vst.msk [vmem:[#allocation2 + $0x8] sm:$0xff] %vm218, %v117
    %221 = vst.msk [vmem:[#allocation2 + $0x10] sm:$0xff] %vm218, %v118
    %222 = vst.msk [vmem:[#allocation2 + $0x18] sm:$0xff] %vm218, %v119
    %223 = vst.msk [vmem:[#allocation2 + $0x20] sm:$0xff] %vm218, %v120
    %224 = vst.msk [vmem:[#allocation2 + $0x28] sm:$0xff] %vm218, %v121
    %225 = vst.msk [vmem:[#allocation2 + $0x30] sm:$0xff] %vm218, %v122
    %226 = vst.msk [vmem:[#allocation2 + $0x38] sm:$0xff] %vm218, %v123
    %227 = vst.msk [vmem:[#allocation2 + $0x40] sm:$0xff] %vm218, %v124
    %228 = vst.msk [vmem:[#allocation2 + $0x48] sm:$0xff] %vm218, %v125
    %229 = vst.msk [vmem:[#allocation2 + $0x50] sm:$0xff] %vm218, %v126
    %230 = vst.msk [vmem:[#allocation2 + $0x58] sm:$0xff] %vm218, %v127
    %231 = vst.msk [vmem:[#allocation2 + $0x60] sm:$0xff] %vm218, %v128
    %232 = vst.msk [vmem:[#allocation2 + $0x68] sm:$0xff] %vm218, %v129
    %233 = vst.msk [vmem:[#allocation2 + $0x70] sm:$0xff] %vm218, %v130
    %234 = vst.msk [vmem:[#allocation2 + $0x78] sm:$0xff] %vm218, %v131
    %235 = vst.msk [vmem:[#allocation2 + $0x80] sm:$0xff] %vm218, %v132
    %236 = vst.msk [vmem:[#allocation2 + $0x88] sm:$0xff] %vm218, %v133
    %237 = vst.msk [vmem:[#allocation2 + $0x90] sm:$0xff] %vm218, %v134
    %238 = vst.msk [vmem:[#allocation2 + $0x98] sm:$0xff] %vm218, %v135
    %vm239 = vcmask 15368
    %240 = vst.msk [vmem:[#allocation2] sm:$0xff] %vm239, %v198
    %241 = vst.msk [vmem:[#allocation2 + $0x8] sm:$0xff] %vm239, %v199
    %242 = vst.msk [vmem:[#allocation2 + $0x10] sm:$0xff] %vm239, %v200
    %243 = vst.msk [vmem:[#allocation2 + $0x18] sm:$0xff] %vm239, %v201
    %244 = vst.msk [vmem:[#allocation2 + $0x20] sm:$0xff] %vm239, %v202
    %245 = vst.msk [vmem:[#allocation2 + $0x28] sm:$0xff] %vm239, %v203
    %246 = vst.msk [vmem:[#allocation2 + $0x30] sm:$0xff] %vm239, %v204
    %247 = vst.msk [vmem:[#allocation2 + $0x38] sm:$0xff] %vm239, %v205
    %248 = vst.msk [vmem:[#allocation2 + $0x40] sm:$0xff] %vm239, %v206
    %249 = vst.msk [vmem:[#allocation2 + $0x48] sm:$0xff] %vm239, %v207
    %250 = vst.msk [vmem:[#allocation2 + $0x50] sm:$0xff] %vm239, %v208
    %251 = vst.msk [vmem:[#allocation2 + $0x58] sm:$0xff] %vm239, %v209
    %252 = vst.msk [vmem:[#allocation2 + $0x60] sm:$0xff] %vm239, %v210
    %253 = vst.msk [vmem:[#allocation2 + $0x68] sm:$0xff] %vm239, %v211
    %254 = vst.msk [vmem:[#allocation2 + $0x70] sm:$0xff] %vm239, %v212
    %255 = vst.msk [vmem:[#allocation2 + $0x78] sm:$0xff] %vm239, %v213
    %256 = vst.msk [vmem:[#allocation2 + $0x80] sm:$0xff] %vm239, %v214
    %257 = vst.msk [vmem:[#allocation2 + $0x88] sm:$0xff] %vm239, %v215
    %258 = vst.msk [vmem:[#allocation2 + $0x90] sm:$0xff] %vm239, %v216
    %259 = vst.msk [vmem:[#allocation2 + $0x98] sm:$0xff] %vm239, %v217
    %280 = vrot.lane.b32.xlu0 %v116, 127
    %v281 = vpop.permute.xlu0 %280
    %282 = vrot.lane.b32.xlu0 %v117, 127
    %v283 = vpop.permute.xlu0 %282
    %284 = vrot.lane.b32.xlu0 %v118, 127
    %v285 = vpop.permute.xlu0 %284
    %286 = vrot.lane.b32.xlu0 %v119, 127
    %v287 = vpop.permute.xlu0 %286
    %288 = vrot.lane.b32.xlu0 %v120, 127
    %v289 = vpop.permute.xlu0 %288
    %290 = vrot.lane.b32.xlu0 %v121, 127
    %v291 = vpop.permute.xlu0 %290
    %292 = vrot.lane.b32.xlu0 %v122, 127
    %v293 = vpop.permute.xlu0 %292
    %294 = vrot.lane.b32.xlu0 %v123, 127
    %v295 = vpop.permute.xlu0 %294
    %296 = vrot.lane.b32.xlu0 %v124, 127
    %v297 = vpop.permute.xlu0 %296
    %298 = vrot.lane.b32.xlu0 %v125, 127
    %v299 = vpop.permute.xlu0 %298
    %300 = vrot.lane.b32.xlu0 %v126, 127
    %v301 = vpop.permute.xlu0 %300
    %302 = vrot.lane.b32.xlu0 %v127, 127
    %v303 = vpop.permute.xlu0 %302
    %304 = vrot.lane.b32.xlu0 %v128, 127
    %v305 = vpop.permute.xlu0 %304
    %306 = vrot.lane.b32.xlu0 %v129, 127
    %v307 = vpop.permute.xlu0 %306
    %308 = vrot.lane.b32.xlu0 %v130, 127
    %v309 = vpop.permute.xlu0 %308
    %310 = vrot.lane.b32.xlu0 %v131, 127
    %v311 = vpop.permute.xlu0 %310
    %312 = vrot.lane.b32.xlu0 %v132, 127
    %v313 = vpop.permute.xlu0 %312
    %314 = vrot.lane.b32.xlu0 %v133, 127
    %v315 = vpop.permute.xlu0 %314
    %316 = vrot.lane.b32.xlu0 %v134, 127
    %v317 = vpop.permute.xlu0 %316
    %318 = vrot.lane.b32.xlu0 %v135, 127
    %v319 = vpop.permute.xlu0 %318
    %340 = vst.msk [vmem:[#allocation2 + $0xa0] sm:$0xff] %vm218, %v281
    %341 = vst.msk [vmem:[#allocation2 + $0xa8] sm:$0xff] %vm218, %v283
    %342 = vst.msk [vmem:[#allocation2 + $0xb0] sm:$0xff] %vm218, %v285
    %343 = vst.msk [vmem:[#allocation2 + $0xb8] sm:$0xff] %vm218, %v287
    %344 = vst.msk [vmem:[#allocation2 + $0xc0] sm:$0xff] %vm218, %v289
    %345 = vst.msk [vmem:[#allocation2 + $0xc8] sm:$0xff] %vm218, %v291
    %346 = vst.msk [vmem:[#allocation2 + $0xd0] sm:$0xff] %vm218, %v293
    %347 = vst.msk [vmem:[#allocation2 + $0xd8] sm:$0xff] %vm218, %v295
    %348 = vst.msk [vmem:[#allocation2 + $0xe0] sm:$0xff] %vm218, %v297
    %349 = vst.msk [vmem:[#allocation2 + $0xe8] sm:$0xff] %vm218, %v299
    %350 = vst.msk [vmem:[#allocation2 + $0xf0] sm:$0xff] %vm218, %v301
    %351 = vst.msk [vmem:[#allocation2 + $0xf8] sm:$0xff] %vm218, %v303
    %352 = vst.msk [vmem:[#allocation2 + $0x100] sm:$0xff] %vm218, %v305
    %353 = vst.msk [vmem:[#allocation2 + $0x108] sm:$0xff] %vm218, %v307
    %354 = vst.msk [vmem:[#allocation2 + $0x110] sm:$0xff] %vm218, %v309
    %355 = vst.msk [vmem:[#allocation2 + $0x118] sm:$0xff] %vm218, %v311
    %356 = vst.msk [vmem:[#allocation2 + $0x120] sm:$0xff] %vm218, %v313
    %357 = vst.msk [vmem:[#allocation2 + $0x128] sm:$0xff] %vm218, %v315
    %358 = vst.msk [vmem:[#allocation2 + $0x130] sm:$0xff] %vm218, %v317
    %359 = vst.msk [vmem:[#allocation2 + $0x138] sm:$0xff] %vm218, %v319
    %360 = vst.msk [vmem:[#allocation2 + $0xa0] sm:$0xff] %vm239, %v198
    %361 = vst.msk [vmem:[#allocation2 + $0xa8] sm:$0xff] %vm239, %v199
    %362 = vst.msk [vmem:[#allocation2 + $0xb0] sm:$0xff] %vm239, %v200
    %363 = vst.msk [vmem:[#allocation2 + $0xb8] sm:$0xff] %vm239, %v201
    %364 = vst.msk [vmem:[#allocation2 + $0xc0] sm:$0xff] %vm239, %v202
    %365 = vst.msk [vmem:[#allocation2 + $0xc8] sm:$0xff] %vm239, %v203
    %366 = vst.msk [vmem:[#allocation2 + $0xd0] sm:$0xff] %vm239, %v204
    %367 = vst.msk [vmem:[#allocation2 + $0xd8] sm:$0xff] %vm239, %v205
    %368 = vst.msk [vmem:[#allocation2 + $0xe0] sm:$0xff] %vm239, %v206
    %369 = vst.msk [vmem:[#allocation2 + $0xe8] sm:$0xff] %vm239, %v207
    %370 = vst.msk [vmem:[#allocation2 + $0xf0] sm:$0xff] %vm239, %v208
    %371 = vst.msk [vmem:[#allocation2 + $0xf8] sm:$0xff] %vm239, %v209
    %372 = vst.msk [vmem:[#allocation2 + $0x100] sm:$0xff] %vm239, %v210
    %373 = vst.msk [vmem:[#allocation2 + $0x108] sm:$0xff] %vm239, %v211
    %374 = vst.msk [vmem:[#allocation2 + $0x110] sm:$0xff] %vm239, %v212
    %375 = vst.msk [vmem:[#allocation2 + $0x118] sm:$0xff] %vm239, %v213
    %376 = vst.msk [vmem:[#allocation2 + $0x120] sm:$0xff] %vm239, %v214
    %377 = vst.msk [vmem:[#allocation2 + $0x128] sm:$0xff] %vm239, %v215
    %378 = vst.msk [vmem:[#allocation2 + $0x130] sm:$0xff] %vm239, %v216
    %379 = vst.msk [vmem:[#allocation2 + $0x138] sm:$0xff] %vm239, %v217
    %v380 = vld [vmem:[#allocation2] ss:$3 sm:$0xff]
    %s381 = scalar_lea.vmem [#allocation2], 24
    %v382 = vld [vmem:[%s381] ss:$3 sm:$0xff]
    %s383 = scalar_lea.vmem [#allocation2], 48
    %v384 = vld [vmem:[%s383] ss:$3 sm:$0xff]
    %s385 = scalar_lea.vmem [#allocation2], 72
    %v386 = vld [vmem:[%s385] ss:$3 sm:$0xff]
    %s387 = scalar_lea.vmem [#allocation2], 96
    %v388 = vld [vmem:[%s387] ss:$3 sm:$0xff]
    %s389 = scalar_lea.vmem [#allocation2], 120
    %v390 = vld [vmem:[%s389] ss:$3 sm:$0xff]
    %s391 = scalar_lea.vmem [#allocation2], 144
    %v392 = vld [vmem:[%s391] ss:$3 sm:$0xf]
    %s393 = scalar_lea.vmem [#allocation2], 160
    %v394 = vld [vmem:[%s393] ss:$3 sm:$0xff]
    %s395 = scalar_lea.vmem [#allocation2], 184
    %v396 = vld [vmem:[%s395] ss:$3 sm:$0xff]
    %s397 = scalar_lea.vmem [#allocation2], 208
    %v398 = vld [vmem:[%s397] ss:$3 sm:$0xff]
    %s399 = scalar_lea.vmem [#allocation2], 232
    %v400 = vld [vmem:[%s399] ss:$3 sm:$0xff]
    %s401 = scalar_lea.vmem [#allocation2], 256
    %v402 = vld [vmem:[%s401] ss:$3 sm:$0xff]
    %s403 = scalar_lea.vmem [#allocation2], 280
    %v404 = vld [vmem:[%s403] ss:$3 sm:$0xff]
    %s405 = scalar_lea.vmem [#allocation2], 304
    %v406 = vld [vmem:[%s405] ss:$3 sm:$0xf]
    %vm414 = vcmask 1043456
    %v415 = vrot.slane %v394, 4
    %v416 = vrot.slane %v396, 4
    %v417 = vsel %vm414, %v415, %v416
    %v418 = vrot.slane %v398, 4
    %v419 = vsel %vm414, %v416, %v418
    %v420 = vrot.slane %v400, 4
    %v421 = vsel %vm414, %v418, %v420
    %v422 = vrot.slane %v402, 4
    %v423 = vsel %vm414, %v420, %v422
    %v424 = vrot.slane %v404, 4
    %v425 = vsel %vm414, %v422, %v424
    %v426 = vrot.slane %v406, 4
    %v427 = vsel %vm414, %v424, %v426
    %v429 = vsel %vm414, %v392, %v415
    %v430 = vld [vmem:[%s1] sm:$0x3]
    %s431 = scalar_lea.vmem [#allocation2], 1
    %v432 = vld [vmem:[%s431] ss:$3 sm:$0xff]
    %s433 = scalar_lea.vmem [#allocation2], 25
    %v434 = vld [vmem:[%s433] ss:$3 sm:$0xff]
    %s435 = scalar_lea.vmem [#allocation2], 49
    %v436 = vld [vmem:[%s435] ss:$3 sm:$0xff]
    %s437 = scalar_lea.vmem [#allocation2], 73
    %v438 = vld [vmem:[%s437] ss:$3 sm:$0xff]
    %s439 = scalar_lea.vmem [#allocation2], 97
    %v440 = vld [vmem:[%s439] ss:$3 sm:$0xff]
    %s441 = scalar_lea.vmem [#allocation2], 121
    %v442 = vld [vmem:[%s441] ss:$3 sm:$0xff]
    %s443 = scalar_lea.vmem [#allocation2], 145
    %v444 = vld [vmem:[%s443] ss:$3 sm:$0xf]
    %s445 = scalar_lea.vmem [#allocation2], 161
    %v446 = vld [vmem:[%s445] ss:$3 sm:$0xff]
    %s447 = scalar_lea.vmem [#allocation2], 185
    %v448 = vld [vmem:[%s447] ss:$3 sm:$0xff]
    %s449 = scalar_lea.vmem [#allocation2], 209
    %v450 = vld [vmem:[%s449] ss:$3 sm:$0xff]
    %s451 = scalar_lea.vmem [#allocation2], 233
    %v452 = vld [vmem:[%s451] ss:$3 sm:$0xff]
    %s453 = scalar_lea.vmem [#allocation2], 257
    %v454 = vld [vmem:[%s453] ss:$3 sm:$0xff]
    %s455 = scalar_lea.vmem [#allocation2], 281
    %v456 = vld [vmem:[%s455] ss:$3 sm:$0xff]
    %s457 = scalar_lea.vmem [#allocation2], 305
    %v458 = vld [vmem:[%s457] ss:$3 sm:$0xf]
    %v466 = vrot.slane %v446, 4
    %v467 = vrot.slane %v448, 4
    %v468 = vsel %vm414, %v466, %v467
    %v469 = vrot.slane %v450, 4
    %v470 = vsel %vm414, %v467, %v469
    %v471 = vrot.slane %v452, 4
    %v472 = vsel %vm414, %v469, %v471
    %v473 = vrot.slane %v454, 4
    %v474 = vsel %vm414, %v471, %v473
    %v475 = vrot.slane %v456, 4
    %v476 = vsel %vm414, %v473, %v475
    %v477 = vrot.slane %v458, 4
    %v478 = vsel %vm414, %v475, %v477
    %v480 = vsel %vm414, %v444, %v466
    %v481 = vld [vmem:[%s1 + $0x2] sm:$0x3]
    %v483 = vsel %vm136, %v432, 0
    %v486 = vsel %vm136, %v434, 0
    %v489 = vsel %vm136, %v436, 0
    %v492 = vsel %vm136, %v438, 0
    %v495 = vsel %vm136, %v440, 0
    %v498 = vsel %vm136, %v442, 0
    %v501 = vsel %vm136, %v480, 0
    %v503 = vsel %vm136, %v468, 0
    %v505 = vsel %vm136, %v470, 0
    %v507 = vsel %vm136, %v472, 0
    %v509 = vsel %vm136, %v474, 0
    %v511 = vsel %vm136, %v476, 0
    %v513 = vsel %vm136, %v478, 0
    %vm515 = vcmask 1041408
    %v517 = vsel %vm515, %v481, 0
    %519 = vmatprep.subr.mxu0 0.0
    %520 = vmatpush1.msra.mxu0 0.0
    %521 = vmatprep.subr.mxu0 0.0
    %522 = vmatpush1.msra.mxu0 0.0
    %523 = vmatprep.subr.mxu0 0.0
    %524 = vmatpush1.msra.mxu0 0.0
    %525 = vmatprep.subr.mxu0 0.0
    %526 = vmatpush1.msra.mxu0 0.0
    %527 = vmatprep.subr.mxu0 0.0
    %528 = vmatpush1.msra.mxu0 0.0
    %529 = vmatprep.subr.mxu0 0.0
    %530 = vmatpush1.msra.mxu0 0.0
    %531 = vmatprep.subr.mxu0 0.0
    %532 = vmatpush1.msra.mxu0 0.0
    %533 = vmatprep.subr.mxu0 0.0
    %534 = vmatpush1.msra.mxu0 0.0
    %535 = vmatprep.subr.mxu0 0.0
    %536 = vmatpush1.msra.mxu0 0.0
    %537 = vmatprep.subr.mxu0 0.0
    %538 = vmatpush1.msra.mxu0 0.0
    %539 = vmatprep.subr.mxu0 0.0
    %540 = vmatpush1.msra.mxu0 0.0
    %541 = vmatprep.subr.mxu0 0.0
    %542 = vmatpush1.msra.mxu0 0.0
    %543 = vmatprep.subr.mxu0 0.0
    %544 = vmatpush1.msra.mxu0 0.0
    %545 = vmatprep.subr.mxu0 0.0
    %546 = vmatpush1.msra.mxu0 0.0
    %547 = vmatprep.subr.mxu0 0.0
    %548 = vmatpush1.msra.mxu0 0.0
    %549 = vmatprep.subr.mxu0 0.0
    %550 = vmatpush1.msra.mxu0 %v517
    %551 = vmatprep.subr.mxu0 0.0
    %552 = vmatpush2.msra.mxu0 0.0
    %553 = vmatprep.subr.mxu0 0.0
    %554 = vmatpush2.msra.mxu0 0.0
    %555 = vmatprep.subr.mxu0 0.0
    %556 = vmatpush2.msra.mxu0 0.0
    %557 = vmatprep.subr.mxu0 0.0
    %558 = vmatpush2.msra.mxu0 0.0
    %559 = vmatprep.subr.mxu0 0.0
    %560 = vmatpush2.msra.mxu0 0.0
    %561 = vmatprep.subr.mxu0 0.0
    %562 = vmatpush2.msra.mxu0 0.0
    %563 = vmatprep.subr.mxu0 0.0
    %564 = vmatpush2.msra.mxu0 0.0
    %565 = vmatprep.subr.mxu0 0.0
    %566 = vmatpush2.msra.mxu0 0.0
    %567 = vmatprep.subr.mxu0 0.0
    %568 = vmatpush2.msra.mxu0 0.0
    %569 = vmatprep.subr.mxu0 0.0
    %570 = vmatpush2.msra.mxu0 0.0
    %571 = vmatprep.subr.mxu0 0.0
    %572 = vmatpush2.msra.mxu0 0.0
    %573 = vmatprep.subr.mxu0 0.0
    %574 = vmatpush2.msra.mxu0 0.0
    %575 = vmatprep.subr.mxu0 0.0
    %576 = vmatpush2.msra.mxu0 0.0
    %577 = vmatprep.subr.mxu0 0.0
    %578 = vmatpush2.msra.mxu0 0.0
    %579 = vmatprep.subr.mxu0 0.0
    %580 = vmatpush2.msra.mxu0 0.0
    %581 = vmatprep.subr.mxu0 0.0
    %582 = vmatpush2.msra.mxu0 0.0
    %583 = vmatprep.mubr.f32.mxu0 0.0
    %584 = vmatmul.mubr.f32.gmra.mxu0 %v483
    %v585 = vpop.f32.mrf.mxu0
    %v586 = vadd.f32 0.0, %v585
    %v587 = vpop.f32.mrf.mxu0
    %588 = vmatprep.mubr.f32.mxu0 0.0
    %589 = vmatmul.mubr.f32.gmra.mxu0 %v486
    %v590 = vpop.f32.mrf.mxu0
    %v591 = vadd.f32 0.0, %v590
    %v592 = vpop.f32.mrf.mxu0
    %593 = vmatprep.mubr.f32.mxu0 0.0
    %594 = vmatmul.mubr.f32.gmra.mxu0 %v489
    %v595 = vpop.f32.mrf.mxu0
    %v596 = vadd.f32 0.0, %v595
    %v597 = vpop.f32.mrf.mxu0
    %598 = vmatprep.mubr.f32.mxu0 0.0
    %599 = vmatmul.mubr.f32.gmra.mxu0 %v492
    %v600 = vpop.f32.mrf.mxu0
    %v601 = vadd.f32 0.0, %v600
    %v602 = vpop.f32.mrf.mxu0
    %603 = vmatprep.mubr.f32.mxu0 0.0
    %604 = vmatmul.mubr.f32.gmra.mxu0 %v495
    %v605 = vpop.f32.mrf.mxu0
    %v606 = vadd.f32 0.0, %v605
    %v607 = vpop.f32.mrf.mxu0
    %608 = vmatprep.mubr.f32.mxu0 0.0
    %609 = vmatmul.mubr.f32.gmra.mxu0 %v498
    %v610 = vpop.f32.mrf.mxu0
    %v611 = vadd.f32 0.0, %v610
    %v612 = vpop.f32.mrf.mxu0
    %613 = vmatprep.mubr.f32.mxu0 0.0
    %614 = vmatmul.mubr.f32.gmra.mxu0 %v501
    %v615 = vpop.f32.mrf.mxu0
    %v616 = vadd.f32 0.0, %v615
    %v617 = vpop.f32.mrf.mxu0
    %618 = vmatprep.mubr.f32.mxu0 0.0
    %619 = vmatmul.mubr.f32.gmra.mxu0 %v503
    %v620 = vpop.f32.mrf.mxu0
    %v621 = vadd.f32 0.0, %v620
    %v622 = vpop.f32.mrf.mxu0
    %623 = vmatprep.mubr.f32.mxu0 0.0
    %624 = vmatmul.mubr.f32.gmra.mxu0 %v505
    %v625 = vpop.f32.mrf.mxu0
    %v626 = vadd.f32 0.0, %v625
    %v627 = vpop.f32.mrf.mxu0
    %628 = vmatprep.mubr.f32.mxu0 0.0
    %629 = vmatmul.mubr.f32.gmra.mxu0 %v507
    %v630 = vpop.f32.mrf.mxu0
    %v631 = vadd.f32 0.0, %v630
    %v632 = vpop.f32.mrf.mxu0
    %633 = vmatprep.mubr.f32.mxu0 0.0
    %634 = vmatmul.mubr.f32.gmra.mxu0 %v509
    %v635 = vpop.f32.mrf.mxu0
    %v636 = vadd.f32 0.0, %v635
    %v637 = vpop.f32.mrf.mxu0
    %638 = vmatprep.mubr.f32.mxu0 0.0
    %639 = vmatmul.mubr.f32.gmra.mxu0 %v511
    %v640 = vpop.f32.mrf.mxu0
    %v641 = vadd.f32 0.0, %v640
    %v642 = vpop.f32.mrf.mxu0
    %643 = vmatprep.mubr.f32.mxu0 0.0
    %644 = vmatmul.mubr.f32.gmra.mxu0 %v513
    %v645 = vpop.f32.mrf.mxu0
    %v646 = vadd.f32 0.0, %v645
    %v647 = vpop.f32.mrf.mxu0
    %648 = vdwg.mxu0
    %v650 = vsel %vm136, %v380, 0
    %v653 = vsel %vm136, %v382, 0
    %v656 = vsel %vm136, %v384, 0
    %v659 = vsel %vm136, %v386, 0
    %v662 = vsel %vm136, %v388, 0
    %v665 = vsel %vm136, %v390, 0
    %v668 = vsel %vm136, %v429, 0
    %v670 = vsel %vm136, %v417, 0
    %v672 = vsel %vm136, %v419, 0
    %v674 = vsel %vm136, %v421, 0
    %v676 = vsel %vm136, %v423, 0
    %v678 = vsel %vm136, %v425, 0
    %v680 = vsel %vm136, %v427, 0
    %v683 = vsel %vm515, %v430, 0
    %685 = vmatprep.subr.mxu0 0.0
    %686 = vmatpush1.msra.mxu0 0.0
    %687 = vmatprep.subr.mxu0 0.0
    %688 = vmatpush1.msra.mxu0 0.0
    %689 = vmatprep.subr.mxu0 0.0
    %690 = vmatpush1.msra.mxu0 0.0
    %691 = vmatprep.subr.mxu0 0.0
    %692 = vmatpush1.msra.mxu0 0.0
    %693 = vmatprep.subr.mxu0 0.0
    %694 = vmatpush1.msra.mxu0 0.0
    %695 = vmatprep.subr.mxu0 0.0
    %696 = vmatpush1.msra.mxu0 0.0
    %697 = vmatprep.subr.mxu0 0.0
    %698 = vmatpush1.msra.mxu0 0.0
    %699 = vmatprep.subr.mxu0 0.0
    %700 = vmatpush1.msra.mxu0 0.0
    %701 = vmatprep.subr.mxu0 0.0
    %702 = vmatpush1.msra.mxu0 0.0
    %703 = vmatprep.subr.mxu0 0.0
    %704 = vmatpush1.msra.mxu0 0.0
    %705 = vmatprep.subr.mxu0 0.0
    %706 = vmatpush1.msra.mxu0 0.0
    %707 = vmatprep.subr.mxu0 0.0
    %708 = vmatpush1.msra.mxu0 0.0
    %709 = vmatprep.subr.mxu0 0.0
    %710 = vmatpush1.msra.mxu0 0.0
    %711 = vmatprep.subr.mxu0 0.0
    %712 = vmatpush1.msra.mxu0 0.0
    %713 = vmatprep.subr.mxu0 0.0
    %714 = vmatpush1.msra.mxu0 0.0
    %715 = vmatprep.subr.mxu0 0.0
    %716 = vmatpush1.msra.mxu0 %v683
    %717 = vmatprep.subr.mxu0 0.0
    %718 = vmatpush2.msra.mxu0 0.0
    %719 = vmatprep.subr.mxu0 0.0
    %720 = vmatpush2.msra.mxu0 0.0
    %721 = vmatprep.subr.mxu0 0.0
    %722 = vmatpush2.msra.mxu0 0.0
    %723 = vmatprep.subr.mxu0 0.0
    %724 = vmatpush2.msra.mxu0 0.0
    %725 = vmatprep.subr.mxu0 0.0
    %726 = vmatpush2.msra.mxu0 0.0
    %727 = vmatprep.subr.mxu0 0.0
    %728 = vmatpush2.msra.mxu0 0.0
    %729 = vmatprep.subr.mxu0 0.0
    %730 = vmatpush2.msra.mxu0 0.0
    %731 = vmatprep.subr.mxu0 0.0
    %732 = vmatpush2.msra.mxu0 0.0
    %733 = vmatprep.subr.mxu0 0.0
    %734 = vmatpush2.msra.mxu0 0.0
    %735 = vmatprep.subr.mxu0 0.0
    %736 = vmatpush2.msra.mxu0 0.0
    %737 = vmatprep.subr.mxu0 0.0
    %738 = vmatpush2.msra.mxu0 0.0
    %739 = vmatprep.subr.mxu0 0.0
    %740 = vmatpush2.msra.mxu0 0.0
    %741 = vmatprep.subr.mxu0 0.0
    %742 = vmatpush2.msra.mxu0 0.0
    %743 = vmatprep.subr.mxu0 0.0
    %744 = vmatpush2.msra.mxu0 0.0
    %745 = vmatprep.subr.mxu0 0.0
    %746 = vmatpush2.msra.mxu0 0.0
    %747 = vmatprep.subr.mxu0 0.0
    %748 = vmatpush2.msra.mxu0 0.0
    %749 = vmatprep.mubr.f32.mxu0 0.0
    %750 = vmatmul.mubr.f32.gmra.mxu0 %v650
    %v751 = vpop.f32.mrf.mxu0
    %v752 = vadd.f32 %v586, %v751
    %v753 = vpop.f32.mrf.mxu0
    %754 = vmatprep.mubr.f32.mxu0 0.0
    %755 = vmatmul.mubr.f32.gmra.mxu0 %v653
    %v756 = vpop.f32.mrf.mxu0
    %v757 = vadd.f32 %v591, %v756
    %v758 = vpop.f32.mrf.mxu0
    %759 = vmatprep.mubr.f32.mxu0 0.0
    %760 = vmatmul.mubr.f32.gmra.mxu0 %v656
    %v761 = vpop.f32.mrf.mxu0
    %v762 = vadd.f32 %v596, %v761
    %v763 = vpop.f32.mrf.mxu0
    %764 = vmatprep.mubr.f32.mxu0 0.0
    %765 = vmatmul.mubr.f32.gmra.mxu0 %v659
    %v766 = vpop.f32.mrf.mxu0
    %v767 = vadd.f32 %v601, %v766
    %v768 = vpop.f32.mrf.mxu0
    %769 = vmatprep.mubr.f32.mxu0 0.0
    %770 = vmatmul.mubr.f32.gmra.mxu0 %v662
    %v771 = vpop.f32.mrf.mxu0
    %v772 = vadd.f32 %v606, %v771
    %v773 = vpop.f32.mrf.mxu0
    %774 = vmatprep.mubr.f32.mxu0 0.0
    %775 = vmatmul.mubr.f32.gmra.mxu0 %v665
    %v776 = vpop.f32.mrf.mxu0
    %v777 = vadd.f32 %v611, %v776
    %v778 = vpop.f32.mrf.mxu0
    %779 = vmatprep.mubr.f32.mxu0 0.0
    %780 = vmatmul.mubr.f32.gmra.mxu0 %v668
    %v781 = vpop.f32.mrf.mxu0
    %v782 = vadd.f32 %v616, %v781
    %v783 = vpop.f32.mrf.mxu0
    %784 = vmatprep.mubr.f32.mxu0 0.0
    %785 = vmatmul.mubr.f32.gmra.mxu0 %v670
    %v786 = vpop.f32.mrf.mxu0
    %v787 = vadd.f32 %v621, %v786
    %v788 = vpop.f32.mrf.mxu0
    %789 = vmatprep.mubr.f32.mxu0 0.0
    %790 = vmatmul.mubr.f32.gmra.mxu0 %v672
    %v791 = vpop.f32.mrf.mxu0
    %v792 = vadd.f32 %v626, %v791
    %v793 = vpop.f32.mrf.mxu0
    %794 = vmatprep.mubr.f32.mxu0 0.0
    %795 = vmatmul.mubr.f32.gmra.mxu0 %v674
    %v796 = vpop.f32.mrf.mxu0
    %v797 = vadd.f32 %v631, %v796
    %v798 = vpop.f32.mrf.mxu0
    %799 = vmatprep.mubr.f32.mxu0 0.0
    %800 = vmatmul.mubr.f32.gmra.mxu0 %v676
    %v801 = vpop.f32.mrf.mxu0
    %v802 = vadd.f32 %v636, %v801
    %v803 = vpop.f32.mrf.mxu0
    %804 = vmatprep.mubr.f32.mxu0 0.0
    %805 = vmatmul.mubr.f32.gmra.mxu0 %v678
    %v806 = vpop.f32.mrf.mxu0
    %v807 = vadd.f32 %v641, %v806
    %v808 = vpop.f32.mrf.mxu0
    %809 = vmatprep.mubr.f32.mxu0 0.0
    %810 = vmatmul.mubr.f32.gmra.mxu0 %v680
    %v811 = vpop.f32.mrf.mxu0
    %v812 = vadd.f32 %v646, %v811
    %v813 = vpop.f32.mrf.mxu0
    %814 = vdwg.mxu0
    %s815 = scalar_lea.vmem [#allocation2], 2
    %v816 = vld [vmem:[%s815] ss:$3 sm:$0xff]
    %s817 = scalar_lea.vmem [#allocation2], 26
    %v818 = vld [vmem:[%s817] ss:$3 sm:$0xff]
    %s819 = scalar_lea.vmem [#allocation2], 50
    %v820 = vld [vmem:[%s819] ss:$3 sm:$0xff]
    %s821 = scalar_lea.vmem [#allocation2], 74
    %v822 = vld [vmem:[%s821] ss:$3 sm:$0xff]
    %s823 = scalar_lea.vmem [#allocation2], 98
    %v824 = vld [vmem:[%s823] ss:$3 sm:$0xff]
    %s825 = scalar_lea.vmem [#allocation2], 122
    %v826 = vld [vmem:[%s825] ss:$3 sm:$0xff]
    %s827 = scalar_lea.vmem [#allocation2], 146
    %v828 = vld [vmem:[%s827] ss:$3 sm:$0xf]
    %s829 = scalar_lea.vmem [#allocation2], 162
    %v830 = vld [vmem:[%s829] ss:$3 sm:$0xff]
    %s831 = scalar_lea.vmem [#allocation2], 186
    %v832 = vld [vmem:[%s831] ss:$3 sm:$0xff]
    %s833 = scalar_lea.vmem [#allocation2], 210
    %v834 = vld [vmem:[%s833] ss:$3 sm:$0xff]
    %s835 = scalar_lea.vmem [#allocation2], 234
    %v836 = vld [vmem:[%s835] ss:$3 sm:$0xff]
    %s837 = scalar_lea.vmem [#allocation2], 258
    %v838 = vld [vmem:[%s837] ss:$3 sm:$0xff]
    %s839 = scalar_lea.vmem [#allocation2], 282
    %v840 = vld [vmem:[%s839] ss:$3 sm:$0xff]
    %s841 = scalar_lea.vmem [#allocation2], 306
    %v842 = vld [vmem:[%s841] ss:$3 sm:$0xf]
    %v850 = vrot.slane %v830, 4
    %v851 = vrot.slane %v832, 4
    %v852 = vsel %vm414, %v850, %v851
    %v853 = vrot.slane %v834, 4
    %v854 = vsel %vm414, %v851, %v853
    %v855 = vrot.slane %v836, 4
    %v856 = vsel %vm414, %v853, %v855
    %v857 = vrot.slane %v838, 4
    %v858 = vsel %vm414, %v855, %v857
    %v859 = vrot.slane %v840, 4
    %v860 = vsel %vm414, %v857, %v859
    %v861 = vrot.slane %v842, 4
    %v862 = vsel %vm414, %v859, %v861
    %v864 = vsel %vm414, %v828, %v850
    %v865 = vld [vmem:[%s1 + $0x4] sm:$0x3]
    %v867 = vsel %vm136, %v816, 0
    %v870 = vsel %vm136, %v818, 0
    %v873 = vsel %vm136, %v820, 0
    %v876 = vsel %vm136, %v822, 0
    %v879 = vsel %vm136, %v824, 0
    %v882 = vsel %vm136, %v826, 0
    %v885 = vsel %vm136, %v864, 0
    %v887 = vsel %vm136, %v852, 0
    %v889 = vsel %vm136, %v854, 0
    %v891 = vsel %vm136, %v856, 0
    %v893 = vsel %vm136, %v858, 0
    %v895 = vsel %vm136, %v860, 0
    %v897 = vsel %vm136, %v862, 0
    %v900 = vsel %vm515, %v865, 0
    %902 = vmatprep.subr.mxu0 0.0
    %903 = vmatpush1.msra.mxu0 0.0
    %904 = vmatprep.subr.mxu0 0.0
    %905 = vmatpush1.msra.mxu0 0.0
    %906 = vmatprep.subr.mxu0 0.0
    %907 = vmatpush1.msra.mxu0 0.0
    %908 = vmatprep.subr.mxu0 0.0
    %909 = vmatpush1.msra.mxu0 0.0
    %910 = vmatprep.subr.mxu0 0.0
    %911 = vmatpush1.msra.mxu0 0.0
    %912 = vmatprep.subr.mxu0 0.0
    %913 = vmatpush1.msra.mxu0 0.0
    %914 = vmatprep.subr.mxu0 0.0
    %915 = vmatpush1.msra.mxu0 0.0
    %916 = vmatprep.subr.mxu0 0.0
    %917 = vmatpush1.msra.mxu0 0.0
    %918 = vmatprep.subr.mxu0 0.0
    %919 = vmatpush1.msra.mxu0 0.0
    %920 = vmatprep.subr.mxu0 0.0
    %921 = vmatpush1.msra.mxu0 0.0
    %922 = vmatprep.subr.mxu0 0.0
    %923 = vmatpush1.msra.mxu0 0.0
    %924 = vmatprep.subr.mxu0 0.0
    %925 = vmatpush1.msra.mxu0 0.0
    %926 = vmatprep.subr.mxu0 0.0
    %927 = vmatpush1.msra.mxu0 0.0
    %928 = vmatprep.subr.mxu0 0.0
    %929 = vmatpush1.msra.mxu0 0.0
    %930 = vmatprep.subr.mxu0 0.0
    %931 = vmatpush1.msra.mxu0 0.0
    %932 = vmatprep.subr.mxu0 0.0
    %933 = vmatpush1.msra.mxu0 %v900
    %934 = vmatprep.subr.mxu0 0.0
    %935 = vmatpush2.msra.mxu0 0.0
    %936 = vmatprep.subr.mxu0 0.0
    %937 = vmatpush2.msra.mxu0 0.0
    %938 = vmatprep.subr.mxu0 0.0
    %939 = vmatpush2.msra.mxu0 0.0
    %940 = vmatprep.subr.mxu0 0.0
    %941 = vmatpush2.msra.mxu0 0.0
    %942 = vmatprep.subr.mxu0 0.0
    %943 = vmatpush2.msra.mxu0 0.0
    %944 = vmatprep.subr.mxu0 0.0
    %945 = vmatpush2.msra.mxu0 0.0
    %946 = vmatprep.subr.mxu0 0.0
    %947 = vmatpush2.msra.mxu0 0.0
    %948 = vmatprep.subr.mxu0 0.0
    %949 = vmatpush2.msra.mxu0 0.0
    %950 = vmatprep.subr.mxu0 0.0
    %951 = vmatpush2.msra.mxu0 0.0
    %952 = vmatprep.subr.mxu0 0.0
    %953 = vmatpush2.msra.mxu0 0.0
    %954 = vmatprep.subr.mxu0 0.0
    %955 = vmatpush2.msra.mxu0 0.0
    %956 = vmatprep.subr.mxu0 0.0
    %957 = vmatpush2.msra.mxu0 0.0
    %958 = vmatprep.subr.mxu0 0.0
    %959 = vmatpush2.msra.mxu0 0.0
    %960 = vmatprep.subr.mxu0 0.0
    %961 = vmatpush2.msra.mxu0 0.0
    %962 = vmatprep.subr.mxu0 0.0
    %963 = vmatpush2.msra.mxu0 0.0
    %964 = vmatprep.subr.mxu0 0.0
    %965 = vmatpush2.msra.mxu0 0.0
    %966 = vmatprep.mubr.f32.mxu0 0.0
    %967 = vmatmul.mubr.f32.gmra.mxu0 %v867
    %v968 = vpop.f32.mrf.mxu0
    %v969 = vadd.f32 0.0, %v968
    %v970 = vpop.f32.mrf.mxu0
    %971 = vmatprep.mubr.f32.mxu0 0.0
    %972 = vmatmul.mubr.f32.gmra.mxu0 %v870
    %v973 = vpop.f32.mrf.mxu0
    %v974 = vadd.f32 0.0, %v973
    %v975 = vpop.f32.mrf.mxu0
    %976 = vmatprep.mubr.f32.mxu0 0.0
    %977 = vmatmul.mubr.f32.gmra.mxu0 %v873
    %v978 = vpop.f32.mrf.mxu0
    %v979 = vadd.f32 0.0, %v978
    %v980 = vpop.f32.mrf.mxu0
    %981 = vmatprep.mubr.f32.mxu0 0.0
    %982 = vmatmul.mubr.f32.gmra.mxu0 %v876
    %v983 = vpop.f32.mrf.mxu0
    %v984 = vadd.f32 0.0, %v983
    %v985 = vpop.f32.mrf.mxu0
    %986 = vmatprep.mubr.f32.mxu0 0.0
    %987 = vmatmul.mubr.f32.gmra.mxu0 %v879
    %v988 = vpop.f32.mrf.mxu0
    %v989 = vadd.f32 0.0, %v988
    %v990 = vpop.f32.mrf.mxu0
    %991 = vmatprep.mubr.f32.mxu0 0.0
    %992 = vmatmul.mubr.f32.gmra.mxu0 %v882
    %v993 = vpop.f32.mrf.mxu0
    %v994 = vadd.f32 0.0, %v993
    %v995 = vpop.f32.mrf.mxu0
    %996 = vmatprep.mubr.f32.mxu0 0.0
    %997 = vmatmul.mubr.f32.gmra.mxu0 %v885
    %v998 = vpop.f32.mrf.mxu0
    %v999 = vadd.f32 0.0, %v998
    %v1000 = vpop.f32.mrf.mxu0
    %1001 = vmatprep.mubr.f32.mxu0 0.0
    %1002 = vmatmul.mubr.f32.gmra.mxu0 %v887
    %v1003 = vpop.f32.mrf.mxu0
    %v1004 = vadd.f32 0.0, %v1003
    %v1005 = vpop.f32.mrf.mxu0
    %1006 = vmatprep.mubr.f32.mxu0 0.0
    %1007 = vmatmul.mubr.f32.gmra.mxu0 %v889
    %v1008 = vpop.f32.mrf.mxu0
    %v1009 = vadd.f32 0.0, %v1008
    %v1010 = vpop.f32.mrf.mxu0
    %1011 = vmatprep.mubr.f32.mxu0 0.0
    %1012 = vmatmul.mubr.f32.gmra.mxu0 %v891
    %v1013 = vpop.f32.mrf.mxu0
    %v1014 = vadd.f32 0.0, %v1013
    %v1015 = vpop.f32.mrf.mxu0
    %1016 = vmatprep.mubr.f32.mxu0 0.0
    %1017 = vmatmul.mubr.f32.gmra.mxu0 %v893
    %v1018 = vpop.f32.mrf.mxu0
    %v1019 = vadd.f32 0.0, %v1018
    %v1020 = vpop.f32.mrf.mxu0
    %1021 = vmatprep.mubr.f32.mxu0 0.0
    %1022 = vmatmul.mubr.f32.gmra.mxu0 %v895
    %v1023 = vpop.f32.mrf.mxu0
    %v1024 = vadd.f32 0.0, %v1023
    %v1025 = vpop.f32.mrf.mxu0
    %1026 = vmatprep.mubr.f32.mxu0 0.0
    %1027 = vmatmul.mubr.f32.gmra.mxu0 %v897
    %v1028 = vpop.f32.mrf.mxu0
    %v1029 = vadd.f32 0.0, %v1028
    %v1030 = vpop.f32.mrf.mxu0
    %1031 = vdwg.mxu0
    %v1032 = vadd.f32 %v752, %v969
    %v1033 = vadd.f32 %v757, %v974
    %v1034 = vadd.f32 %v762, %v979
    %v1035 = vadd.f32 %v767, %v984
    %v1036 = vadd.f32 %v772, %v989
    %v1037 = vadd.f32 %v777, %v994
    %v1038 = vadd.f32 %v782, %v999
    %v1039 = vadd.f32 %v787, %v1004
    %v1040 = vadd.f32 %v792, %v1009
    %v1041 = vadd.f32 %v797, %v1014
    %v1042 = vadd.f32 %v802, %v1019
    %v1043 = vadd.f32 %v807, %v1024
    %v1044 = vadd.f32 %v812, %v1029
    %s1045 = scalar_lea.vmem [#allocation2], 3
    %v1046 = vld [vmem:[%s1045] ss:$3 sm:$0xff]
    %s1047 = scalar_lea.vmem [#allocation2], 27
    %v1048 = vld [vmem:[%s1047] ss:$3 sm:$0xff]
    %s1049 = scalar_lea.vmem [#allocation2], 51
    %v1050 = vld [vmem:[%s1049] ss:$3 sm:$0xff]
    %s1051 = scalar_lea.vmem [#allocation2], 75
    %v1052 = vld [vmem:[%s1051] ss:$3 sm:$0xff]
    %s1053 = scalar_lea.vmem [#allocation2], 99
    %v1054 = vld [vmem:[%s1053] ss:$3 sm:$0xff]
    %s1055 = scalar_lea.vmem [#allocation2], 123
    %v1056 = vld [vmem:[%s1055] ss:$3 sm:$0xff]
    %s1057 = scalar_lea.vmem [#allocation2], 147
    %v1058 = vld [vmem:[%s1057] ss:$3 sm:$0xf]
    %s1059 = scalar_lea.vmem [#allocation2], 163
    %v1060 = vld [vmem:[%s1059] ss:$3 sm:$0xff]
    %s1061 = scalar_lea.vmem [#allocation2], 187
    %v1062 = vld [vmem:[%s1061] ss:$3 sm:$0xff]
    %s1063 = scalar_lea.vmem [#allocation2], 211
    %v1064 = vld [vmem:[%s1063] ss:$3 sm:$0xff]
    %s1065 = scalar_lea.vmem [#allocation2], 235
    %v1066 = vld [vmem:[%s1065] ss:$3 sm:$0xff]
    %s1067 = scalar_lea.vmem [#allocation2], 259
    %v1068 = vld [vmem:[%s1067] ss:$3 sm:$0xff]
    %s1069 = scalar_lea.vmem [#allocation2], 283
    %v1070 = vld [vmem:[%s1069] ss:$3 sm:$0xff]
    %s1071 = scalar_lea.vmem [#allocation2], 307
    %v1072 = vld [vmem:[%s1071] ss:$3 sm:$0xf]
    %v1080 = vrot.slane %v1060, 4
    %v1081 = vrot.slane %v1062, 4
    %v1082 = vsel %vm414, %v1080, %v1081
    %v1083 = vrot.slane %v1064, 4
    %v1084 = vsel %vm414, %v1081, %v1083
    %v1085 = vrot.slane %v1066, 4
    %v1086 = vsel %vm414, %v1083, %v1085
    %v1087 = vrot.slane %v1068, 4
    %v1088 = vsel %vm414, %v1085, %v1087
    %v1089 = vrot.slane %v1070, 4
    %v1090 = vsel %vm414, %v1087, %v1089
    %v1091 = vrot.slane %v1072, 4
    %v1092 = vsel %vm414, %v1089, %v1091
    %v1094 = vsel %vm414, %v1058, %v1080
    %v1095 = vld [vmem:[%s1 + $0x6] sm:$0x3]
    %v1097 = vsel %vm136, %v1046, 0
    %v1100 = vsel %vm136, %v1048, 0
    %v1103 = vsel %vm136, %v1050, 0
    %v1106 = vsel %vm136, %v1052, 0
    %v1109 = vsel %vm136, %v1054, 0
    %v1112 = vsel %vm136, %v1056, 0
    %v1115 = vsel %vm136, %v1094, 0
    %v1117 = vsel %vm136, %v1082, 0
    %v1119 = vsel %vm136, %v1084, 0
    %v1121 = vsel %vm136, %v1086, 0
    %v1123 = vsel %vm136, %v1088, 0
    %v1125 = vsel %vm136, %v1090, 0
    %v1127 = vsel %vm136, %v1092, 0
    %v1130 = vsel %vm515, %v1095, 0
    %1132 = vmatprep.subr.mxu0 0.0
    %1133 = vmatpush1.msra.mxu0 0.0
    %1134 = vmatprep.subr.mxu0 0.0
    %1135 = vmatpush1.msra.mxu0 0.0
    %1136 = vmatprep.subr.mxu0 0.0
    %1137 = vmatpush1.msra.mxu0 0.0
    %1138 = vmatprep.subr.mxu0 0.0
    %1139 = vmatpush1.msra.mxu0 0.0
    %1140 = vmatprep.subr.mxu0 0.0
    %1141 = vmatpush1.msra.mxu0 0.0
    %1142 = vmatprep.subr.mxu0 0.0
    %1143 = vmatpush1.msra.mxu0 0.0
    %1144 = vmatprep.subr.mxu0 0.0
    %1145 = vmatpush1.msra.mxu0 0.0
    %1146 = vmatprep.subr.mxu0 0.0
    %1147 = vmatpush1.msra.mxu0 0.0
    %1148 = vmatprep.subr.mxu0 0.0
    %1149 = vmatpush1.msra.mxu0 0.0
    %1150 = vmatprep.subr.mxu0 0.0
    %1151 = vmatpush1.msra.mxu0 0.0
    %1152 = vmatprep.subr.mxu0 0.0
    %1153 = vmatpush1.msra.mxu0 0.0
    %1154 = vmatprep.subr.mxu0 0.0
    %1155 = vmatpush1.msra.mxu0 0.0
    %1156 = vmatprep.subr.mxu0 0.0
    %1157 = vmatpush1.msra.mxu0 0.0
    %1158 = vmatprep.subr.mxu0 0.0
    %1159 = vmatpush1.msra.mxu0 0.0
    %1160 = vmatprep.subr.mxu0 0.0
    %1161 = vmatpush1.msra.mxu0 0.0
    %1162 = vmatprep.subr.mxu0 0.0
    %1163 = vmatpush1.msra.mxu0 %v1130
    %1164 = vmatprep.subr.mxu0 0.0
    %1165 = vmatpush2.msra.mxu0 0.0
    %1166 = vmatprep.subr.mxu0 0.0
    %1167 = vmatpush2.msra.mxu0 0.0
    %1168 = vmatprep.subr.mxu0 0.0
    %1169 = vmatpush2.msra.mxu0 0.0
    %1170 = vmatprep.subr.mxu0 0.0
    %1171 = vmatpush2.msra.mxu0 0.0
    %1172 = vmatprep.subr.mxu0 0.0
    %1173 = vmatpush2.msra.mxu0 0.0
    %1174 = vmatprep.subr.mxu0 0.0
    %1175 = vmatpush2.msra.mxu0 0.0
    %1176 = vmatprep.subr.mxu0 0.0
    %1177 = vmatpush2.msra.mxu0 0.0
    %1178 = vmatprep.subr.mxu0 0.0
    %1179 = vmatpush2.msra.mxu0 0.0
    %1180 = vmatprep.subr.mxu0 0.0
    %1181 = vmatpush2.msra.mxu0 0.0
    %1182 = vmatprep.subr.mxu0 0.0
    %1183 = vmatpush2.msra.mxu0 0.0
    %1184 = vmatprep.subr.mxu0 0.0
    %1185 = vmatpush2.msra.mxu0 0.0
    %1186 = vmatprep.subr.mxu0 0.0
    %1187 = vmatpush2.msra.mxu0 0.0
    %1188 = vmatprep.subr.mxu0 0.0
    %1189 = vmatpush2.msra.mxu0 0.0
    %1190 = vmatprep.subr.mxu0 0.0
    %1191 = vmatpush2.msra.mxu0 0.0
    %1192 = vmatprep.subr.mxu0 0.0
    %1193 = vmatpush2.msra.mxu0 0.0
    %1194 = vmatprep.subr.mxu0 0.0
    %1195 = vmatpush2.msra.mxu0 0.0
    %1196 = vmatprep.mubr.f32.mxu0 0.0
    %1197 = vmatmul.mubr.f32.gmra.mxu0 %v1097
    %v1198 = vpop.f32.mrf.mxu0
    %v1199 = vadd.f32 0.0, %v1198
    %v1200 = vpop.f32.mrf.mxu0
    %1201 = vmatprep.mubr.f32.mxu0 0.0
    %1202 = vmatmul.mubr.f32.gmra.mxu0 %v1100
    %v1203 = vpop.f32.mrf.mxu0
    %v1204 = vadd.f32 0.0, %v1203
    %v1205 = vpop.f32.mrf.mxu0
    %1206 = vmatprep.mubr.f32.mxu0 0.0
    %1207 = vmatmul.mubr.f32.gmra.mxu0 %v1103
    %v1208 = vpop.f32.mrf.mxu0
    %v1209 = vadd.f32 0.0, %v1208
    %v1210 = vpop.f32.mrf.mxu0
    %1211 = vmatprep.mubr.f32.mxu0 0.0
    %1212 = vmatmul.mubr.f32.gmra.mxu0 %v1106
    %v1213 = vpop.f32.mrf.mxu0
    %v1214 = vadd.f32 0.0, %v1213
    %v1215 = vpop.f32.mrf.mxu0
    %1216 = vmatprep.mubr.f32.mxu0 0.0
    %1217 = vmatmul.mubr.f32.gmra.mxu0 %v1109
    %v1218 = vpop.f32.mrf.mxu0
    %v1219 = vadd.f32 0.0, %v1218
    %v1220 = vpop.f32.mrf.mxu0
    %1221 = vmatprep.mubr.f32.mxu0 0.0
    %1222 = vmatmul.mubr.f32.gmra.mxu0 %v1112
    %v1223 = vpop.f32.mrf.mxu0
    %v1224 = vadd.f32 0.0, %v1223
    %v1225 = vpop.f32.mrf.mxu0
    %1226 = vmatprep.mubr.f32.mxu0 0.0
    %1227 = vmatmul.mubr.f32.gmra.mxu0 %v1115
    %v1228 = vpop.f32.mrf.mxu0
    %v1229 = vadd.f32 0.0, %v1228
    %v1230 = vpop.f32.mrf.mxu0
    %1231 = vmatprep.mubr.f32.mxu0 0.0
    %1232 = vmatmul.mubr.f32.gmra.mxu0 %v1117
    %v1233 = vpop.f32.mrf.mxu0
    %v1234 = vadd.f32 0.0, %v1233
    %v1235 = vpop.f32.mrf.mxu0
    %1236 = vmatprep.mubr.f32.mxu0 0.0
    %1237 = vmatmul.mubr.f32.gmra.mxu0 %v1119
    %v1238 = vpop.f32.mrf.mxu0
    %v1239 = vadd.f32 0.0, %v1238
    %v1240 = vpop.f32.mrf.mxu0
    %1241 = vmatprep.mubr.f32.mxu0 0.0
    %1242 = vmatmul.mubr.f32.gmra.mxu0 %v1121
    %v1243 = vpop.f32.mrf.mxu0
    %v1244 = vadd.f32 0.0, %v1243
    %v1245 = vpop.f32.mrf.mxu0
    %1246 = vmatprep.mubr.f32.mxu0 0.0
    %1247 = vmatmul.mubr.f32.gmra.mxu0 %v1123
    %v1248 = vpop.f32.mrf.mxu0
    %v1249 = vadd.f32 0.0, %v1248
    %v1250 = vpop.f32.mrf.mxu0
    %1251 = vmatprep.mubr.f32.mxu0 0.0
    %1252 = vmatmul.mubr.f32.gmra.mxu0 %v1125
    %v1253 = vpop.f32.mrf.mxu0
    %v1254 = vadd.f32 0.0, %v1253
    %v1255 = vpop.f32.mrf.mxu0
    %1256 = vmatprep.mubr.f32.mxu0 0.0
    %1257 = vmatmul.mubr.f32.gmra.mxu0 %v1127
    %v1258 = vpop.f32.mrf.mxu0
    %v1259 = vadd.f32 0.0, %v1258
    %v1260 = vpop.f32.mrf.mxu0
    %1261 = vdwg.mxu0
    %v1262 = vadd.f32 %v1032, %v1199
    %v1263 = vadd.f32 %v1033, %v1204
    %v1264 = vadd.f32 %v1034, %v1209
    %v1265 = vadd.f32 %v1035, %v1214
    %v1266 = vadd.f32 %v1036, %v1219
    %v1267 = vadd.f32 %v1037, %v1224
    %v1268 = vadd.f32 %v1038, %v1229
    %v1269 = vadd.f32 %v1039, %v1234
    %v1270 = vadd.f32 %v1040, %v1239
    %v1271 = vadd.f32 %v1041, %v1244
    %v1272 = vadd.f32 %v1042, %v1249
    %v1273 = vadd.f32 %v1043, %v1254
    %v1274 = vadd.f32 %v1044, %v1259
    %s1275 = scalar_lea.vmem [#allocation2], 4
    %v1276 = vld [vmem:[%s1275] ss:$3 sm:$0xff]
    %s1277 = scalar_lea.vmem [#allocation2], 28
    %v1278 = vld [vmem:[%s1277] ss:$3 sm:$0xff]
    %s1279 = scalar_lea.vmem [#allocation2], 52
    %v1280 = vld [vmem:[%s1279] ss:$3 sm:$0xff]
    %s1281 = scalar_lea.vmem [#allocation2], 76
    %v1282 = vld [vmem:[%s1281] ss:$3 sm:$0xff]
    %s1283 = scalar_lea.vmem [#allocation2], 100
    %v1284 = vld [vmem:[%s1283] ss:$3 sm:$0xff]
    %s1285 = scalar_lea.vmem [#allocation2], 124
    %v1286 = vld [vmem:[%s1285] ss:$3 sm:$0xff]
    %s1287 = scalar_lea.vmem [#allocation2], 148
    %v1288 = vld [vmem:[%s1287] ss:$3 sm:$0xf]
    %s1289 = scalar_lea.vmem [#allocation2], 164
    %v1290 = vld [vmem:[%s1289] ss:$3 sm:$0xff]
    %s1291 = scalar_lea.vmem [#allocation2], 188
    %v1292 = vld [vmem:[%s1291] ss:$3 sm:$0xff]
    %s1293 = scalar_lea.vmem [#allocation2], 212
    %v1294 = vld [vmem:[%s1293] ss:$3 sm:$0xff]
    %s1295 = scalar_lea.vmem [#allocation2], 236
    %v1296 = vld [vmem:[%s1295] ss:$3 sm:$0xff]
    %s1297 = scalar_lea.vmem [#allocation2], 260
    %v1298 = vld [vmem:[%s1297] ss:$3 sm:$0xff]
    %s1299 = scalar_lea.vmem [#allocation2], 284
    %v1300 = vld [vmem:[%s1299] ss:$3 sm:$0xff]
    %s1301 = scalar_lea.vmem [#allocation2], 308
    %v1302 = vld [vmem:[%s1301] ss:$3 sm:$0xf]
    %v1310 = vrot.slane %v1290, 4
    %v1311 = vrot.slane %v1292, 4
    %v1312 = vsel %vm414, %v1310, %v1311
    %v1313 = vrot.slane %v1294, 4
    %v1314 = vsel %vm414, %v1311, %v1313
    %v1315 = vrot.slane %v1296, 4
    %v1316 = vsel %vm414, %v1313, %v1315
    %v1317 = vrot.slane %v1298, 4
    %v1318 = vsel %vm414, %v1315, %v1317
    %v1319 = vrot.slane %v1300, 4
    %v1320 = vsel %vm414, %v1317, %v1319
    %v1321 = vrot.slane %v1302, 4
    %v1322 = vsel %vm414, %v1319, %v1321
    %v1324 = vsel %vm414, %v1288, %v1310
    %v1325 = vld [vmem:[%s1 + $0x8] sm:$0x3]
    %v1327 = vsel %vm136, %v1276, 0
    %v1330 = vsel %vm136, %v1278, 0
    %v1333 = vsel %vm136, %v1280, 0
    %v1336 = vsel %vm136, %v1282, 0
    %v1339 = vsel %vm136, %v1284, 0
    %v1342 = vsel %vm136, %v1286, 0
    %v1345 = vsel %vm136, %v1324, 0
    %v1347 = vsel %vm136, %v1312, 0
    %v1349 = vsel %vm136, %v1314, 0
    %v1351 = vsel %vm136, %v1316, 0
    %v1353 = vsel %vm136, %v1318, 0
    %v1355 = vsel %vm136, %v1320, 0
    %v1357 = vsel %vm136, %v1322, 0
    %v1360 = vsel %vm515, %v1325, 0
    %1362 = vmatprep.subr.mxu0 0.0
    %1363 = vmatpush1.msra.mxu0 0.0
    %1364 = vmatprep.subr.mxu0 0.0
    %1365 = vmatpush1.msra.mxu0 0.0
    %1366 = vmatprep.subr.mxu0 0.0
    %1367 = vmatpush1.msra.mxu0 0.0
    %1368 = vmatprep.subr.mxu0 0.0
    %1369 = vmatpush1.msra.mxu0 0.0
    %1370 = vmatprep.subr.mxu0 0.0
    %1371 = vmatpush1.msra.mxu0 0.0
    %1372 = vmatprep.subr.mxu0 0.0
    %1373 = vmatpush1.msra.mxu0 0.0
    %1374 = vmatprep.subr.mxu0 0.0
    %1375 = vmatpush1.msra.mxu0 0.0
    %1376 = vmatprep.subr.mxu0 0.0
    %1377 = vmatpush1.msra.mxu0 0.0
    %1378 = vmatprep.subr.mxu0 0.0
    %1379 = vmatpush1.msra.mxu0 0.0
    %1380 = vmatprep.subr.mxu0 0.0
    %1381 = vmatpush1.msra.mxu0 0.0
    %1382 = vmatprep.subr.mxu0 0.0
    %1383 = vmatpush1.msra.mxu0 0.0
    %1384 = vmatprep.subr.mxu0 0.0
    %1385 = vmatpush1.msra.mxu0 0.0
    %1386 = vmatprep.subr.mxu0 0.0
    %1387 = vmatpush1.msra.mxu0 0.0
    %1388 = vmatprep.subr.mxu0 0.0
    %1389 = vmatpush1.msra.mxu0 0.0
    %1390 = vmatprep.subr.mxu0 0.0
    %1391 = vmatpush1.msra.mxu0 0.0
    %1392 = vmatprep.subr.mxu0 0.0
    %1393 = vmatpush1.msra.mxu0 %v1360
    %1394 = vmatprep.subr.mxu0 0.0
    %1395 = vmatpush2.msra.mxu0 0.0
    %1396 = vmatprep.subr.mxu0 0.0
    %1397 = vmatpush2.msra.mxu0 0.0
    %1398 = vmatprep.subr.mxu0 0.0
    %1399 = vmatpush2.msra.mxu0 0.0
    %1400 = vmatprep.subr.mxu0 0.0
    %1401 = vmatpush2.msra.mxu0 0.0
    %1402 = vmatprep.subr.mxu0 0.0
    %1403 = vmatpush2.msra.mxu0 0.0
    %1404 = vmatprep.subr.mxu0 0.0
    %1405 = vmatpush2.msra.mxu0 0.0
    %1406 = vmatprep.subr.mxu0 0.0
    %1407 = vmatpush2.msra.mxu0 0.0
    %1408 = vmatprep.subr.mxu0 0.0
    %1409 = vmatpush2.msra.mxu0 0.0
    %1410 = vmatprep.subr.mxu0 0.0
    %1411 = vmatpush2.msra.mxu0 0.0
    %1412 = vmatprep.subr.mxu0 0.0
    %1413 = vmatpush2.msra.mxu0 0.0
    %1414 = vmatprep.subr.mxu0 0.0
    %1415 = vmatpush2.msra.mxu0 0.0
    %1416 = vmatprep.subr.mxu0 0.0
    %1417 = vmatpush2.msra.mxu0 0.0
    %1418 = vmatprep.subr.mxu0 0.0
    %1419 = vmatpush2.msra.mxu0 0.0
    %1420 = vmatprep.subr.mxu0 0.0
    %1421 = vmatpush2.msra.mxu0 0.0
    %1422 = vmatprep.subr.mxu0 0.0
    %1423 = vmatpush2.msra.mxu0 0.0
    %1424 = vmatprep.subr.mxu0 0.0
    %1425 = vmatpush2.msra.mxu0 0.0
    %1426 = vmatprep.mubr.f32.mxu0 0.0
    %1427 = vmatmul.mubr.f32.gmra.mxu0 %v1327
    %v1428 = vpop.f32.mrf.mxu0
    %v1429 = vadd.f32 0.0, %v1428
    %v1430 = vpop.f32.mrf.mxu0
    %1431 = vmatprep.mubr.f32.mxu0 0.0
    %1432 = vmatmul.mubr.f32.gmra.mxu0 %v1330
    %v1433 = vpop.f32.mrf.mxu0
    %v1434 = vadd.f32 0.0, %v1433
    %v1435 = vpop.f32.mrf.mxu0
    %1436 = vmatprep.mubr.f32.mxu0 0.0
    %1437 = vmatmul.mubr.f32.gmra.mxu0 %v1333
    %v1438 = vpop.f32.mrf.mxu0
    %v1439 = vadd.f32 0.0, %v1438
    %v1440 = vpop.f32.mrf.mxu0
    %1441 = vmatprep.mubr.f32.mxu0 0.0
    %1442 = vmatmul.mubr.f32.gmra.mxu0 %v1336
    %v1443 = vpop.f32.mrf.mxu0
    %v1444 = vadd.f32 0.0, %v1443
    %v1445 = vpop.f32.mrf.mxu0
    %1446 = vmatprep.mubr.f32.mxu0 0.0
    %1447 = vmatmul.mubr.f32.gmra.mxu0 %v1339
    %v1448 = vpop.f32.mrf.mxu0
    %v1449 = vadd.f32 0.0, %v1448
    %v1450 = vpop.f32.mrf.mxu0
    %1451 = vmatprep.mubr.f32.mxu0 0.0
    %1452 = vmatmul.mubr.f32.gmra.mxu0 %v1342
    %v1453 = vpop.f32.mrf.mxu0
    %v1454 = vadd.f32 0.0, %v1453
    %v1455 = vpop.f32.mrf.mxu0
    %1456 = vmatprep.mubr.f32.mxu0 0.0
    %1457 = vmatmul.mubr.f32.gmra.mxu0 %v1345
    %v1458 = vpop.f32.mrf.mxu0
    %v1459 = vadd.f32 0.0, %v1458
    %v1460 = vpop.f32.mrf.mxu0
    %1461 = vmatprep.mubr.f32.mxu0 0.0
    %1462 = vmatmul.mubr.f32.gmra.mxu0 %v1347
    %v1463 = vpop.f32.mrf.mxu0
    %v1464 = vadd.f32 0.0, %v1463
    %v1465 = vpop.f32.mrf.mxu0
    %1466 = vmatprep.mubr.f32.mxu0 0.0
    %1467 = vmatmul.mubr.f32.gmra.mxu0 %v1349
    %v1468 = vpop.f32.mrf.mxu0
    %v1469 = vadd.f32 0.0, %v1468
    %v1470 = vpop.f32.mrf.mxu0
    %1471 = vmatprep.mubr.f32.mxu0 0.0
    %1472 = vmatmul.mubr.f32.gmra.mxu0 %v1351
    %v1473 = vpop.f32.mrf.mxu0
    %v1474 = vadd.f32 0.0, %v1473
    %v1475 = vpop.f32.mrf.mxu0
    %1476 = vmatprep.mubr.f32.mxu0 0.0
    %1477 = vmatmul.mubr.f32.gmra.mxu0 %v1353
    %v1478 = vpop.f32.mrf.mxu0
    %v1479 = vadd.f32 0.0, %v1478
    %v1480 = vpop.f32.mrf.mxu0
    %1481 = vmatprep.mubr.f32.mxu0 0.0
    %1482 = vmatmul.mubr.f32.gmra.mxu0 %v1355
    %v1483 = vpop.f32.mrf.mxu0
    %v1484 = vadd.f32 0.0, %v1483
    %v1485 = vpop.f32.mrf.mxu0
    %1486 = vmatprep.mubr.f32.mxu0 0.0
    %1487 = vmatmul.mubr.f32.gmra.mxu0 %v1357
    %v1488 = vpop.f32.mrf.mxu0
    %v1489 = vadd.f32 0.0, %v1488
    %v1490 = vpop.f32.mrf.mxu0
    %1491 = vdwg.mxu0
    %v1492 = vadd.f32 %v1262, %v1429
    %v1493 = vadd.f32 %v1263, %v1434
    %v1494 = vadd.f32 %v1264, %v1439
    %v1495 = vadd.f32 %v1265, %v1444
    %v1496 = vadd.f32 %v1266, %v1449
    %v1497 = vadd.f32 %v1267, %v1454
    %v1498 = vadd.f32 %v1268, %v1459
    %v1499 = vadd.f32 %v1269, %v1464
    %v1500 = vadd.f32 %v1270, %v1469
    %v1501 = vadd.f32 %v1271, %v1474
    %v1502 = vadd.f32 %v1272, %v1479
    %v1503 = vadd.f32 %v1273, %v1484
    %v1504 = vadd.f32 %v1274, %v1489
    %s1505 = scalar_lea.vmem [#allocation2], 5
    %v1506 = vld [vmem:[%s1505] ss:$3 sm:$0xff]
    %s1507 = scalar_lea.vmem [#allocation2], 29
    %v1508 = vld [vmem:[%s1507] ss:$3 sm:$0xff]
    %s1509 = scalar_lea.vmem [#allocation2], 53
    %v1510 = vld [vmem:[%s1509] ss:$3 sm:$0xff]
    %s1511 = scalar_lea.vmem [#allocation2], 77
    %v1512 = vld [vmem:[%s1511] ss:$3 sm:$0xff]
    %s1513 = scalar_lea.vmem [#allocation2], 101
    %v1514 = vld [vmem:[%s1513] ss:$3 sm:$0xff]
    %s1515 = scalar_lea.vmem [#allocation2], 125
    %v1516 = vld [vmem:[%s1515] ss:$3 sm:$0xff]
    %s1517 = scalar_lea.vmem [#allocation2], 149
    %v1518 = vld [vmem:[%s1517] ss:$3 sm:$0xf]
    %s1519 = scalar_lea.vmem [#allocation2], 165
    %v1520 = vld [vmem:[%s1519] ss:$3 sm:$0xff]
    %s1521 = scalar_lea.vmem [#allocation2], 189
    %v1522 = vld [vmem:[%s1521] ss:$3 sm:$0xff]
    %s1523 = scalar_lea.vmem [#allocation2], 213
    %v1524 = vld [vmem:[%s1523] ss:$3 sm:$0xff]
    %s1525 = scalar_lea.vmem [#allocation2], 237
    %v1526 = vld [vmem:[%s1525] ss:$3 sm:$0xff]
    %s1527 = scalar_lea.vmem [#allocation2], 261
    %v1528 = vld [vmem:[%s1527] ss:$3 sm:$0xff]
    %s1529 = scalar_lea.vmem [#allocation2], 285
    %v1530 = vld [vmem:[%s1529] ss:$3 sm:$0xff]
    %s1531 = scalar_lea.vmem [#allocation2], 309
    %v1532 = vld [vmem:[%s1531] ss:$3 sm:$0xf]
    %v1540 = vrot.slane %v1520, 4
    %v1541 = vrot.slane %v1522, 4
    %v1542 = vsel %vm414, %v1540, %v1541
    %v1543 = vrot.slane %v1524, 4
    %v1544 = vsel %vm414, %v1541, %v1543
    %v1545 = vrot.slane %v1526, 4
    %v1546 = vsel %vm414, %v1543, %v1545
    %v1547 = vrot.slane %v1528, 4
    %v1548 = vsel %vm414, %v1545, %v1547
    %v1549 = vrot.slane %v1530, 4
    %v1550 = vsel %vm414, %v1547, %v1549
    %v1551 = vrot.slane %v1532, 4
    %v1552 = vsel %vm414, %v1549, %v1551
    %v1554 = vsel %vm414, %v1518, %v1540
    %v1555 = vld [vmem:[%s1 + $0xa] sm:$0x3]
    %v1557 = vsel %vm136, %v1506, 0
    %v1560 = vsel %vm136, %v1508, 0
    %v1563 = vsel %vm136, %v1510, 0
    %v1566 = vsel %vm136, %v1512, 0
    %v1569 = vsel %vm136, %v1514, 0
    %v1572 = vsel %vm136, %v1516, 0
    %v1575 = vsel %vm136, %v1554, 0
    %v1577 = vsel %vm136, %v1542, 0
    %v1579 = vsel %vm136, %v1544, 0
    %v1581 = vsel %vm136, %v1546, 0
    %v1583 = vsel %vm136, %v1548, 0
    %v1585 = vsel %vm136, %v1550, 0
    %v1587 = vsel %vm136, %v1552, 0
    %v1590 = vsel %vm515, %v1555, 0
    %1592 = vmatprep.subr.mxu0 0.0
    %1593 = vmatpush1.msra.mxu0 0.0
    %1594 = vmatprep.subr.mxu0 0.0
    %1595 = vmatpush1.msra.mxu0 0.0
    %1596 = vmatprep.subr.mxu0 0.0
    %1597 = vmatpush1.msra.mxu0 0.0
    %1598 = vmatprep.subr.mxu0 0.0
    %1599 = vmatpush1.msra.mxu0 0.0
    %1600 = vmatprep.subr.mxu0 0.0
    %1601 = vmatpush1.msra.mxu0 0.0
    %1602 = vmatprep.subr.mxu0 0.0
    %1603 = vmatpush1.msra.mxu0 0.0
    %1604 = vmatprep.subr.mxu0 0.0
    %1605 = vmatpush1.msra.mxu0 0.0
    %1606 = vmatprep.subr.mxu0 0.0
    %1607 = vmatpush1.msra.mxu0 0.0
    %1608 = vmatprep.subr.mxu0 0.0
    %1609 = vmatpush1.msra.mxu0 0.0
    %1610 = vmatprep.subr.mxu0 0.0
    %1611 = vmatpush1.msra.mxu0 0.0
    %1612 = vmatprep.subr.mxu0 0.0
    %1613 = vmatpush1.msra.mxu0 0.0
    %1614 = vmatprep.subr.mxu0 0.0
    %1615 = vmatpush1.msra.mxu0 0.0
    %1616 = vmatprep.subr.mxu0 0.0
    %1617 = vmatpush1.msra.mxu0 0.0
    %1618 = vmatprep.subr.mxu0 0.0
    %1619 = vmatpush1.msra.mxu0 0.0
    %1620 = vmatprep.subr.mxu0 0.0
    %1621 = vmatpush1.msra.mxu0 0.0
    %1622 = vmatprep.subr.mxu0 0.0
    %1623 = vmatpush1.msra.mxu0 %v1590
    %1624 = vmatprep.subr.mxu0 0.0
    %1625 = vmatpush2.msra.mxu0 0.0
    %1626 = vmatprep.subr.mxu0 0.0
    %1627 = vmatpush2.msra.mxu0 0.0
    %1628 = vmatprep.subr.mxu0 0.0
    %1629 = vmatpush2.msra.mxu0 0.0
    %1630 = vmatprep.subr.mxu0 0.0
    %1631 = vmatpush2.msra.mxu0 0.0
    %1632 = vmatprep.subr.mxu0 0.0
    %1633 = vmatpush2.msra.mxu0 0.0
    %1634 = vmatprep.subr.mxu0 0.0
    %1635 = vmatpush2.msra.mxu0 0.0
    %1636 = vmatprep.subr.mxu0 0.0
    %1637 = vmatpush2.msra.mxu0 0.0
    %1638 = vmatprep.subr.mxu0 0.0
    %1639 = vmatpush2.msra.mxu0 0.0
    %1640 = vmatprep.subr.mxu0 0.0
    %1641 = vmatpush2.msra.mxu0 0.0
    %1642 = vmatprep.subr.mxu0 0.0
    %1643 = vmatpush2.msra.mxu0 0.0
    %1644 = vmatprep.subr.mxu0 0.0
    %1645 = vmatpush2.msra.mxu0 0.0
    %1646 = vmatprep.subr.mxu0 0.0
    %1647 = vmatpush2.msra.mxu0 0.0
    %1648 = vmatprep.subr.mxu0 0.0
    %1649 = vmatpush2.msra.mxu0 0.0
    %1650 = vmatprep.subr.mxu0 0.0
    %1651 = vmatpush2.msra.mxu0 0.0
    %1652 = vmatprep.subr.mxu0 0.0
    %1653 = vmatpush2.msra.mxu0 0.0
    %1654 = vmatprep.subr.mxu0 0.0
    %1655 = vmatpush2.msra.mxu0 0.0
    %1656 = vmatprep.mubr.f32.mxu0 0.0
    %1657 = vmatmul.mubr.f32.gmra.mxu0 %v1557
    %v1658 = vpop.f32.mrf.mxu0
    %v1659 = vadd.f32 0.0, %v1658
    %v1660 = vpop.f32.mrf.mxu0
    %1661 = vmatprep.mubr.f32.mxu0 0.0
    %1662 = vmatmul.mubr.f32.gmra.mxu0 %v1560
    %v1663 = vpop.f32.mrf.mxu0
    %v1664 = vadd.f32 0.0, %v1663
    %v1665 = vpop.f32.mrf.mxu0
    %1666 = vmatprep.mubr.f32.mxu0 0.0
    %1667 = vmatmul.mubr.f32.gmra.mxu0 %v1563
    %v1668 = vpop.f32.mrf.mxu0
    %v1669 = vadd.f32 0.0, %v1668
    %v1670 = vpop.f32.mrf.mxu0
    %1671 = vmatprep.mubr.f32.mxu0 0.0
    %1672 = vmatmul.mubr.f32.gmra.mxu0 %v1566
    %v1673 = vpop.f32.mrf.mxu0
    %v1674 = vadd.f32 0.0, %v1673
    %v1675 = vpop.f32.mrf.mxu0
    %1676 = vmatprep.mubr.f32.mxu0 0.0
    %1677 = vmatmul.mubr.f32.gmra.mxu0 %v1569
    %v1678 = vpop.f32.mrf.mxu0
    %v1679 = vadd.f32 0.0, %v1678
    %v1680 = vpop.f32.mrf.mxu0
    %1681 = vmatprep.mubr.f32.mxu0 0.0
    %1682 = vmatmul.mubr.f32.gmra.mxu0 %v1572
    %v1683 = vpop.f32.mrf.mxu0
    %v1684 = vadd.f32 0.0, %v1683
    %v1685 = vpop.f32.mrf.mxu0
    %1686 = vmatprep.mubr.f32.mxu0 0.0
    %1687 = vmatmul.mubr.f32.gmra.mxu0 %v1575
    %v1688 = vpop.f32.mrf.mxu0
    %v1689 = vadd.f32 0.0, %v1688
    %v1690 = vpop.f32.mrf.mxu0
    %1691 = vmatprep.mubr.f32.mxu0 0.0
    %1692 = vmatmul.mubr.f32.gmra.mxu0 %v1577
    %v1693 = vpop.f32.mrf.mxu0
    %v1694 = vadd.f32 0.0, %v1693
    %v1695 = vpop.f32.mrf.mxu0
    %1696 = vmatprep.mubr.f32.mxu0 0.0
    %1697 = vmatmul.mubr.f32.gmra.mxu0 %v1579
    %v1698 = vpop.f32.mrf.mxu0
    %v1699 = vadd.f32 0.0, %v1698
    %v1700 = vpop.f32.mrf.mxu0
    %1701 = vmatprep.mubr.f32.mxu0 0.0
    %1702 = vmatmul.mubr.f32.gmra.mxu0 %v1581
    %v1703 = vpop.f32.mrf.mxu0
    %v1704 = vadd.f32 0.0, %v1703
    %v1705 = vpop.f32.mrf.mxu0
    %1706 = vmatprep.mubr.f32.mxu0 0.0
    %1707 = vmatmul.mubr.f32.gmra.mxu0 %v1583
    %v1708 = vpop.f32.mrf.mxu0
    %v1709 = vadd.f32 0.0, %v1708
    %v1710 = vpop.f32.mrf.mxu0
    %1711 = vmatprep.mubr.f32.mxu0 0.0
    %1712 = vmatmul.mubr.f32.gmra.mxu0 %v1585
    %v1713 = vpop.f32.mrf.mxu0
    %v1714 = vadd.f32 0.0, %v1713
    %v1715 = vpop.f32.mrf.mxu0
    %1716 = vmatprep.mubr.f32.mxu0 0.0
    %1717 = vmatmul.mubr.f32.gmra.mxu0 %v1587
    %v1718 = vpop.f32.mrf.mxu0
    %v1719 = vadd.f32 0.0, %v1718
    %v1720 = vpop.f32.mrf.mxu0
    %1721 = vdwg.mxu0
    %v1722 = vadd.f32 %v1492, %v1659
    %v1723 = vadd.f32 %v1493, %v1664
    %v1724 = vadd.f32 %v1494, %v1669
    %v1725 = vadd.f32 %v1495, %v1674
    %v1726 = vadd.f32 %v1496, %v1679
    %v1727 = vadd.f32 %v1497, %v1684
    %v1728 = vadd.f32 %v1498, %v1689
    %v1729 = vadd.f32 %v1499, %v1694
    %v1730 = vadd.f32 %v1500, %v1699
    %v1731 = vadd.f32 %v1501, %v1704
    %v1732 = vadd.f32 %v1502, %v1709
    %v1733 = vadd.f32 %v1503, %v1714
    %v1734 = vadd.f32 %v1504, %v1719
    %s1735 = scalar_lea.vmem [#allocation2], 6
    %v1736 = vld [vmem:[%s1735] ss:$3 sm:$0xff]
    %s1737 = scalar_lea.vmem [#allocation2], 30
    %v1738 = vld [vmem:[%s1737] ss:$3 sm:$0xff]
    %s1739 = scalar_lea.vmem [#allocation2], 54
    %v1740 = vld [vmem:[%s1739] ss:$3 sm:$0xff]
    %s1741 = scalar_lea.vmem [#allocation2], 78
    %v1742 = vld [vmem:[%s1741] ss:$3 sm:$0xff]
    %s1743 = scalar_lea.vmem [#allocation2], 102
    %v1744 = vld [vmem:[%s1743] ss:$3 sm:$0xff]
    %s1745 = scalar_lea.vmem [#allocation2], 126
    %v1746 = vld [vmem:[%s1745] ss:$3 sm:$0xff]
    %s1747 = scalar_lea.vmem [#allocation2], 150
    %v1748 = vld [vmem:[%s1747] ss:$3 sm:$0xf]
    %s1749 = scalar_lea.vmem [#allocation2], 166
    %v1750 = vld [vmem:[%s1749] ss:$3 sm:$0xff]
    %s1751 = scalar_lea.vmem [#allocation2], 190
    %v1752 = vld [vmem:[%s1751] ss:$3 sm:$0xff]
    %s1753 = scalar_lea.vmem [#allocation2], 214
    %v1754 = vld [vmem:[%s1753] ss:$3 sm:$0xff]
    %s1755 = scalar_lea.vmem [#allocation2], 238
    %v1756 = vld [vmem:[%s1755] ss:$3 sm:$0xff]
    %s1757 = scalar_lea.vmem [#allocation2], 262
    %v1758 = vld [vmem:[%s1757] ss:$3 sm:$0xff]
    %s1759 = scalar_lea.vmem [#allocation2], 286
    %v1760 = vld [vmem:[%s1759] ss:$3 sm:$0xff]
    %s1761 = scalar_lea.vmem [#allocation2], 310
    %v1762 = vld [vmem:[%s1761] ss:$3 sm:$0xf]
    %v1770 = vrot.slane %v1750, 4
    %v1771 = vrot.slane %v1752, 4
    %v1772 = vsel %vm414, %v1770, %v1771
    %v1773 = vrot.slane %v1754, 4
    %v1774 = vsel %vm414, %v1771, %v1773
    %v1775 = vrot.slane %v1756, 4
    %v1776 = vsel %vm414, %v1773, %v1775
    %v1777 = vrot.slane %v1758, 4
    %v1778 = vsel %vm414, %v1775, %v1777
    %v1779 = vrot.slane %v1760, 4
    %v1780 = vsel %vm414, %v1777, %v1779
    %v1781 = vrot.slane %v1762, 4
    %v1782 = vsel %vm414, %v1779, %v1781
    %v1784 = vsel %vm414, %v1748, %v1770
    %v1785 = vld [vmem:[%s1 + $0xc] sm:$0x3]
    %v1787 = vsel %vm136, %v1736, 0
    %v1790 = vsel %vm136, %v1738, 0
    %v1793 = vsel %vm136, %v1740, 0
    %v1796 = vsel %vm136, %v1742, 0
    %v1799 = vsel %vm136, %v1744, 0
    %v1802 = vsel %vm136, %v1746, 0
    %v1805 = vsel %vm136, %v1784, 0
    %v1807 = vsel %vm136, %v1772, 0
    %v1809 = vsel %vm136, %v1774, 0
    %v1811 = vsel %vm136, %v1776, 0
    %v1813 = vsel %vm136, %v1778, 0
    %v1815 = vsel %vm136, %v1780, 0
    %v1817 = vsel %vm136, %v1782, 0
    %v1820 = vsel %vm515, %v1785, 0
    %1822 = vmatprep.subr.mxu0 0.0
    %1823 = vmatpush1.msra.mxu0 0.0
    %1824 = vmatprep.subr.mxu0 0.0
    %1825 = vmatpush1.msra.mxu0 0.0
    %1826 = vmatprep.subr.mxu0 0.0
    %1827 = vmatpush1.msra.mxu0 0.0
    %1828 = vmatprep.subr.mxu0 0.0
    %1829 = vmatpush1.msra.mxu0 0.0
    %1830 = vmatprep.subr.mxu0 0.0
    %1831 = vmatpush1.msra.mxu0 0.0
    %1832 = vmatprep.subr.mxu0 0.0
    %1833 = vmatpush1.msra.mxu0 0.0
    %1834 = vmatprep.subr.mxu0 0.0
    %1835 = vmatpush1.msra.mxu0 0.0
    %1836 = vmatprep.subr.mxu0 0.0
    %1837 = vmatpush1.msra.mxu0 0.0
    %1838 = vmatprep.subr.mxu0 0.0
    %1839 = vmatpush1.msra.mxu0 0.0
    %1840 = vmatprep.subr.mxu0 0.0
    %1841 = vmatpush1.msra.mxu0 0.0
    %1842 = vmatprep.subr.mxu0 0.0
    %1843 = vmatpush1.msra.mxu0 0.0
    %1844 = vmatprep.subr.mxu0 0.0
    %1845 = vmatpush1.msra.mxu0 0.0
    %1846 = vmatprep.subr.mxu0 0.0
    %1847 = vmatpush1.msra.mxu0 0.0
    %1848 = vmatprep.subr.mxu0 0.0
    %1849 = vmatpush1.msra.mxu0 0.0
    %1850 = vmatprep.subr.mxu0 0.0
    %1851 = vmatpush1.msra.mxu0 0.0
    %1852 = vmatprep.subr.mxu0 0.0
    %1853 = vmatpush1.msra.mxu0 %v1820
    %1854 = vmatprep.subr.mxu0 0.0
    %1855 = vmatpush2.msra.mxu0 0.0
    %1856 = vmatprep.subr.mxu0 0.0
    %1857 = vmatpush2.msra.mxu0 0.0
    %1858 = vmatprep.subr.mxu0 0.0
    %1859 = vmatpush2.msra.mxu0 0.0
    %1860 = vmatprep.subr.mxu0 0.0
    %1861 = vmatpush2.msra.mxu0 0.0
    %1862 = vmatprep.subr.mxu0 0.0
    %1863 = vmatpush2.msra.mxu0 0.0
    %1864 = vmatprep.subr.mxu0 0.0
    %1865 = vmatpush2.msra.mxu0 0.0
    %1866 = vmatprep.subr.mxu0 0.0
    %1867 = vmatpush2.msra.mxu0 0.0
    %1868 = vmatprep.subr.mxu0 0.0
    %1869 = vmatpush2.msra.mxu0 0.0
    %1870 = vmatprep.subr.mxu0 0.0
    %1871 = vmatpush2.msra.mxu0 0.0
    %1872 = vmatprep.subr.mxu0 0.0
    %1873 = vmatpush2.msra.mxu0 0.0
    %1874 = vmatprep.subr.mxu0 0.0
    %1875 = vmatpush2.msra.mxu0 0.0
    %1876 = vmatprep.subr.mxu0 0.0
    %1877 = vmatpush2.msra.mxu0 0.0
    %1878 = vmatprep.subr.mxu0 0.0
    %1879 = vmatpush2.msra.mxu0 0.0
    %1880 = vmatprep.subr.mxu0 0.0
    %1881 = vmatpush2.msra.mxu0 0.0
    %1882 = vmatprep.subr.mxu0 0.0
    %1883 = vmatpush2.msra.mxu0 0.0
    %1884 = vmatprep.subr.mxu0 0.0
    %1885 = vmatpush2.msra.mxu0 0.0
    %1886 = vmatprep.mubr.f32.mxu0 0.0
    %1887 = vmatmul.mubr.f32.gmra.mxu0 %v1787
    %v1888 = vpop.f32.mrf.mxu0
    %v1889 = vadd.f32 0.0, %v1888
    %v1890 = vpop.f32.mrf.mxu0
    %1891 = vmatprep.mubr.f32.mxu0 0.0
    %1892 = vmatmul.mubr.f32.gmra.mxu0 %v1790
    %v1893 = vpop.f32.mrf.mxu0
    %v1894 = vadd.f32 0.0, %v1893
    %v1895 = vpop.f32.mrf.mxu0
    %1896 = vmatprep.mubr.f32.mxu0 0.0
    %1897 = vmatmul.mubr.f32.gmra.mxu0 %v1793
    %v1898 = vpop.f32.mrf.mxu0
    %v1899 = vadd.f32 0.0, %v1898
    %v1900 = vpop.f32.mrf.mxu0
    %1901 = vmatprep.mubr.f32.mxu0 0.0
    %1902 = vmatmul.mubr.f32.gmra.mxu0 %v1796
    %v1903 = vpop.f32.mrf.mxu0
    %v1904 = vadd.f32 0.0, %v1903
    %v1905 = vpop.f32.mrf.mxu0
    %1906 = vmatprep.mubr.f32.mxu0 0.0
    %1907 = vmatmul.mubr.f32.gmra.mxu0 %v1799
    %v1908 = vpop.f32.mrf.mxu0
    %v1909 = vadd.f32 0.0, %v1908
    %v1910 = vpop.f32.mrf.mxu0
    %1911 = vmatprep.mubr.f32.mxu0 0.0
    %1912 = vmatmul.mubr.f32.gmra.mxu0 %v1802
    %v1913 = vpop.f32.mrf.mxu0
    %v1914 = vadd.f32 0.0, %v1913
    %v1915 = vpop.f32.mrf.mxu0
    %1916 = vmatprep.mubr.f32.mxu0 0.0
    %1917 = vmatmul.mubr.f32.gmra.mxu0 %v1805
    %v1918 = vpop.f32.mrf.mxu0
    %v1919 = vadd.f32 0.0, %v1918
    %v1920 = vpop.f32.mrf.mxu0
    %1921 = vmatprep.mubr.f32.mxu0 0.0
    %1922 = vmatmul.mubr.f32.gmra.mxu0 %v1807
    %v1923 = vpop.f32.mrf.mxu0
    %v1924 = vadd.f32 0.0, %v1923
    %v1925 = vpop.f32.mrf.mxu0
    %1926 = vmatprep.mubr.f32.mxu0 0.0
    %1927 = vmatmul.mubr.f32.gmra.mxu0 %v1809
    %v1928 = vpop.f32.mrf.mxu0
    %v1929 = vadd.f32 0.0, %v1928
    %v1930 = vpop.f32.mrf.mxu0
    %1931 = vmatprep.mubr.f32.mxu0 0.0
    %1932 = vmatmul.mubr.f32.gmra.mxu0 %v1811
    %v1933 = vpop.f32.mrf.mxu0
    %v1934 = vadd.f32 0.0, %v1933
    %v1935 = vpop.f32.mrf.mxu0
    %1936 = vmatprep.mubr.f32.mxu0 0.0
    %1937 = vmatmul.mubr.f32.gmra.mxu0 %v1813
    %v1938 = vpop.f32.mrf.mxu0
    %v1939 = vadd.f32 0.0, %v1938
    %v1940 = vpop.f32.mrf.mxu0
    %1941 = vmatprep.mubr.f32.mxu0 0.0
    %1942 = vmatmul.mubr.f32.gmra.mxu0 %v1815
    %v1943 = vpop.f32.mrf.mxu0
    %v1944 = vadd.f32 0.0, %v1943
    %v1945 = vpop.f32.mrf.mxu0
    %1946 = vmatprep.mubr.f32.mxu0 0.0
    %1947 = vmatmul.mubr.f32.gmra.mxu0 %v1817
    %v1948 = vpop.f32.mrf.mxu0
    %v1949 = vadd.f32 0.0, %v1948
    %v1950 = vpop.f32.mrf.mxu0
    %1951 = vdwg.mxu0
    %v1952 = vadd.f32 %v1722, %v1889
    %v1953 = vadd.f32 %v1723, %v1894
    %v1954 = vadd.f32 %v1724, %v1899
    %v1955 = vadd.f32 %v1725, %v1904
    %v1956 = vadd.f32 %v1726, %v1909
    %v1957 = vadd.f32 %v1727, %v1914
    %v1958 = vadd.f32 %v1728, %v1919
    %v1959 = vadd.f32 %v1729, %v1924
    %v1960 = vadd.f32 %v1730, %v1929
    %v1961 = vadd.f32 %v1731, %v1934
    %v1962 = vadd.f32 %v1732, %v1939
    %v1963 = vadd.f32 %v1733, %v1944
    %v1964 = vadd.f32 %v1734, %v1949
    %vm1965 = vcmask 31744
    %v1966 = vsel %vm1965, %v1952, 0.0
    %v1967 = vsel %vm1965, %v1953, 0.0
    %v1968 = vadd.f32 %v1966, %v1967
    %v1969 = vsel %vm1965, %v1954, 0.0
    %v1970 = vadd.f32 %v1968, %v1969
    %v1971 = vsel %vm1965, %v1955, 0.0
    %v1972 = vadd.f32 %v1970, %v1971
    %v1973 = vsel %vm1965, %v1956, 0.0
    %v1974 = vadd.f32 %v1972, %v1973
    %v1975 = vsel %vm1965, %v1957, 0.0
    %v1976 = vadd.f32 %v1974, %v1975
    %v1977 = vsel %vm1965, %v1958, 0.0
    %v1978 = vadd.f32 %v1976, %v1977
    %v1979 = vsel %vm1965, %v1959, 0.0
    %v1980 = vadd.f32 %v1978, %v1979
    %v1981 = vsel %vm1965, %v1960, 0.0
    %v1982 = vadd.f32 %v1980, %v1981
    %v1983 = vsel %vm1965, %v1961, 0.0
    %v1984 = vadd.f32 %v1982, %v1983
    %v1985 = vsel %vm1965, %v1962, 0.0
    %v1986 = vadd.f32 %v1984, %v1985
    %v1987 = vsel %vm1965, %v1963, 0.0
    %v1988 = vadd.f32 %v1986, %v1987
    %v1989 = vsel %vm1965, %v1964, 0.0
    %v1990 = vadd.f32 %v1988, %v1989
    %v1991 = vrot.slane %v1990, 4
    %v1992 = vadd.f32 %v1990, %v1991
    %v1993 = vrot.slane %v1992, 2
    %v1994 = vadd.f32 %v1992, %v1993
    %v1995 = vrot.slane %v1994, 1
    %v1996 = vadd.f32 %v1994, %v1995
    %v1997 = vrcp.pop 104.0
    %v1998 = vmul.f32 %v1996, %v1997
    %v1999 = vsub.f32 %v1952, %v1998
    %v2000 = vsub.f32 %v1953, %v1998
    %v2001 = vsub.f32 %v1954, %v1998
    %v2002 = vsub.f32 %v1955, %v1998
    %v2003 = vsub.f32 %v1956, %v1998
    %v2004 = vsub.f32 %v1957, %v1998
    %v2005 = vsub.f32 %v1958, %v1998
    %v2006 = vsub.f32 %v1959, %v1998
    %v2007 = vsub.f32 %v1960, %v1998
    %v2008 = vsub.f32 %v1961, %v1998
    %v2009 = vsub.f32 %v1962, %v1998
    %v2010 = vsub.f32 %v1963, %v1998
    %v2011 = vsub.f32 %v1964, %v1998
    %v2012 = vmul.f32 %v1999, %v1999
    %v2013 = vmul.f32 %v2000, %v2000
    %v2014 = vmul.f32 %v2001, %v2001
    %v2015 = vmul.f32 %v2002, %v2002
    %v2016 = vmul.f32 %v2003, %v2003
    %v2017 = vmul.f32 %v2004, %v2004
    %v2018 = vmul.f32 %v2005, %v2005
    %v2019 = vmul.f32 %v2006, %v2006
    %v2020 = vmul.f32 %v2007, %v2007
    %v2021 = vmul.f32 %v2008, %v2008
    %v2022 = vmul.f32 %v2009, %v2009
    %v2023 = vmul.f32 %v2010, %v2010
    %v2024 = vmul.f32 %v2011, %v2011
    %v2025 = vsel %vm1965, %v2012, 0.0
    %v2026 = vsel %vm1965, %v2013, 0.0
    %v2027 = vadd.f32 %v2025, %v2026
    %v2028 = vsel %vm1965, %v2014, 0.0
    %v2029 = vadd.f32 %v2027, %v2028
    %v2030 = vsel %vm1965, %v2015, 0.0
    %v2031 = vadd.f32 %v2029, %v2030
    %v2032 = vsel %vm1965, %v2016, 0.0
    %v2033 = vadd.f32 %v2031, %v2032
    %v2034 = vsel %vm1965, %v2017, 0.0
    %v2035 = vadd.f32 %v2033, %v2034
    %v2036 = vsel %vm1965, %v2018, 0.0
    %v2037 = vadd.f32 %v2035, %v2036
    %v2038 = vsel %vm1965, %v2019, 0.0
    %v2039 = vadd.f32 %v2037, %v2038
    %v2040 = vsel %vm1965, %v2020, 0.0
    %v2041 = vadd.f32 %v2039, %v2040
    %v2042 = vsel %vm1965, %v2021, 0.0
    %v2043 = vadd.f32 %v2041, %v2042
    %v2044 = vsel %vm1965, %v2022, 0.0
    %v2045 = vadd.f32 %v2043, %v2044
    %v2046 = vsel %vm1965, %v2023, 0.0
    %v2047 = vadd.f32 %v2045, %v2046
    %v2048 = vsel %vm1965, %v2024, 0.0
    %v2049 = vadd.f32 %v2047, %v2048
    %v2050 = vrot.slane %v2049, 4
    %v2051 = vadd.f32 %v2049, %v2050
    %v2052 = vrot.slane %v2051, 2
    %v2053 = vadd.f32 %v2051, %v2052
    %v2054 = vrot.slane %v2053, 1
    %v2055 = vadd.f32 %v2053, %v2054
    %v2056 = vmul.f32 %v2055, %v1997
    %v2057 = vadd.f32 %v2056, 1e-05
    %v2058 = vrsqrt.pop %v2057
    %v2059 = vmul.f32 %v1999, %v2058
    %v2060 = vmul.f32 %v2000, %v2058
    %v2061 = vmul.f32 %v2001, %v2058
    %v2062 = vmul.f32 %v2002, %v2058
    %v2063 = vmul.f32 %v2003, %v2058
    %v2064 = vmul.f32 %v2004, %v2058
    %v2065 = vmul.f32 %v2005, %v2058
    %v2066 = vmul.f32 %v2006, %v2058
    %v2067 = vmul.f32 %v2007, %v2058
    %v2068 = vmul.f32 %v2008, %v2058
    %v2069 = vmul.f32 %v2009, %v2058
    %v2070 = vmul.f32 %v2010, %v2058
    %v2071 = vmul.f32 %v2011, %v2058
    %v2072 = vld [vmem:[%s2] sm:$0x1]
    %v2074 = vlaneseq
    %v2075 = vshrl.u32 %v2074, 7
    %v2076 = vsub.s32 0, %v2075
    %v2077 = vrot.slane %v2072, %v2076
    %v2079 = vmul.f32 %v2059, %v2077
    %v2080 = vmul.f32 %v2060, %v2077
    %v2081 = vmul.f32 %v2061, %v2077
    %v2082 = vmul.f32 %v2062, %v2077
    %v2083 = vmul.f32 %v2063, %v2077
    %v2084 = vmul.f32 %v2064, %v2077
    %v2085 = vmul.f32 %v2065, %v2077
    %v2086 = vmul.f32 %v2066, %v2077
    %v2087 = vmul.f32 %v2067, %v2077
    %v2088 = vmul.f32 %v2068, %v2077
    %v2089 = vmul.f32 %v2069, %v2077
    %v2090 = vmul.f32 %v2070, %v2077
    %v2091 = vmul.f32 %v2071, %v2077
    %v2092 = vld [vmem:[%s3] sm:$0x1]
    %v2094 = vlaneseq
    %v2095 = vshrl.u32 %v2094, 7
    %v2096 = vsub.s32 0, %v2095
    %v2097 = vrot.slane %v2092, %v2096
    %v2099 = vadd.f32 %v2079, %v2097
    %v2100 = vadd.f32 %v2080, %v2097
    %v2101 = vadd.f32 %v2081, %v2097
    %v2102 = vadd.f32 %v2082, %v2097
    %v2103 = vadd.f32 %v2083, %v2097
    %v2104 = vadd.f32 %v2084, %v2097
    %v2105 = vadd.f32 %v2085, %v2097
    %v2106 = vadd.f32 %v2086, %v2097
    %v2107 = vadd.f32 %v2087, %v2097
    %v2108 = vadd.f32 %v2088, %v2097
    %v2109 = vadd.f32 %v2089, %v2097
    %v2110 = vadd.f32 %v2090, %v2097
    %v2111 = vadd.f32 %v2091, %v2097
    %v2112 = vmax.f32 %v2099, 0.0
    %v2113 = vmax.f32 %v2100, 0.0
    %v2114 = vmax.f32 %v2101, 0.0
    %v2115 = vmax.f32 %v2102, 0.0
    %v2116 = vmax.f32 %v2103, 0.0
    %v2117 = vmax.f32 %v2104, 0.0
    %v2118 = vmax.f32 %v2105, 0.0
    %v2119 = vmax.f32 %v2106, 0.0
    %v2120 = vmax.f32 %v2107, 0.0
    %v2121 = vmax.f32 %v2108, 0.0
    %v2122 = vmax.f32 %v2109, 0.0
    %v2123 = vmax.f32 %v2110, 0.0
    %v2124 = vmax.f32 %v2111, 0.0
    %v2126 = vrot.slane %v2118, 3
    %vm2128 = vcmask 1040384
    %v2129 = vsel %vm2128, %v2112, %v2126
    %2130 = vst.msk [vmem:[#allocation3] sm:$0xff] %vm1965, %v2112
    %2131 = vst.msk [vmem:[#allocation3 + $0x8] sm:$0xff] %vm1965, %v2113
    %2132 = vst.msk [vmem:[#allocation3 + $0x10] sm:$0xff] %vm1965, %v2114
    %2133 = vst.msk [vmem:[#allocation3 + $0x18] sm:$0xff] %vm1965, %v2115
    %2134 = vst.msk [vmem:[#allocation3 + $0x20] sm:$0xff] %vm1965, %v2116
    %2135 = vst.msk [vmem:[#allocation3 + $0x28] sm:$0xff] %vm1965, %v2117
    %2136 = vst.msk [vmem:[#allocation3 + $0x30] sm:$0xff] %vm1965, %v2118
    %2137 = vst.msk [vmem:[#allocation3 + $0x38] sm:$0xff] %vm1965, %v2119
    %2138 = vst.msk [vmem:[#allocation3 + $0x40] sm:$0xff] %vm1965, %v2120
    %2139 = vst.msk [vmem:[#allocation3 + $0x48] sm:$0xff] %vm1965, %v2121
    %2140 = vst.msk [vmem:[#allocation3 + $0x50] sm:$0xff] %vm1965, %v2122
    %2141 = vst.msk [vmem:[#allocation3 + $0x58] sm:$0xff] %vm1965, %v2123
    %2142 = vst.msk [vmem:[#allocation3 + $0x60] sm:$0xff] %vm1965, %v2124
    %v2143 = vld [vmem:[#allocation3] ss:$3 sm:$0xff]
    %s2144 = scalar_lea.vmem [#allocation3], 24
    %v2145 = vld [vmem:[%s2144] ss:$3 sm:$0xff]
    %s2146 = scalar_lea.vmem [#allocation3], 52
    %v2147 = vld [vmem:[%s2146] ss:$3 sm:$0xff]
    %s2148 = scalar_lea.vmem [#allocation3], 76
    %v2149 = vld [vmem:[%s2148] ss:$3 sm:$0xff]
    %v2150 = vld [vmem:[%s4] sm:$0xf]
    %s2151 = scalar_lea.vmem [#allocation3], 1
    %v2152 = vld [vmem:[%s2151] ss:$3 sm:$0xff]
    %s2153 = scalar_lea.vmem [#allocation3], 25
    %v2154 = vld [vmem:[%s2153] ss:$3 sm:$0xff]
    %s2155 = scalar_lea.vmem [#allocation3], 53
    %v2156 = vld [vmem:[%s2155] ss:$3 sm:$0xff]
    %s2157 = scalar_lea.vmem [#allocation3], 77
    %v2158 = vld [vmem:[%s2157] ss:$3 sm:$0xff]
    %v2159 = vld [vmem:[%s4 + $0x4] sm:$0xf]
    %v2161 = vsel %vm1965, %v2152, 0
    %v2164 = vsel %vm1965, %v2154, 0
    %v2167 = vsel %vm1965, %v2156, 0
    %v2170 = vsel %vm1965, %v2158, 0
    %v2173 = vsel %vm414, %v2159, 0
    %2175 = vmatprep.subr.mxu0 0.0
    %2176 = vmatpush1.msra.mxu0 0.0
    %2177 = vmatprep.subr.mxu0 0.0
    %2178 = vmatpush1.msra.mxu0 0.0
    %2179 = vmatprep.subr.mxu0 0.0
    %2180 = vmatpush1.msra.mxu0 0.0
    %2181 = vmatprep.subr.mxu0 0.0
    %2182 = vmatpush1.msra.mxu0 0.0
    %2183 = vmatprep.subr.mxu0 0.0
    %2184 = vmatpush1.msra.mxu0 0.0
    %2185 = vmatprep.subr.mxu0 0.0
    %2186 = vmatpush1.msra.mxu0 0.0
    %2187 = vmatprep.subr.mxu0 0.0
    %2188 = vmatpush1.msra.mxu0 0.0
    %2189 = vmatprep.subr.mxu0 0.0
    %2190 = vmatpush1.msra.mxu0 0.0
    %2191 = vmatprep.subr.mxu0 0.0
    %2192 = vmatpush1.msra.mxu0 0.0
    %2193 = vmatprep.subr.mxu0 0.0
    %2194 = vmatpush1.msra.mxu0 0.0
    %2195 = vmatprep.subr.mxu0 0.0
    %2196 = vmatpush1.msra.mxu0 0.0
    %2197 = vmatprep.subr.mxu0 0.0
    %2198 = vmatpush1.msra.mxu0 0.0
    %2199 = vmatprep.subr.mxu0 0.0
    %2200 = vmatpush1.msra.mxu0 0.0
    %2201 = vmatprep.subr.mxu0 0.0
    %2202 = vmatpush1.msra.mxu0 0.0
    %2203 = vmatprep.subr.mxu0 0.0
    %2204 = vmatpush1.msra.mxu0 0.0
    %2205 = vmatprep.subr.mxu0 0.0
    %2206 = vmatpush1.msra.mxu0 %v2173
    %2207 = vmatprep.subr.mxu0 0.0
    %2208 = vmatpush2.msra.mxu0 0.0
    %2209 = vmatprep.subr.mxu0 0.0
    %2210 = vmatpush2.msra.mxu0 0.0
    %2211 = vmatprep.subr.mxu0 0.0
    %2212 = vmatpush2.msra.mxu0 0.0
    %2213 = vmatprep.subr.mxu0 0.0
    %2214 = vmatpush2.msra.mxu0 0.0
    %2215 = vmatprep.subr.mxu0 0.0
    %2216 = vmatpush2.msra.mxu0 0.0
    %2217 = vmatprep.subr.mxu0 0.0
    %2218 = vmatpush2.msra.mxu0 0.0
    %2219 = vmatprep.subr.mxu0 0.0
    %2220 = vmatpush2.msra.mxu0 0.0
    %2221 = vmatprep.subr.mxu0 0.0
    %2222 = vmatpush2.msra.mxu0 0.0
    %2223 = vmatprep.subr.mxu0 0.0
    %2224 = vmatpush2.msra.mxu0 0.0
    %2225 = vmatprep.subr.mxu0 0.0
    %2226 = vmatpush2.msra.mxu0 0.0
    %2227 = vmatprep.subr.mxu0 0.0
    %2228 = vmatpush2.msra.mxu0 0.0
    %2229 = vmatprep.subr.mxu0 0.0
    %2230 = vmatpush2.msra.mxu0 0.0
    %2231 = vmatprep.subr.mxu0 0.0
    %2232 = vmatpush2.msra.mxu0 0.0
    %2233 = vmatprep.subr.mxu0 0.0
    %2234 = vmatpush2.msra.mxu0 0.0
    %2235 = vmatprep.subr.mxu0 0.0
    %2236 = vmatpush2.msra.mxu0 0.0
    %2237 = vmatprep.subr.mxu0 0.0
    %2238 = vmatpush2.msra.mxu0 0.0
    %2239 = vmatprep.mubr.f32.mxu0 0.0
    %2240 = vmatmul.mubr.f32.gmra.mxu0 %v2161
    %v2241 = vpop.f32.mrf.mxu0
    %v2242 = vadd.f32 0.0, %v2241
    %v2243 = vpop.f32.mrf.mxu0
    %2244 = vmatprep.mubr.f32.mxu0 0.0
    %2245 = vmatmul.mubr.f32.gmra.mxu0 %v2164
    %v2246 = vpop.f32.mrf.mxu0
    %v2247 = vadd.f32 0.0, %v2246
    %v2248 = vpop.f32.mrf.mxu0
    %2249 = vmatprep.mubr.f32.mxu0 0.0
    %2250 = vmatmul.mubr.f32.gmra.mxu0 %v2167
    %v2251 = vpop.f32.mrf.mxu0
    %v2252 = vadd.f32 0.0, %v2251
    %v2253 = vpop.f32.mrf.mxu0
    %2254 = vmatprep.mubr.f32.mxu0 0.0
    %2255 = vmatmul.mubr.f32.gmra.mxu0 %v2170
    %v2256 = vpop.f32.mrf.mxu0
    %v2257 = vadd.f32 0.0, %v2256
    %v2258 = vpop.f32.mrf.mxu0
    %2259 = vdwg.mxu0
    %v2261 = vsel %vm1965, %v2143, 0
    %v2264 = vsel %vm1965, %v2145, 0
    %v2267 = vsel %vm1965, %v2147, 0
    %v2270 = vsel %vm1965, %v2149, 0
    %v2273 = vsel %vm414, %v2150, 0
    %2275 = vmatprep.subr.mxu0 0.0
    %2276 = vmatpush1.msra.mxu0 0.0
    %2277 = vmatprep.subr.mxu0 0.0
    %2278 = vmatpush1.msra.mxu0 0.0
    %2279 = vmatprep.subr.mxu0 0.0
    %2280 = vmatpush1.msra.mxu0 0.0
    %2281 = vmatprep.subr.mxu0 0.0
    %2282 = vmatpush1.msra.mxu0 0.0
    %2283 = vmatprep.subr.mxu0 0.0
    %2284 = vmatpush1.msra.mxu0 0.0
    %2285 = vmatprep.subr.mxu0 0.0
    %2286 = vmatpush1.msra.mxu0 0.0
    %2287 = vmatprep.subr.mxu0 0.0
    %2288 = vmatpush1.msra.mxu0 0.0
    %2289 = vmatprep.subr.mxu0 0.0
    %2290 = vmatpush1.msra.mxu0 0.0
    %2291 = vmatprep.subr.mxu0 0.0
    %2292 = vmatpush1.msra.mxu0 0.0
    %2293 = vmatprep.subr.mxu0 0.0
    %2294 = vmatpush1.msra.mxu0 0.0
    %2295 = vmatprep.subr.mxu0 0.0
    %2296 = vmatpush1.msra.mxu0 0.0
    %2297 = vmatprep.subr.mxu0 0.0
    %2298 = vmatpush1.msra.mxu0 0.0
    %2299 = vmatprep.subr.mxu0 0.0
    %2300 = vmatpush1.msra.mxu0 0.0
    %2301 = vmatprep.subr.mxu0 0.0
    %2302 = vmatpush1.msra.mxu0 0.0
    %2303 = vmatprep.subr.mxu0 0.0
    %2304 = vmatpush1.msra.mxu0 0.0
    %2305 = vmatprep.subr.mxu0 0.0
    %2306 = vmatpush1.msra.mxu0 %v2273
    %2307 = vmatprep.subr.mxu0 0.0
    %2308 = vmatpush2.msra.mxu0 0.0
    %2309 = vmatprep.subr.mxu0 0.0
    %2310 = vmatpush2.msra.mxu0 0.0
    %2311 = vmatprep.subr.mxu0 0.0
    %2312 = vmatpush2.msra.mxu0 0.0
    %2313 = vmatprep.subr.mxu0 0.0
    %2314 = vmatpush2.msra.mxu0 0.0
    %2315 = vmatprep.subr.mxu0 0.0
    %2316 = vmatpush2.msra.mxu0 0.0
    %2317 = vmatprep.subr.mxu0 0.0
    %2318 = vmatpush2.msra.mxu0 0.0
    %2319 = vmatprep.subr.mxu0 0.0
    %2320 = vmatpush2.msra.mxu0 0.0
    %2321 = vmatprep.subr.mxu0 0.0
    %2322 = vmatpush2.msra.mxu0 0.0
    %2323 = vmatprep.subr.mxu0 0.0
    %2324 = vmatpush2.msra.mxu0 0.0
    %2325 = vmatprep.subr.mxu0 0.0
    %2326 = vmatpush2.msra.mxu0 0.0
    %2327 = vmatprep.subr.mxu0 0.0
    %2328 = vmatpush2.msra.mxu0 0.0
    %2329 = vmatprep.subr.mxu0 0.0
    %2330 = vmatpush2.msra.mxu0 0.0
    %2331 = vmatprep.subr.mxu0 0.0
    %2332 = vmatpush2.msra.mxu0 0.0
    %2333 = vmatprep.subr.mxu0 0.0
    %2334 = vmatpush2.msra.mxu0 0.0
    %2335 = vmatprep.subr.mxu0 0.0
    %2336 = vmatpush2.msra.mxu0 0.0
    %2337 = vmatprep.subr.mxu0 0.0
    %2338 = vmatpush2.msra.mxu0 0.0
    %2339 = vmatprep.mubr.f32.mxu0 0.0
    %2340 = vmatmul.mubr.f32.gmra.mxu0 %v2261
    %v2341 = vpop.f32.mrf.mxu0
    %v2342 = vadd.f32 %v2242, %v2341
    %v2343 = vpop.f32.mrf.mxu0
    %2344 = vmatprep.mubr.f32.mxu0 0.0
    %2345 = vmatmul.mubr.f32.gmra.mxu0 %v2264
    %v2346 = vpop.f32.mrf.mxu0
    %v2347 = vadd.f32 %v2247, %v2346
    %v2348 = vpop.f32.mrf.mxu0
    %2349 = vmatprep.mubr.f32.mxu0 0.0
    %2350 = vmatmul.mubr.f32.gmra.mxu0 %v2267
    %v2351 = vpop.f32.mrf.mxu0
    %v2352 = vadd.f32 %v2252, %v2351
    %v2353 = vpop.f32.mrf.mxu0
    %2354 = vmatprep.mubr.f32.mxu0 0.0
    %2355 = vmatmul.mubr.f32.gmra.mxu0 %v2270
    %v2356 = vpop.f32.mrf.mxu0
    %v2357 = vadd.f32 %v2257, %v2356
    %v2358 = vpop.f32.mrf.mxu0
    %2359 = vdwg.mxu0
    %s2360 = scalar_lea.vmem [#allocation3], 2
    %v2361 = vld [vmem:[%s2360] ss:$3 sm:$0xff]
    %s2362 = scalar_lea.vmem [#allocation3], 26
    %v2363 = vld [vmem:[%s2362] ss:$3 sm:$0xff]
    %s2364 = scalar_lea.vmem [#allocation3], 54
    %v2365 = vld [vmem:[%s2364] ss:$3 sm:$0xff]
    %s2366 = scalar_lea.vmem [#allocation3], 78
    %v2367 = vld [vmem:[%s2366] ss:$3 sm:$0xff]
    %v2368 = vld [vmem:[%s4 + $0x8] sm:$0xf]
    %v2370 = vsel %vm1965, %v2361, 0
    %v2373 = vsel %vm1965, %v2363, 0
    %v2376 = vsel %vm1965, %v2365, 0
    %v2379 = vsel %vm1965, %v2367, 0
    %v2382 = vsel %vm414, %v2368, 0
    %2384 = vmatprep.subr.mxu0 0.0
    %2385 = vmatpush1.msra.mxu0 0.0
    %2386 = vmatprep.subr.mxu0 0.0
    %2387 = vmatpush1.msra.mxu0 0.0
    %2388 = vmatprep.subr.mxu0 0.0
    %2389 = vmatpush1.msra.mxu0 0.0
    %2390 = vmatprep.subr.mxu0 0.0
    %2391 = vmatpush1.msra.mxu0 0.0
    %2392 = vmatprep.subr.mxu0 0.0
    %2393 = vmatpush1.msra.mxu0 0.0
    %2394 = vmatprep.subr.mxu0 0.0
    %2395 = vmatpush1.msra.mxu0 0.0
    %2396 = vmatprep.subr.mxu0 0.0
    %2397 = vmatpush1.msra.mxu0 0.0
    %2398 = vmatprep.subr.mxu0 0.0
    %2399 = vmatpush1.msra.mxu0 0.0
    %2400 = vmatprep.subr.mxu0 0.0
    %2401 = vmatpush1.msra.mxu0 0.0
    %2402 = vmatprep.subr.mxu0 0.0
    %2403 = vmatpush1.msra.mxu0 0.0
    %2404 = vmatprep.subr.mxu0 0.0
    %2405 = vmatpush1.msra.mxu0 0.0
    %2406 = vmatprep.subr.mxu0 0.0
    %2407 = vmatpush1.msra.mxu0 0.0
    %2408 = vmatprep.subr.mxu0 0.0
    %2409 = vmatpush1.msra.mxu0 0.0
    %2410 = vmatprep.subr.mxu0 0.0
    %2411 = vmatpush1.msra.mxu0 0.0
    %2412 = vmatprep.subr.mxu0 0.0
    %2413 = vmatpush1.msra.mxu0 0.0
    %2414 = vmatprep.subr.mxu0 0.0
    %2415 = vmatpush1.msra.mxu0 %v2382
    %2416 = vmatprep.subr.mxu0 0.0
    %2417 = vmatpush2.msra.mxu0 0.0
    %2418 = vmatprep.subr.mxu0 0.0
    %2419 = vmatpush2.msra.mxu0 0.0
    %2420 = vmatprep.subr.mxu0 0.0
    %2421 = vmatpush2.msra.mxu0 0.0
    %2422 = vmatprep.subr.mxu0 0.0
    %2423 = vmatpush2.msra.mxu0 0.0
    %2424 = vmatprep.subr.mxu0 0.0
    %2425 = vmatpush2.msra.mxu0 0.0
    %2426 = vmatprep.subr.mxu0 0.0
    %2427 = vmatpush2.msra.mxu0 0.0
    %2428 = vmatprep.subr.mxu0 0.0
    %2429 = vmatpush2.msra.mxu0 0.0
    %2430 = vmatprep.subr.mxu0 0.0
    %2431 = vmatpush2.msra.mxu0 0.0
    %2432 = vmatprep.subr.mxu0 0.0
    %2433 = vmatpush2.msra.mxu0 0.0
    %2434 = vmatprep.subr.mxu0 0.0
    %2435 = vmatpush2.msra.mxu0 0.0
    %2436 = vmatprep.subr.mxu0 0.0
    %2437 = vmatpush2.msra.mxu0 0.0
    %2438 = vmatprep.subr.mxu0 0.0
    %2439 = vmatpush2.msra.mxu0 0.0
    %2440 = vmatprep.subr.mxu0 0.0
    %2441 = vmatpush2.msra.mxu0 0.0
    %2442 = vmatprep.subr.mxu0 0.0
    %2443 = vmatpush2.msra.mxu0 0.0
    %2444 = vmatprep.subr.mxu0 0.0
    %2445 = vmatpush2.msra.mxu0 0.0
    %2446 = vmatprep.subr.mxu0 0.0
    %2447 = vmatpush2.msra.mxu0 0.0
    %2448 = vmatprep.mubr.f32.mxu0 0.0
    %2449 = vmatmul.mubr.f32.gmra.mxu0 %v2370
    %v2450 = vpop.f32.mrf.mxu0
    %v2451 = vadd.f32 0.0, %v2450
    %v2452 = vpop.f32.mrf.mxu0
    %2453 = vmatprep.mubr.f32.mxu0 0.0
    %2454 = vmatmul.mubr.f32.gmra.mxu0 %v2373
    %v2455 = vpop.f32.mrf.mxu0
    %v2456 = vadd.f32 0.0, %v2455
    %v2457 = vpop.f32.mrf.mxu0
    %2458 = vmatprep.mubr.f32.mxu0 0.0
    %2459 = vmatmul.mubr.f32.gmra.mxu0 %v2376
    %v2460 = vpop.f32.mrf.mxu0
    %v2461 = vadd.f32 0.0, %v2460
    %v2462 = vpop.f32.mrf.mxu0
    %2463 = vmatprep.mubr.f32.mxu0 0.0
    %2464 = vmatmul.mubr.f32.gmra.mxu0 %v2379
    %v2465 = vpop.f32.mrf.mxu0
    %v2466 = vadd.f32 0.0, %v2465
    %v2467 = vpop.f32.mrf.mxu0
    %2468 = vdwg.mxu0
    %v2469 = vadd.f32 %v2342, %v2451
    %v2470 = vadd.f32 %v2347, %v2456
    %v2471 = vadd.f32 %v2352, %v2461
    %v2472 = vadd.f32 %v2357, %v2466
    %s2473 = scalar_lea.vmem [#allocation3], 3
    %v2474 = vld [vmem:[%s2473] ss:$3 sm:$0xff]
    %s2475 = scalar_lea.vmem [#allocation3], 27
    %v2476 = vld [vmem:[%s2475] ss:$3 sm:$0xff]
    %s2477 = scalar_lea.vmem [#allocation3], 55
    %v2478 = vld [vmem:[%s2477] ss:$3 sm:$0xff]
    %s2479 = scalar_lea.vmem [#allocation3], 79
    %v2480 = vld [vmem:[%s2479] ss:$3 sm:$0xff]
    %v2481 = vld [vmem:[%s4 + $0xc] sm:$0xf]
    %v2483 = vsel %vm1965, %v2474, 0
    %v2486 = vsel %vm1965, %v2476, 0
    %v2489 = vsel %vm1965, %v2478, 0
    %v2492 = vsel %vm1965, %v2480, 0
    %v2495 = vsel %vm414, %v2481, 0
    %2497 = vmatprep.subr.mxu0 0.0
    %2498 = vmatpush1.msra.mxu0 0.0
    %2499 = vmatprep.subr.mxu0 0.0
    %2500 = vmatpush1.msra.mxu0 0.0
    %2501 = vmatprep.subr.mxu0 0.0
    %2502 = vmatpush1.msra.mxu0 0.0
    %2503 = vmatprep.subr.mxu0 0.0
    %2504 = vmatpush1.msra.mxu0 0.0
    %2505 = vmatprep.subr.mxu0 0.0
    %2506 = vmatpush1.msra.mxu0 0.0
    %2507 = vmatprep.subr.mxu0 0.0
    %2508 = vmatpush1.msra.mxu0 0.0
    %2509 = vmatprep.subr.mxu0 0.0
    %2510 = vmatpush1.msra.mxu0 0.0
    %2511 = vmatprep.subr.mxu0 0.0
    %2512 = vmatpush1.msra.mxu0 0.0
    %2513 = vmatprep.subr.mxu0 0.0
    %2514 = vmatpush1.msra.mxu0 0.0
    %2515 = vmatprep.subr.mxu0 0.0
    %2516 = vmatpush1.msra.mxu0 0.0
    %2517 = vmatprep.subr.mxu0 0.0
    %2518 = vmatpush1.msra.mxu0 0.0
    %2519 = vmatprep.subr.mxu0 0.0
    %2520 = vmatpush1.msra.mxu0 0.0
    %2521 = vmatprep.subr.mxu0 0.0
    %2522 = vmatpush1.msra.mxu0 0.0
    %2523 = vmatprep.subr.mxu0 0.0
    %2524 = vmatpush1.msra.mxu0 0.0
    %2525 = vmatprep.subr.mxu0 0.0
    %2526 = vmatpush1.msra.mxu0 0.0
    %2527 = vmatprep.subr.mxu0 0.0
    %2528 = vmatpush1.msra.mxu0 %v2495
    %2529 = vmatprep.subr.mxu0 0.0
    %2530 = vmatpush2.msra.mxu0 0.0
    %2531 = vmatprep.subr.mxu0 0.0
    %2532 = vmatpush2.msra.mxu0 0.0
    %2533 = vmatprep.subr.mxu0 0.0
    %2534 = vmatpush2.msra.mxu0 0.0
    %2535 = vmatprep.subr.mxu0 0.0
    %2536 = vmatpush2.msra.mxu0 0.0
    %2537 = vmatprep.subr.mxu0 0.0
    %2538 = vmatpush2.msra.mxu0 0.0
    %2539 = vmatprep.subr.mxu0 0.0
    %2540 = vmatpush2.msra.mxu0 0.0
    %2541 = vmatprep.subr.mxu0 0.0
    %2542 = vmatpush2.msra.mxu0 0.0
    %2543 = vmatprep.subr.mxu0 0.0
    %2544 = vmatpush2.msra.mxu0 0.0
    %2545 = vmatprep.subr.mxu0 0.0
    %2546 = vmatpush2.msra.mxu0 0.0
    %2547 = vmatprep.subr.mxu0 0.0
    %2548 = vmatpush2.msra.mxu0 0.0
    %2549 = vmatprep.subr.mxu0 0.0
    %2550 = vmatpush2.msra.mxu0 0.0
    %2551 = vmatprep.subr.mxu0 0.0
    %2552 = vmatpush2.msra.mxu0 0.0
    %2553 = vmatprep.subr.mxu0 0.0
    %2554 = vmatpush2.msra.mxu0 0.0
    %2555 = vmatprep.subr.mxu0 0.0
    %2556 = vmatpush2.msra.mxu0 0.0
    %2557 = vmatprep.subr.mxu0 0.0
    %2558 = vmatpush2.msra.mxu0 0.0
    %2559 = vmatprep.subr.mxu0 0.0
    %2560 = vmatpush2.msra.mxu0 0.0
    %2561 = vmatprep.mubr.f32.mxu0 0.0
    %2562 = vmatmul.mubr.f32.gmra.mxu0 %v2483
    %v2563 = vpop.f32.mrf.mxu0
    %v2564 = vadd.f32 0.0, %v2563
    %v2565 = vpop.f32.mrf.mxu0
    %2566 = vmatprep.mubr.f32.mxu0 0.0
    %2567 = vmatmul.mubr.f32.gmra.mxu0 %v2486
    %v2568 = vpop.f32.mrf.mxu0
    %v2569 = vadd.f32 0.0, %v2568
    %v2570 = vpop.f32.mrf.mxu0
    %2571 = vmatprep.mubr.f32.mxu0 0.0
    %2572 = vmatmul.mubr.f32.gmra.mxu0 %v2489
    %v2573 = vpop.f32.mrf.mxu0
    %v2574 = vadd.f32 0.0, %v2573
    %v2575 = vpop.f32.mrf.mxu0
    %2576 = vmatprep.mubr.f32.mxu0 0.0
    %2577 = vmatmul.mubr.f32.gmra.mxu0 %v2492
    %v2578 = vpop.f32.mrf.mxu0
    %v2579 = vadd.f32 0.0, %v2578
    %v2580 = vpop.f32.mrf.mxu0
    %2581 = vdwg.mxu0
    %v2582 = vadd.f32 %v2469, %v2564
    %v2583 = vadd.f32 %v2470, %v2569
    %v2584 = vadd.f32 %v2471, %v2574
    %v2585 = vadd.f32 %v2472, %v2579
    %s2586 = scalar_lea.vmem [#allocation3], 4
    %v2587 = vld [vmem:[%s2586] ss:$3 sm:$0xff]
    %s2588 = scalar_lea.vmem [#allocation3], 28
    %v2589 = vld [vmem:[%s2588] ss:$3 sm:$0xff]
    %s2590 = scalar_lea.vmem [#allocation3], 56
    %v2591 = vld [vmem:[%s2590] ss:$3 sm:$0xff]
    %s2592 = scalar_lea.vmem [#allocation3], 80
    %v2593 = vld [vmem:[%s2592] ss:$3 sm:$0xff]
    %v2594 = vld [vmem:[%s4 + $0x10] sm:$0xf]
    %v2596 = vsel %vm1965, %v2587, 0
    %v2599 = vsel %vm1965, %v2589, 0
    %v2602 = vsel %vm1965, %v2591, 0
    %v2605 = vsel %vm1965, %v2593, 0
    %v2608 = vsel %vm414, %v2594, 0
    %2610 = vmatprep.subr.mxu0 0.0
    %2611 = vmatpush1.msra.mxu0 0.0
    %2612 = vmatprep.subr.mxu0 0.0
    %2613 = vmatpush1.msra.mxu0 0.0
    %2614 = vmatprep.subr.mxu0 0.0
    %2615 = vmatpush1.msra.mxu0 0.0
    %2616 = vmatprep.subr.mxu0 0.0
    %2617 = vmatpush1.msra.mxu0 0.0
    %2618 = vmatprep.subr.mxu0 0.0
    %2619 = vmatpush1.msra.mxu0 0.0
    %2620 = vmatprep.subr.mxu0 0.0
    %2621 = vmatpush1.msra.mxu0 0.0
    %2622 = vmatprep.subr.mxu0 0.0
    %2623 = vmatpush1.msra.mxu0 0.0
    %2624 = vmatprep.subr.mxu0 0.0
    %2625 = vmatpush1.msra.mxu0 0.0
    %2626 = vmatprep.subr.mxu0 0.0
    %2627 = vmatpush1.msra.mxu0 0.0
    %2628 = vmatprep.subr.mxu0 0.0
    %2629 = vmatpush1.msra.mxu0 0.0
    %2630 = vmatprep.subr.mxu0 0.0
    %2631 = vmatpush1.msra.mxu0 0.0
    %2632 = vmatprep.subr.mxu0 0.0
    %2633 = vmatpush1.msra.mxu0 0.0
    %2634 = vmatprep.subr.mxu0 0.0
    %2635 = vmatpush1.msra.mxu0 0.0
    %2636 = vmatprep.subr.mxu0 0.0
    %2637 = vmatpush1.msra.mxu0 0.0
    %2638 = vmatprep.subr.mxu0 0.0
    %2639 = vmatpush1.msra.mxu0 0.0
    %2640 = vmatprep.subr.mxu0 0.0
    %2641 = vmatpush1.msra.mxu0 %v2608
    %2642 = vmatprep.subr.mxu0 0.0
    %2643 = vmatpush2.msra.mxu0 0.0
    %2644 = vmatprep.subr.mxu0 0.0
    %2645 = vmatpush2.msra.mxu0 0.0
    %2646 = vmatprep.subr.mxu0 0.0
    %2647 = vmatpush2.msra.mxu0 0.0
    %2648 = vmatprep.subr.mxu0 0.0
    %2649 = vmatpush2.msra.mxu0 0.0
    %2650 = vmatprep.subr.mxu0 0.0
    %2651 = vmatpush2.msra.mxu0 0.0
    %2652 = vmatprep.subr.mxu0 0.0
    %2653 = vmatpush2.msra.mxu0 0.0
    %2654 = vmatprep.subr.mxu0 0.0
    %2655 = vmatpush2.msra.mxu0 0.0
    %2656 = vmatprep.subr.mxu0 0.0
    %2657 = vmatpush2.msra.mxu0 0.0
    %2658 = vmatprep.subr.mxu0 0.0
    %2659 = vmatpush2.msra.mxu0 0.0
    %2660 = vmatprep.subr.mxu0 0.0
    %2661 = vmatpush2.msra.mxu0 0.0
    %2662 = vmatprep.subr.mxu0 0.0
    %2663 = vmatpush2.msra.mxu0 0.0
    %2664 = vmatprep.subr.mxu0 0.0
    %2665 = vmatpush2.msra.mxu0 0.0
    %2666 = vmatprep.subr.mxu0 0.0
    %2667 = vmatpush2.msra.mxu0 0.0
    %2668 = vmatprep.subr.mxu0 0.0
    %2669 = vmatpush2.msra.mxu0 0.0
    %2670 = vmatprep.subr.mxu0 0.0
    %2671 = vmatpush2.msra.mxu0 0.0
    %2672 = vmatprep.subr.mxu0 0.0
    %2673 = vmatpush2.msra.mxu0 0.0
    %2674 = vmatprep.mubr.f32.mxu0 0.0
    %2675 = vmatmul.mubr.f32.gmra.mxu0 %v2596
    %v2676 = vpop.f32.mrf.mxu0
    %v2677 = vadd.f32 0.0, %v2676
    %v2678 = vpop.f32.mrf.mxu0
    %2679 = vmatprep.mubr.f32.mxu0 0.0
    %2680 = vmatmul.mubr.f32.gmra.mxu0 %v2599
    %v2681 = vpop.f32.mrf.mxu0
    %v2682 = vadd.f32 0.0, %v2681
    %v2683 = vpop.f32.mrf.mxu0
    %2684 = vmatprep.mubr.f32.mxu0 0.0
    %2685 = vmatmul.mubr.f32.gmra.mxu0 %v2602
    %v2686 = vpop.f32.mrf.mxu0
    %v2687 = vadd.f32 0.0, %v2686
    %v2688 = vpop.f32.mrf.mxu0
    %2689 = vmatprep.mubr.f32.mxu0 0.0
    %2690 = vmatmul.mubr.f32.gmra.mxu0 %v2605
    %v2691 = vpop.f32.mrf.mxu0
    %v2692 = vadd.f32 0.0, %v2691
    %v2693 = vpop.f32.mrf.mxu0
    %2694 = vdwg.mxu0
    %v2695 = vadd.f32 %v2582, %v2677
    %v2696 = vadd.f32 %v2583, %v2682
    %v2697 = vadd.f32 %v2584, %v2687
    %v2698 = vadd.f32 %v2585, %v2692
    %s2699 = scalar_lea.vmem [#allocation3], 5
    %v2700 = vld [vmem:[%s2699] ss:$3 sm:$0xff]
    %s2701 = scalar_lea.vmem [#allocation3], 29
    %v2702 = vld [vmem:[%s2701] ss:$3 sm:$0xff]
    %s2703 = scalar_lea.vmem [#allocation3], 57
    %v2704 = vld [vmem:[%s2703] ss:$3 sm:$0xff]
    %s2705 = scalar_lea.vmem [#allocation3], 81
    %v2706 = vld [vmem:[%s2705] ss:$3 sm:$0xff]
    %v2707 = vld [vmem:[%s4 + $0x14] sm:$0xf]
    %v2709 = vsel %vm1965, %v2700, 0
    %v2712 = vsel %vm1965, %v2702, 0
    %v2715 = vsel %vm1965, %v2704, 0
    %v2718 = vsel %vm1965, %v2706, 0
    %v2721 = vsel %vm414, %v2707, 0
    %2723 = vmatprep.subr.mxu0 0.0
    %2724 = vmatpush1.msra.mxu0 0.0
    %2725 = vmatprep.subr.mxu0 0.0
    %2726 = vmatpush1.msra.mxu0 0.0
    %2727 = vmatprep.subr.mxu0 0.0
    %2728 = vmatpush1.msra.mxu0 0.0
    %2729 = vmatprep.subr.mxu0 0.0
    %2730 = vmatpush1.msra.mxu0 0.0
    %2731 = vmatprep.subr.mxu0 0.0
    %2732 = vmatpush1.msra.mxu0 0.0
    %2733 = vmatprep.subr.mxu0 0.0
    %2734 = vmatpush1.msra.mxu0 0.0
    %2735 = vmatprep.subr.mxu0 0.0
    %2736 = vmatpush1.msra.mxu0 0.0
    %2737 = vmatprep.subr.mxu0 0.0
    %2738 = vmatpush1.msra.mxu0 0.0
    %2739 = vmatprep.subr.mxu0 0.0
    %2740 = vmatpush1.msra.mxu0 0.0
    %2741 = vmatprep.subr.mxu0 0.0
    %2742 = vmatpush1.msra.mxu0 0.0
    %2743 = vmatprep.subr.mxu0 0.0
    %2744 = vmatpush1.msra.mxu0 0.0
    %2745 = vmatprep.subr.mxu0 0.0
    %2746 = vmatpush1.msra.mxu0 0.0
    %2747 = vmatprep.subr.mxu0 0.0
    %2748 = vmatpush1.msra.mxu0 0.0
    %2749 = vmatprep.subr.mxu0 0.0
    %2750 = vmatpush1.msra.mxu0 0.0
    %2751 = vmatprep.subr.mxu0 0.0
    %2752 = vmatpush1.msra.mxu0 0.0
    %2753 = vmatprep.subr.mxu0 0.0
    %2754 = vmatpush1.msra.mxu0 %v2721
    %2755 = vmatprep.subr.mxu0 0.0
    %2756 = vmatpush2.msra.mxu0 0.0
    %2757 = vmatprep.subr.mxu0 0.0
    %2758 = vmatpush2.msra.mxu0 0.0
    %2759 = vmatprep.subr.mxu0 0.0
    %2760 = vmatpush2.msra.mxu0 0.0
    %2761 = vmatprep.subr.mxu0 0.0
    %2762 = vmatpush2.msra.mxu0 0.0
    %2763 = vmatprep.subr.mxu0 0.0
    %2764 = vmatpush2.msra.mxu0 0.0
    %2765 = vmatprep.subr.mxu0 0.0
    %2766 = vmatpush2.msra.mxu0 0.0
    %2767 = vmatprep.subr.mxu0 0.0
    %2768 = vmatpush2.msra.mxu0 0.0
    %2769 = vmatprep.subr.mxu0 0.0
    %2770 = vmatpush2.msra.mxu0 0.0
    %2771 = vmatprep.subr.mxu0 0.0
    %2772 = vmatpush2.msra.mxu0 0.0
    %2773 = vmatprep.subr.mxu0 0.0
    %2774 = vmatpush2.msra.mxu0 0.0
    %2775 = vmatprep.subr.mxu0 0.0
    %2776 = vmatpush2.msra.mxu0 0.0
    %2777 = vmatprep.subr.mxu0 0.0
    %2778 = vmatpush2.msra.mxu0 0.0
    %2779 = vmatprep.subr.mxu0 0.0
    %2780 = vmatpush2.msra.mxu0 0.0
    %2781 = vmatprep.subr.mxu0 0.0
    %2782 = vmatpush2.msra.mxu0 0.0
    %2783 = vmatprep.subr.mxu0 0.0
    %2784 = vmatpush2.msra.mxu0 0.0
    %2785 = vmatprep.subr.mxu0 0.0
    %2786 = vmatpush2.msra.mxu0 0.0
    %2787 = vmatprep.mubr.f32.mxu0 0.0
    %2788 = vmatmul.mubr.f32.gmra.mxu0 %v2709
    %v2789 = vpop.f32.mrf.mxu0
    %v2790 = vadd.f32 0.0, %v2789
    %v2791 = vpop.f32.mrf.mxu0
    %2792 = vmatprep.mubr.f32.mxu0 0.0
    %2793 = vmatmul.mubr.f32.gmra.mxu0 %v2712
    %v2794 = vpop.f32.mrf.mxu0
    %v2795 = vadd.f32 0.0, %v2794
    %v2796 = vpop.f32.mrf.mxu0
    %2797 = vmatprep.mubr.f32.mxu0 0.0
    %2798 = vmatmul.mubr.f32.gmra.mxu0 %v2715
    %v2799 = vpop.f32.mrf.mxu0
    %v2800 = vadd.f32 0.0, %v2799
    %v2801 = vpop.f32.mrf.mxu0
    %2802 = vmatprep.mubr.f32.mxu0 0.0
    %2803 = vmatmul.mubr.f32.gmra.mxu0 %v2718
    %v2804 = vpop.f32.mrf.mxu0
    %v2805 = vadd.f32 0.0, %v2804
    %v2806 = vpop.f32.mrf.mxu0
    %2807 = vdwg.mxu0
    %v2808 = vadd.f32 %v2695, %v2790
    %v2809 = vadd.f32 %v2696, %v2795
    %v2810 = vadd.f32 %v2697, %v2800
    %v2811 = vadd.f32 %v2698, %v2805
    %s2812 = scalar_lea.vmem [#allocation3], 6
    %v2813 = vld [vmem:[%s2812] ss:$3 sm:$0xff]
    %s2814 = scalar_lea.vmem [#allocation3], 30
    %v2815 = vld [vmem:[%s2814] ss:$3 sm:$0xff]
    %s2816 = scalar_lea.vmem [#allocation3], 58
    %v2817 = vld [vmem:[%s2816] ss:$3 sm:$0xff]
    %s2818 = scalar_lea.vmem [#allocation3], 82
    %v2819 = vld [vmem:[%s2818] ss:$3 sm:$0xff]
    %v2820 = vld [vmem:[%s4 + $0x18] sm:$0xf]
    %v2822 = vsel %vm1965, %v2813, 0
    %v2825 = vsel %vm1965, %v2815, 0
    %v2828 = vsel %vm1965, %v2817, 0
    %v2831 = vsel %vm1965, %v2819, 0
    %v2834 = vsel %vm414, %v2820, 0
    %2836 = vmatprep.subr.mxu0 0.0
    %2837 = vmatpush1.msra.mxu0 0.0
    %2838 = vmatprep.subr.mxu0 0.0
    %2839 = vmatpush1.msra.mxu0 0.0
    %2840 = vmatprep.subr.mxu0 0.0
    %2841 = vmatpush1.msra.mxu0 0.0
    %2842 = vmatprep.subr.mxu0 0.0
    %2843 = vmatpush1.msra.mxu0 0.0
    %2844 = vmatprep.subr.mxu0 0.0
    %2845 = vmatpush1.msra.mxu0 0.0
    %2846 = vmatprep.subr.mxu0 0.0
    %2847 = vmatpush1.msra.mxu0 0.0
    %2848 = vmatprep.subr.mxu0 0.0
    %2849 = vmatpush1.msra.mxu0 0.0
    %2850 = vmatprep.subr.mxu0 0.0
    %2851 = vmatpush1.msra.mxu0 0.0
    %2852 = vmatprep.subr.mxu0 0.0
    %2853 = vmatpush1.msra.mxu0 0.0
    %2854 = vmatprep.subr.mxu0 0.0
    %2855 = vmatpush1.msra.mxu0 0.0
    %2856 = vmatprep.subr.mxu0 0.0
    %2857 = vmatpush1.msra.mxu0 0.0
    %2858 = vmatprep.subr.mxu0 0.0
    %2859 = vmatpush1.msra.mxu0 0.0
    %2860 = vmatprep.subr.mxu0 0.0
    %2861 = vmatpush1.msra.mxu0 0.0
    %2862 = vmatprep.subr.mxu0 0.0
    %2863 = vmatpush1.msra.mxu0 0.0
    %2864 = vmatprep.subr.mxu0 0.0
    %2865 = vmatpush1.msra.mxu0 0.0
    %2866 = vmatprep.subr.mxu0 0.0
    %2867 = vmatpush1.msra.mxu0 %v2834
    %2868 = vmatprep.subr.mxu0 0.0
    %2869 = vmatpush2.msra.mxu0 0.0
    %2870 = vmatprep.subr.mxu0 0.0
    %2871 = vmatpush2.msra.mxu0 0.0
    %2872 = vmatprep.subr.mxu0 0.0
    %2873 = vmatpush2.msra.mxu0 0.0
    %2874 = vmatprep.subr.mxu0 0.0
    %2875 = vmatpush2.msra.mxu0 0.0
    %2876 = vmatprep.subr.mxu0 0.0
    %2877 = vmatpush2.msra.mxu0 0.0
    %2878 = vmatprep.subr.mxu0 0.0
    %2879 = vmatpush2.msra.mxu0 0.0
    %2880 = vmatprep.subr.mxu0 0.0
    %2881 = vmatpush2.msra.mxu0 0.0
    %2882 = vmatprep.subr.mxu0 0.0
    %2883 = vmatpush2.msra.mxu0 0.0
    %2884 = vmatprep.subr.mxu0 0.0
    %2885 = vmatpush2.msra.mxu0 0.0
    %2886 = vmatprep.subr.mxu0 0.0
    %2887 = vmatpush2.msra.mxu0 0.0
    %2888 = vmatprep.subr.mxu0 0.0
    %2889 = vmatpush2.msra.mxu0 0.0
    %2890 = vmatprep.subr.mxu0 0.0
    %2891 = vmatpush2.msra.mxu0 0.0
    %2892 = vmatprep.subr.mxu0 0.0
    %2893 = vmatpush2.msra.mxu0 0.0
    %2894 = vmatprep.subr.mxu0 0.0
    %2895 = vmatpush2.msra.mxu0 0.0
    %2896 = vmatprep.subr.mxu0 0.0
    %2897 = vmatpush2.msra.mxu0 0.0
    %2898 = vmatprep.subr.mxu0 0.0
    %2899 = vmatpush2.msra.mxu0 0.0
    %2900 = vmatprep.mubr.f32.mxu0 0.0
    %2901 = vmatmul.mubr.f32.gmra.mxu0 %v2822
    %v2902 = vpop.f32.mrf.mxu0
    %v2903 = vadd.f32 0.0, %v2902
    %v2904 = vpop.f32.mrf.mxu0
    %2905 = vmatprep.mubr.f32.mxu0 0.0
    %2906 = vmatmul.mubr.f32.gmra.mxu0 %v2825
    %v2907 = vpop.f32.mrf.mxu0
    %v2908 = vadd.f32 0.0, %v2907
    %v2909 = vpop.f32.mrf.mxu0
    %2910 = vmatprep.mubr.f32.mxu0 0.0
    %2911 = vmatmul.mubr.f32.gmra.mxu0 %v2828
    %v2912 = vpop.f32.mrf.mxu0
    %v2913 = vadd.f32 0.0, %v2912
    %v2914 = vpop.f32.mrf.mxu0
    %2915 = vmatprep.mubr.f32.mxu0 0.0
    %2916 = vmatmul.mubr.f32.gmra.mxu0 %v2831
    %v2917 = vpop.f32.mrf.mxu0
    %v2918 = vadd.f32 0.0, %v2917
    %v2919 = vpop.f32.mrf.mxu0
    %2920 = vdwg.mxu0
    %v2921 = vadd.f32 %v2808, %v2903
    %v2922 = vadd.f32 %v2809, %v2908
    %v2923 = vadd.f32 %v2810, %v2913
    %v2924 = vadd.f32 %v2811, %v2918
    %vm2925 = vcmask 130048
    %v2926 = vsel %vm2925, %v2921, 0.0
    %v2927 = vsel %vm2925, %v2922, 0.0
    %v2928 = vadd.f32 %v2926, %v2927
    %v2929 = vsel %vm2925, %v2923, 0.0
    %v2930 = vadd.f32 %v2928, %v2929
    %v2931 = vsel %vm2925, %v2924, 0.0
    %v2932 = vadd.f32 %v2930, %v2931
    %v2933 = vrot.slane %v2932, 4
    %v2934 = vadd.f32 %v2932, %v2933
    %v2935 = vrot.slane %v2934, 2
    %v2936 = vadd.f32 %v2934, %v2935
    %v2937 = vrot.slane %v2936, 1
    %v2938 = vadd.f32 %v2936, %v2937
    %v2939 = vrcp.pop 32.0
    %v2940 = vmul.f32 %v2938, %v2939
    %v2941 = vsub.f32 %v2921, %v2940
    %v2942 = vsub.f32 %v2922, %v2940
    %v2943 = vsub.f32 %v2923, %v2940
    %v2944 = vsub.f32 %v2924, %v2940
    %v2945 = vmul.f32 %v2941, %v2941
    %v2946 = vmul.f32 %v2942, %v2942
    %v2947 = vmul.f32 %v2943, %v2943
    %v2948 = vmul.f32 %v2944, %v2944
    %v2949 = vsel %vm2925, %v2945, 0.0
    %v2950 = vsel %vm2925, %v2946, 0.0
    %v2951 = vadd.f32 %v2949, %v2950
    %v2952 = vsel %vm2925, %v2947, 0.0
    %v2953 = vadd.f32 %v2951, %v2952
    %v2954 = vsel %vm2925, %v2948, 0.0
    %v2955 = vadd.f32 %v2953, %v2954
    %v2956 = vrot.slane %v2955, 4
    %v2957 = vadd.f32 %v2955, %v2956
    %v2958 = vrot.slane %v2957, 2
    %v2959 = vadd.f32 %v2957, %v2958
    %v2960 = vrot.slane %v2959, 1
    %v2961 = vadd.f32 %v2959, %v2960
    %v2962 = vmul.f32 %v2961, %v2939
    %v2963 = vadd.f32 %v2962, 1e-05
    %v2964 = vrsqrt.pop %v2963
    %v2965 = vmul.f32 %v2941, %v2964
    %v2966 = vmul.f32 %v2942, %v2964
    %v2967 = vmul.f32 %v2943, %v2964
    %v2968 = vmul.f32 %v2944, %v2964
    %v2969 = vld [vmem:[%s5] sm:$0x1]
    %v2971 = vlaneseq
    %v2972 = vshrl.u32 %v2971, 7
    %v2973 = vsub.s32 0, %v2972
    %v2974 = vrot.slane %v2969, %v2973
    %v2976 = vmul.f32 %v2965, %v2974
    %v2977 = vmul.f32 %v2966, %v2974
    %v2978 = vmul.f32 %v2967, %v2974
    %v2979 = vmul.f32 %v2968, %v2974
    %v2980 = vld [vmem:[%s6] sm:$0x1]
    %v2982 = vlaneseq
    %v2983 = vshrl.u32 %v2982, 7
    %v2984 = vsub.s32 0, %v2983
    %v2985 = vrot.slane %v2980, %v2984
    %v2987 = vadd.f32 %v2976, %v2985
    %v2988 = vadd.f32 %v2977, %v2985
    %v2989 = vadd.f32 %v2978, %v2985
    %v2990 = vadd.f32 %v2979, %v2985
    %v2991 = vmax.f32 %v2987, 0.0
    %v2992 = vmax.f32 %v2988, 0.0
    %v2993 = vmax.f32 %v2989, 0.0
    %v2994 = vmax.f32 %v2990, 0.0
    %v2996 = vrot.slane %v2993, 7
    %v2998 = vsel %vm2128, %v2991, %v2996
    %2999 = vst.msk [vmem:[#allocation4] sm:$0xff] %vm2925, %v2991
    %3000 = vst.msk [vmem:[#allocation4 + $0x8] sm:$0xff] %vm2925, %v2992
    %3001 = vst.msk [vmem:[#allocation4 + $0x10] sm:$0xff] %vm2925, %v2993
    %3002 = vst.msk [vmem:[#allocation4 + $0x18] sm:$0xff] %vm2925, %v2994
    %v3003 = vld [vmem:[#allocation4] ss:$2 sm:$0x3f]
    %s3004 = scalar_lea.vmem [#allocation4], 16
    %v3005 = vld [vmem:[%s3004] ss:$2 sm:$0x3f]
    %v3007 = vrot.slane %v3005, 2
    %vm3009 = vcmask 1045504
    %v3010 = vsel %vm3009, %v3003, %v3007
    %v3011 = vld [vmem:[%s7] sm:$0xff]
    %v3012 = vld [vmem:[%s7 + $0x8] sm:$0xff]
    %s3013 = scalar_lea.vmem [#allocation4], 1
    %v3014 = vld [vmem:[%s3013] ss:$2 sm:$0x3f]
    %s3015 = scalar_lea.vmem [#allocation4], 17
    %v3016 = vld [vmem:[%s3015] ss:$2 sm:$0x3f]
    %v3018 = vrot.slane %v3016, 2
    %v3020 = vsel %vm3009, %v3014, %v3018
    %v3021 = vld [vmem:[%s7 + $0x10] sm:$0xff]
    %v3022 = vld [vmem:[%s7 + $0x18] sm:$0xff]
    %v3024 = vsel %vm2925, %v3020, 0
    %v3026 = vsel %vm2925, %v3018, 0
    %3028 = vmatprep.subr.mxu0 0.0
    %3029 = vmatpush1.msra.mxu0 0.0
    %3030 = vmatprep.subr.mxu0 0.0
    %3031 = vmatpush1.msra.mxu0 0.0
    %3032 = vmatprep.subr.mxu0 0.0
    %3033 = vmatpush1.msra.mxu0 0.0
    %3034 = vmatprep.subr.mxu0 0.0
    %3035 = vmatpush1.msra.mxu0 0.0
    %3036 = vmatprep.subr.mxu0 0.0
    %3037 = vmatpush1.msra.mxu0 0.0
    %3038 = vmatprep.subr.mxu0 0.0
    %3039 = vmatpush1.msra.mxu0 0.0
    %3040 = vmatprep.subr.mxu0 0.0
    %3041 = vmatpush1.msra.mxu0 0.0
    %3042 = vmatprep.subr.mxu0 0.0
    %3043 = vmatpush1.msra.mxu0 0.0
    %3044 = vmatprep.subr.mxu0 0.0
    %3045 = vmatpush1.msra.mxu0 0.0
    %3046 = vmatprep.subr.mxu0 0.0
    %3047 = vmatpush1.msra.mxu0 0.0
    %3048 = vmatprep.subr.mxu0 0.0
    %3049 = vmatpush1.msra.mxu0 0.0
    %3050 = vmatprep.subr.mxu0 0.0
    %3051 = vmatpush1.msra.mxu0 0.0
    %3052 = vmatprep.subr.mxu0 0.0
    %3053 = vmatpush1.msra.mxu0 0.0
    %3054 = vmatprep.subr.mxu0 0.0
    %3055 = vmatpush1.msra.mxu0 0.0
    %3056 = vmatprep.subr.mxu0 0.0
    %3057 = vmatpush1.msra.mxu0 %v3022
    %3058 = vmatprep.subr.mxu0 0.0
    %3059 = vmatpush1.msra.mxu0 %v3021
    %3060 = vmatprep.subr.mxu0 0.0
    %3061 = vmatpush2.msra.mxu0 0.0
    %3062 = vmatprep.subr.mxu0 0.0
    %3063 = vmatpush2.msra.mxu0 0.0
    %3064 = vmatprep.subr.mxu0 0.0
    %3065 = vmatpush2.msra.mxu0 0.0
    %3066 = vmatprep.subr.mxu0 0.0
    %3067 = vmatpush2.msra.mxu0 0.0
    %3068 = vmatprep.subr.mxu0 0.0
    %3069 = vmatpush2.msra.mxu0 0.0
    %3070 = vmatprep.subr.mxu0 0.0
    %3071 = vmatpush2.msra.mxu0 0.0
    %3072 = vmatprep.subr.mxu0 0.0
    %3073 = vmatpush2.msra.mxu0 0.0
    %3074 = vmatprep.subr.mxu0 0.0
    %3075 = vmatpush2.msra.mxu0 0.0
    %3076 = vmatprep.subr.mxu0 0.0
    %3077 = vmatpush2.msra.mxu0 0.0
    %3078 = vmatprep.subr.mxu0 0.0
    %3079 = vmatpush2.msra.mxu0 0.0
    %3080 = vmatprep.subr.mxu0 0.0
    %3081 = vmatpush2.msra.mxu0 0.0
    %3082 = vmatprep.subr.mxu0 0.0
    %3083 = vmatpush2.msra.mxu0 0.0
    %3084 = vmatprep.subr.mxu0 0.0
    %3085 = vmatpush2.msra.mxu0 0.0
    %3086 = vmatprep.subr.mxu0 0.0
    %3087 = vmatpush2.msra.mxu0 0.0
    %3088 = vmatprep.subr.mxu0 0.0
    %3089 = vmatpush2.msra.mxu0 0.0
    %3090 = vmatprep.subr.mxu0 0.0
    %3091 = vmatpush2.msra.mxu0 0.0
    %3092 = vmatprep.mubr.f32.mxu0 0.0
    %3093 = vmatmul.mubr.f32.gmra.mxu0 %v3024
    %v3094 = vpop.f32.mrf.mxu0
    %v3095 = vadd.f32 0.0, %v3094
    %v3096 = vpop.f32.mrf.mxu0
    %3097 = vmatprep.mubr.f32.mxu0 0.0
    %3098 = vmatmul.mubr.f32.gmra.mxu0 %v3026
    %v3099 = vpop.f32.mrf.mxu0
    %v3100 = vadd.f32 0.0, %v3099
    %v3101 = vpop.f32.mrf.mxu0
    %3102 = vdwg.mxu0
    %v3104 = vsel %vm2925, %v3010, 0
    %v3106 = vsel %vm2925, %v3007, 0
    %3108 = vmatprep.subr.mxu0 0.0
    %3109 = vmatpush1.msra.mxu0 0.0
    %3110 = vmatprep.subr.mxu0 0.0
    %3111 = vmatpush1.msra.mxu0 0.0
    %3112 = vmatprep.subr.mxu0 0.0
    %3113 = vmatpush1.msra.mxu0 0.0
    %3114 = vmatprep.subr.mxu0 0.0
    %3115 = vmatpush1.msra.mxu0 0.0
    %3116 = vmatprep.subr.mxu0 0.0
    %3117 = vmatpush1.msra.mxu0 0.0
    %3118 = vmatprep.subr.mxu0 0.0
    %3119 = vmatpush1.msra.mxu0 0.0
    %3120 = vmatprep.subr.mxu0 0.0
    %3121 = vmatpush1.msra.mxu0 0.0
    %3122 = vmatprep.subr.mxu0 0.0
    %3123 = vmatpush1.msra.mxu0 0.0
    %3124 = vmatprep.subr.mxu0 0.0
    %3125 = vmatpush1.msra.mxu0 0.0
    %3126 = vmatprep.subr.mxu0 0.0
    %3127 = vmatpush1.msra.mxu0 0.0
    %3128 = vmatprep.subr.mxu0 0.0
    %3129 = vmatpush1.msra.mxu0 0.0
    %3130 = vmatprep.subr.mxu0 0.0
    %3131 = vmatpush1.msra.mxu0 0.0
    %3132 = vmatprep.subr.mxu0 0.0
    %3133 = vmatpush1.msra.mxu0 0.0
    %3134 = vmatprep.subr.mxu0 0.0
    %3135 = vmatpush1.msra.mxu0 0.0
    %3136 = vmatprep.subr.mxu0 0.0
    %3137 = vmatpush1.msra.mxu0 %v3012
    %3138 = vmatprep.subr.mxu0 0.0
    %3139 = vmatpush1.msra.mxu0 %v3011
    %3140 = vmatprep.subr.mxu0 0.0
    %3141 = vmatpush2.msra.mxu0 0.0
    %3142 = vmatprep.subr.mxu0 0.0
    %3143 = vmatpush2.msra.mxu0 0.0
    %3144 = vmatprep.subr.mxu0 0.0
    %3145 = vmatpush2.msra.mxu0 0.0
    %3146 = vmatprep.subr.mxu0 0.0
    %3147 = vmatpush2.msra.mxu0 0.0
    %3148 = vmatprep.subr.mxu0 0.0
    %3149 = vmatpush2.msra.mxu0 0.0
    %3150 = vmatprep.subr.mxu0 0.0
    %3151 = vmatpush2.msra.mxu0 0.0
    %3152 = vmatprep.subr.mxu0 0.0
    %3153 = vmatpush2.msra.mxu0 0.0
    %3154 = vmatprep.subr.mxu0 0.0
    %3155 = vmatpush2.msra.mxu0 0.0
    %3156 = vmatprep.subr.mxu0 0.0
    %3157 = vmatpush2.msra.mxu0 0.0
    %3158 = vmatprep.subr.mxu0 0.0
    %3159 = vmatpush2.msra.mxu0 0.0
    %3160 = vmatprep.subr.mxu0 0.0
    %3161 = vmatpush2.msra.mxu0 0.0
    %3162 = vmatprep.subr.mxu0 0.0
    %3163 = vmatpush2.msra.mxu0 0.0
    %3164 = vmatprep.subr.mxu0 0.0
    %3165 = vmatpush2.msra.mxu0 0.0
    %3166 = vmatprep.subr.mxu0 0.0
    %3167 = vmatpush2.msra.mxu0 0.0
    %3168 = vmatprep.subr.mxu0 0.0
    %3169 = vmatpush2.msra.mxu0 0.0
    %3170 = vmatprep.subr.mxu0 0.0
    %3171 = vmatpush2.msra.mxu0 0.0
    %3172 = vmatprep.mubr.f32.mxu0 0.0
    %3173 = vmatmul.mubr.f32.gmra.mxu0 %v3104
    %v3174 = vpop.f32.mrf.mxu0
    %v3175 = vadd.f32 %v3095, %v3174
    %v3176 = vpop.f32.mrf.mxu0
    %3177 = vmatprep.mubr.f32.mxu0 0.0
    %3178 = vmatmul.mubr.f32.gmra.mxu0 %v3106
    %v3179 = vpop.f32.mrf.mxu0
    %v3180 = vadd.f32 %v3100, %v3179
    %v3181 = vpop.f32.mrf.mxu0
    %3182 = vdwg.mxu0
    %s3183 = scalar_lea.vmem [#allocation4], 2
    %v3184 = vld [vmem:[%s3183] ss:$2 sm:$0x3f]
    %s3185 = scalar_lea.vmem [#allocation4], 18
    %v3186 = vld [vmem:[%s3185] ss:$2 sm:$0x3f]
    %v3188 = vrot.slane %v3186, 2
    %v3190 = vsel %vm3009, %v3184, %v3188
    %v3191 = vld [vmem:[%s7 + $0x20] sm:$0xff]
    %v3192 = vld [vmem:[%s7 + $0x28] sm:$0xff]
    %v3194 = vsel %vm2925, %v3190, 0
    %v3196 = vsel %vm2925, %v3188, 0
    %3198 = vmatprep.subr.mxu0 0.0
    %3199 = vmatpush1.msra.mxu0 0.0
    %3200 = vmatprep.subr.mxu0 0.0
    %3201 = vmatpush1.msra.mxu0 0.0
    %3202 = vmatprep.subr.mxu0 0.0
    %3203 = vmatpush1.msra.mxu0 0.0
    %3204 = vmatprep.subr.mxu0 0.0
    %3205 = vmatpush1.msra.mxu0 0.0
    %3206 = vmatprep.subr.mxu0 0.0
    %3207 = vmatpush1.msra.mxu0 0.0
    %3208 = vmatprep.subr.mxu0 0.0
    %3209 = vmatpush1.msra.mxu0 0.0
    %3210 = vmatprep.subr.mxu0 0.0
    %3211 = vmatpush1.msra.mxu0 0.0
    %3212 = vmatprep.subr.mxu0 0.0
    %3213 = vmatpush1.msra.mxu0 0.0
    %3214 = vmatprep.subr.mxu0 0.0
    %3215 = vmatpush1.msra.mxu0 0.0
    %3216 = vmatprep.subr.mxu0 0.0
    %3217 = vmatpush1.msra.mxu0 0.0
    %3218 = vmatprep.subr.mxu0 0.0
    %3219 = vmatpush1.msra.mxu0 0.0
    %3220 = vmatprep.subr.mxu0 0.0
    %3221 = vmatpush1.msra.mxu0 0.0
    %3222 = vmatprep.subr.mxu0 0.0
    %3223 = vmatpush1.msra.mxu0 0.0
    %3224 = vmatprep.subr.mxu0 0.0
    %3225 = vmatpush1.msra.mxu0 0.0
    %3226 = vmatprep.subr.mxu0 0.0
    %3227 = vmatpush1.msra.mxu0 %v3192
    %3228 = vmatprep.subr.mxu0 0.0
    %3229 = vmatpush1.msra.mxu0 %v3191
    %3230 = vmatprep.subr.mxu0 0.0
    %3231 = vmatpush2.msra.mxu0 0.0
    %3232 = vmatprep.subr.mxu0 0.0
    %3233 = vmatpush2.msra.mxu0 0.0
    %3234 = vmatprep.subr.mxu0 0.0
    %3235 = vmatpush2.msra.mxu0 0.0
    %3236 = vmatprep.subr.mxu0 0.0
    %3237 = vmatpush2.msra.mxu0 0.0
    %3238 = vmatprep.subr.mxu0 0.0
    %3239 = vmatpush2.msra.mxu0 0.0
    %3240 = vmatprep.subr.mxu0 0.0
    %3241 = vmatpush2.msra.mxu0 0.0
    %3242 = vmatprep.subr.mxu0 0.0
    %3243 = vmatpush2.msra.mxu0 0.0
    %3244 = vmatprep.subr.mxu0 0.0
    %3245 = vmatpush2.msra.mxu0 0.0
    %3246 = vmatprep.subr.mxu0 0.0
    %3247 = vmatpush2.msra.mxu0 0.0
    %3248 = vmatprep.subr.mxu0 0.0
    %3249 = vmatpush2.msra.mxu0 0.0
    %3250 = vmatprep.subr.mxu0 0.0
    %3251 = vmatpush2.msra.mxu0 0.0
    %3252 = vmatprep.subr.mxu0 0.0
    %3253 = vmatpush2.msra.mxu0 0.0
    %3254 = vmatprep.subr.mxu0 0.0
    %3255 = vmatpush2.msra.mxu0 0.0
    %3256 = vmatprep.subr.mxu0 0.0
    %3257 = vmatpush2.msra.mxu0 0.0
    %3258 = vmatprep.subr.mxu0 0.0
    %3259 = vmatpush2.msra.mxu0 0.0
    %3260 = vmatprep.subr.mxu0 0.0
    %3261 = vmatpush2.msra.mxu0 0.0
    %3262 = vmatprep.mubr.f32.mxu0 0.0
    %3263 = vmatmul.mubr.f32.gmra.mxu0 %v3194
    %v3264 = vpop.f32.mrf.mxu0
    %v3265 = vadd.f32 0.0, %v3264
    %v3266 = vpop.f32.mrf.mxu0
    %3267 = vmatprep.mubr.f32.mxu0 0.0
    %3268 = vmatmul.mubr.f32.gmra.mxu0 %v3196
    %v3269 = vpop.f32.mrf.mxu0
    %v3270 = vadd.f32 0.0, %v3269
    %v3271 = vpop.f32.mrf.mxu0
    %3272 = vdwg.mxu0
    %v3273 = vadd.f32 %v3175, %v3265
    %v3274 = vadd.f32 %v3180, %v3270
    %s3275 = scalar_lea.vmem [#allocation4], 3
    %v3276 = vld [vmem:[%s3275] ss:$2 sm:$0x3f]
    %s3277 = scalar_lea.vmem [#allocation4], 19
    %v3278 = vld [vmem:[%s3277] ss:$2 sm:$0x3f]
    %v3280 = vrot.slane %v3278, 2
    %v3282 = vsel %vm3009, %v3276, %v3280
    %v3283 = vld [vmem:[%s7 + $0x30] sm:$0xff]
    %v3284 = vld [vmem:[%s7 + $0x38] sm:$0xff]
    %v3286 = vsel %vm2925, %v3282, 0
    %v3288 = vsel %vm2925, %v3280, 0
    %3290 = vmatprep.subr.mxu0 0.0
    %3291 = vmatpush1.msra.mxu0 0.0
    %3292 = vmatprep.subr.mxu0 0.0
    %3293 = vmatpush1.msra.mxu0 0.0
    %3294 = vmatprep.subr.mxu0 0.0
    %3295 = vmatpush1.msra.mxu0 0.0
    %3296 = vmatprep.subr.mxu0 0.0
    %3297 = vmatpush1.msra.mxu0 0.0
    %3298 = vmatprep.subr.mxu0 0.0
    %3299 = vmatpush1.msra.mxu0 0.0
    %3300 = vmatprep.subr.mxu0 0.0
    %3301 = vmatpush1.msra.mxu0 0.0
    %3302 = vmatprep.subr.mxu0 0.0
    %3303 = vmatpush1.msra.mxu0 0.0
    %3304 = vmatprep.subr.mxu0 0.0
    %3305 = vmatpush1.msra.mxu0 0.0
    %3306 = vmatprep.subr.mxu0 0.0
    %3307 = vmatpush1.msra.mxu0 0.0
    %3308 = vmatprep.subr.mxu0 0.0
    %3309 = vmatpush1.msra.mxu0 0.0
    %3310 = vmatprep.subr.mxu0 0.0
    %3311 = vmatpush1.msra.mxu0 0.0
    %3312 = vmatprep.subr.mxu0 0.0
    %3313 = vmatpush1.msra.mxu0 0.0
    %3314 = vmatprep.subr.mxu0 0.0
    %3315 = vmatpush1.msra.mxu0 0.0
    %3316 = vmatprep.subr.mxu0 0.0
    %3317 = vmatpush1.msra.mxu0 0.0
    %3318 = vmatprep.subr.mxu0 0.0
    %3319 = vmatpush1.msra.mxu0 %v3284
    %3320 = vmatprep.subr.mxu0 0.0
    %3321 = vmatpush1.msra.mxu0 %v3283
    %3322 = vmatprep.subr.mxu0 0.0
    %3323 = vmatpush2.msra.mxu0 0.0
    %3324 = vmatprep.subr.mxu0 0.0
    %3325 = vmatpush2.msra.mxu0 0.0
    %3326 = vmatprep.subr.mxu0 0.0
    %3327 = vmatpush2.msra.mxu0 0.0
    %3328 = vmatprep.subr.mxu0 0.0
    %3329 = vmatpush2.msra.mxu0 0.0
    %3330 = vmatprep.subr.mxu0 0.0
    %3331 = vmatpush2.msra.mxu0 0.0
    %3332 = vmatprep.subr.mxu0 0.0
    %3333 = vmatpush2.msra.mxu0 0.0
    %3334 = vmatprep.subr.mxu0 0.0
    %3335 = vmatpush2.msra.mxu0 0.0
    %3336 = vmatprep.subr.mxu0 0.0
    %3337 = vmatpush2.msra.mxu0 0.0
    %3338 = vmatprep.subr.mxu0 0.0
    %3339 = vmatpush2.msra.mxu0 0.0
    %3340 = vmatprep.subr.mxu0 0.0
    %3341 = vmatpush2.msra.mxu0 0.0
    %3342 = vmatprep.subr.mxu0 0.0
    %3343 = vmatpush2.msra.mxu0 0.0
    %3344 = vmatprep.subr.mxu0 0.0
    %3345 = vmatpush2.msra.mxu0 0.0
    %3346 = vmatprep.subr.mxu0 0.0
    %3347 = vmatpush2.msra.mxu0 0.0
    %3348 = vmatprep.subr.mxu0 0.0
    %3349 = vmatpush2.msra.mxu0 0.0
    %3350 = vmatprep.subr.mxu0 0.0
    %3351 = vmatpush2.msra.mxu0 0.0
    %3352 = vmatprep.subr.mxu0 0.0
    %3353 = vmatpush2.msra.mxu0 0.0
    %3354 = vmatprep.mubr.f32.mxu0 0.0
    %3355 = vmatmul.mubr.f32.gmra.mxu0 %v3286
    %v3356 = vpop.f32.mrf.mxu0
    %v3357 = vadd.f32 0.0, %v3356
    %v3358 = vpop.f32.mrf.mxu0
    %3359 = vmatprep.mubr.f32.mxu0 0.0
    %3360 = vmatmul.mubr.f32.gmra.mxu0 %v3288
    %v3361 = vpop.f32.mrf.mxu0
    %v3362 = vadd.f32 0.0, %v3361
    %v3363 = vpop.f32.mrf.mxu0
    %3364 = vdwg.mxu0
    %v3365 = vadd.f32 %v3273, %v3357
    %v3366 = vadd.f32 %v3274, %v3362
    %s3367 = scalar_lea.vmem [#allocation4], 4
    %v3368 = vld [vmem:[%s3367] ss:$2 sm:$0x3f]
    %s3369 = scalar_lea.vmem [#allocation4], 20
    %v3370 = vld [vmem:[%s3369] ss:$2 sm:$0x3f]
    %v3372 = vrot.slane %v3370, 2
    %v3374 = vsel %vm3009, %v3368, %v3372
    %v3375 = vld [vmem:[%s7 + $0x40] sm:$0xff]
    %v3376 = vld [vmem:[%s7 + $0x48] sm:$0xff]
    %v3378 = vsel %vm2925, %v3374, 0
    %v3380 = vsel %vm2925, %v3372, 0
    %3382 = vmatprep.subr.mxu0 0.0
    %3383 = vmatpush1.msra.mxu0 0.0
    %3384 = vmatprep.subr.mxu0 0.0
    %3385 = vmatpush1.msra.mxu0 0.0
    %3386 = vmatprep.subr.mxu0 0.0
    %3387 = vmatpush1.msra.mxu0 0.0
    %3388 = vmatprep.subr.mxu0 0.0
    %3389 = vmatpush1.msra.mxu0 0.0
    %3390 = vmatprep.subr.mxu0 0.0
    %3391 = vmatpush1.msra.mxu0 0.0
    %3392 = vmatprep.subr.mxu0 0.0
    %3393 = vmatpush1.msra.mxu0 0.0
    %3394 = vmatprep.subr.mxu0 0.0
    %3395 = vmatpush1.msra.mxu0 0.0
    %3396 = vmatprep.subr.mxu0 0.0
    %3397 = vmatpush1.msra.mxu0 0.0
    %3398 = vmatprep.subr.mxu0 0.0
    %3399 = vmatpush1.msra.mxu0 0.0
    %3400 = vmatprep.subr.mxu0 0.0
    %3401 = vmatpush1.msra.mxu0 0.0
    %3402 = vmatprep.subr.mxu0 0.0
    %3403 = vmatpush1.msra.mxu0 0.0
    %3404 = vmatprep.subr.mxu0 0.0
    %3405 = vmatpush1.msra.mxu0 0.0
    %3406 = vmatprep.subr.mxu0 0.0
    %3407 = vmatpush1.msra.mxu0 0.0
    %3408 = vmatprep.subr.mxu0 0.0
    %3409 = vmatpush1.msra.mxu0 0.0
    %3410 = vmatprep.subr.mxu0 0.0
    %3411 = vmatpush1.msra.mxu0 %v3376
    %3412 = vmatprep.subr.mxu0 0.0
    %3413 = vmatpush1.msra.mxu0 %v3375
    %3414 = vmatprep.subr.mxu0 0.0
    %3415 = vmatpush2.msra.mxu0 0.0
    %3416 = vmatprep.subr.mxu0 0.0
    %3417 = vmatpush2.msra.mxu0 0.0
    %3418 = vmatprep.subr.mxu0 0.0
    %3419 = vmatpush2.msra.mxu0 0.0
    %3420 = vmatprep.subr.mxu0 0.0
    %3421 = vmatpush2.msra.mxu0 0.0
    %3422 = vmatprep.subr.mxu0 0.0
    %3423 = vmatpush2.msra.mxu0 0.0
    %3424 = vmatprep.subr.mxu0 0.0
    %3425 = vmatpush2.msra.mxu0 0.0
    %3426 = vmatprep.subr.mxu0 0.0
    %3427 = vmatpush2.msra.mxu0 0.0
    %3428 = vmatprep.subr.mxu0 0.0
    %3429 = vmatpush2.msra.mxu0 0.0
    %3430 = vmatprep.subr.mxu0 0.0
    %3431 = vmatpush2.msra.mxu0 0.0
    %3432 = vmatprep.subr.mxu0 0.0
    %3433 = vmatpush2.msra.mxu0 0.0
    %3434 = vmatprep.subr.mxu0 0.0
    %3435 = vmatpush2.msra.mxu0 0.0
    %3436 = vmatprep.subr.mxu0 0.0
    %3437 = vmatpush2.msra.mxu0 0.0
    %3438 = vmatprep.subr.mxu0 0.0
    %3439 = vmatpush2.msra.mxu0 0.0
    %3440 = vmatprep.subr.mxu0 0.0
    %3441 = vmatpush2.msra.mxu0 0.0
    %3442 = vmatprep.subr.mxu0 0.0
    %3443 = vmatpush2.msra.mxu0 0.0
    %3444 = vmatprep.subr.mxu0 0.0
    %3445 = vmatpush2.msra.mxu0 0.0
    %3446 = vmatprep.mubr.f32.mxu0 0.0
    %3447 = vmatmul.mubr.f32.gmra.mxu0 %v3378
    %v3448 = vpop.f32.mrf.mxu0
    %v3449 = vadd.f32 0.0, %v3448
    %v3450 = vpop.f32.mrf.mxu0
    %3451 = vmatprep.mubr.f32.mxu0 0.0
    %3452 = vmatmul.mubr.f32.gmra.mxu0 %v3380
    %v3453 = vpop.f32.mrf.mxu0
    %v3454 = vadd.f32 0.0, %v3453
    %v3455 = vpop.f32.mrf.mxu0
    %3456 = vdwg.mxu0
    %v3457 = vadd.f32 %v3365, %v3449
    %v3458 = vadd.f32 %v3366, %v3454
    %vm3459 = vcmask 523264
    %v3460 = vsel %vm3459, %v3457, 0.0
    %vm3461 = vcmask 519168
    %v3462 = vsel %vm3461, %v3458, 0.0
    %v3463 = vadd.f32 %v3460, %v3462
    %v3464 = vrot.slane %v3463, 4
    %v3465 = vadd.f32 %v3463, %v3464
    %v3466 = vrot.slane %v3465, 2
    %v3467 = vadd.f32 %v3465, %v3466
    %v3468 = vrot.slane %v3467, 1
    %v3469 = vadd.f32 %v3467, %v3468
    %v3470 = vrcp.pop 12.0
    %v3471 = vmul.f32 %v3469, %v3470
    %v3472 = vsub.f32 %v3457, %v3471
    %v3473 = vsub.f32 %v3458, %v3471
    %v3474 = vmul.f32 %v3472, %v3472
    %v3475 = vmul.f32 %v3473, %v3473
    %v3476 = vsel %vm3459, %v3474, 0.0
    %v3477 = vsel %vm3461, %v3475, 0.0
    %v3478 = vadd.f32 %v3476, %v3477
    %v3479 = vrot.slane %v3478, 4
    %v3480 = vadd.f32 %v3478, %v3479
    %v3481 = vrot.slane %v3480, 2
    %v3482 = vadd.f32 %v3480, %v3481
    %v3483 = vrot.slane %v3482, 1
    %v3484 = vadd.f32 %v3482, %v3483
    %v3485 = vmul.f32 %v3484, %v3470
    %v3486 = vadd.f32 %v3485, 1e-05
    %v3487 = vrsqrt.pop %v3486
    %v3488 = vmul.f32 %v3472, %v3487
    %v3489 = vmul.f32 %v3473, %v3487
    %v3490 = vld [vmem:[%s8] sm:$0x1]
    %v3492 = vlaneseq
    %v3493 = vshrl.u32 %v3492, 7
    %v3494 = vsub.s32 0, %v3493
    %v3495 = vrot.slane %v3490, %v3494
    %v3497 = vmul.f32 %v3488, %v3495
    %v3498 = vmul.f32 %v3489, %v3495
    %v3499 = vld [vmem:[%s9] sm:$0x1]
    %v3501 = vlaneseq
    %v3502 = vshrl.u32 %v3501, 7
    %v3503 = vsub.s32 0, %v3502
    %v3504 = vrot.slane %v3499, %v3503
    %v3506 = vadd.f32 %v3497, %v3504
    %v3507 = vadd.f32 %v3498, %v3504
    %v3508 = vmax.f32 %v3506, 0.0
    %v3509 = vmax.f32 %v3507, 0.0
    %v3511 = vrot.slane %v3508, 5
    %v3513 = vsel %vm2128, %v3508, %v3511
    %3514 = vst.msk [vmem:[#allocation5] sm:$0xff] %vm3459, %v3508
    %3515 = vst.msk [vmem:[#allocation5 + $0x8] sm:$0xf] %vm3461, %v3509
    %v3516 = vld [vmem:[#allocation5] sm:$0x1]
    %v3517 = vld [vmem:[#allocation5 + $0x6] sm:$0x1]
    %v3519 = vrot.slane %v3517, 7
    %v3521 = vsel %vm2128, %v3516, %v3519
    %v3522 = vld [vmem:[#allocation7] sm:$0xff]
    %v3523 = vld [vmem:[#allocation7 + $0x8] sm:$0xff]
    %v3524 = vld [vmem:[#allocation7 + $0x10] sm:$0xff]
    %v3525 = vld [vmem:[#allocation7 + $0x18] sm:$0xff]
    %v3526 = vld [vmem:[#allocation7 + $0x20] sm:$0xff]
    %v3527 = vld [vmem:[#allocation7 + $0x28] sm:$0xff]
    %v3528 = vld [vmem:[#allocation7 + $0x30] sm:$0xff]
    %v3529 = vld [vmem:[#allocation7 + $0x38] sm:$0xff]
    %v3530 = vld [vmem:[#allocation5 + $0x1] sm:$0x1]
    %v3531 = vld [vmem:[#allocation5 + $0x7] sm:$0x1]
    %v3533 = vrot.slane %v3531, 7
    %v3535 = vsel %vm2128, %v3530, %v3533
    %v3536 = vld [vmem:[#allocation7 + $0x40] sm:$0xff]
    %v3537 = vld [vmem:[#allocation7 + $0x48] sm:$0xff]
    %v3538 = vld [vmem:[#allocation7 + $0x50] sm:$0xff]
    %v3539 = vld [vmem:[#allocation7 + $0x58] sm:$0xff]
    %v3540 = vld [vmem:[#allocation7 + $0x60] sm:$0xff]
    %v3541 = vld [vmem:[#allocation7 + $0x68] sm:$0xff]
    %v3542 = vld [vmem:[#allocation7 + $0x70] sm:$0xff]
    %v3543 = vld [vmem:[#allocation7 + $0x78] sm:$0xff]
    %v3545 = vsel %vm3459, %v3535, 0
    %3547 = vmatprep.subr.mxu0 0.0
    %3548 = vmatpush1.msra.mxu0 0.0
    %3549 = vmatprep.subr.mxu0 0.0
    %3550 = vmatpush1.msra.mxu0 0.0
    %3551 = vmatprep.subr.mxu0 0.0
    %3552 = vmatpush1.msra.mxu0 0.0
    %3553 = vmatprep.subr.mxu0 0.0
    %3554 = vmatpush1.msra.mxu0 0.0
    %3555 = vmatprep.subr.mxu0 0.0
    %3556 = vmatpush1.msra.mxu0 0.0
    %3557 = vmatprep.subr.mxu0 0.0
    %3558 = vmatpush1.msra.mxu0 0.0
    %3559 = vmatprep.subr.mxu0 0.0
    %3560 = vmatpush1.msra.mxu0 0.0
    %3561 = vmatprep.subr.mxu0 0.0
    %3562 = vmatpush1.msra.mxu0 0.0
    %3563 = vmatprep.subr.mxu0 0.0
    %3564 = vmatpush1.msra.mxu0 %v3543
    %3565 = vmatprep.subr.mxu0 0.0
    %3566 = vmatpush1.msra.mxu0 %v3542
    %3567 = vmatprep.subr.mxu0 0.0
    %3568 = vmatpush1.msra.mxu0 %v3541
    %3569 = vmatprep.subr.mxu0 0.0
    %3570 = vmatpush1.msra.mxu0 %v3540
    %3571 = vmatprep.subr.mxu0 0.0
    %3572 = vmatpush1.msra.mxu0 %v3539
    %3573 = vmatprep.subr.mxu0 0.0
    %3574 = vmatpush1.msra.mxu0 %v3538
    %3575 = vmatprep.subr.mxu0 0.0
    %3576 = vmatpush1.msra.mxu0 %v3537
    %3577 = vmatprep.subr.mxu0 0.0
    %3578 = vmatpush1.msra.mxu0 %v3536
    %3579 = vmatprep.subr.mxu0 0.0
    %3580 = vmatpush2.msra.mxu0 0.0
    %3581 = vmatprep.subr.mxu0 0.0
    %3582 = vmatpush2.msra.mxu0 0.0
    %3583 = vmatprep.subr.mxu0 0.0
    %3584 = vmatpush2.msra.mxu0 0.0
    %3585 = vmatprep.subr.mxu0 0.0
    %3586 = vmatpush2.msra.mxu0 0.0
    %3587 = vmatprep.subr.mxu0 0.0
    %3588 = vmatpush2.msra.mxu0 0.0
    %3589 = vmatprep.subr.mxu0 0.0
    %3590 = vmatpush2.msra.mxu0 0.0
    %3591 = vmatprep.subr.mxu0 0.0
    %3592 = vmatpush2.msra.mxu0 0.0
    %3593 = vmatprep.subr.mxu0 0.0
    %3594 = vmatpush2.msra.mxu0 0.0
    %3595 = vmatprep.subr.mxu0 0.0
    %3596 = vmatpush2.msra.mxu0 0.0
    %3597 = vmatprep.subr.mxu0 0.0
    %3598 = vmatpush2.msra.mxu0 0.0
    %3599 = vmatprep.subr.mxu0 0.0
    %3600 = vmatpush2.msra.mxu0 0.0
    %3601 = vmatprep.subr.mxu0 0.0
    %3602 = vmatpush2.msra.mxu0 0.0
    %3603 = vmatprep.subr.mxu0 0.0
    %3604 = vmatpush2.msra.mxu0 0.0
    %3605 = vmatprep.subr.mxu0 0.0
    %3606 = vmatpush2.msra.mxu0 0.0
    %3607 = vmatprep.subr.mxu0 0.0
    %3608 = vmatpush2.msra.mxu0 0.0
    %3609 = vmatprep.subr.mxu0 0.0
    %3610 = vmatpush2.msra.mxu0 0.0
    %3611 = vmatprep.mubr.f32.mxu0 0.0
    %3612 = vmatmul.mubr.f32.gmra.mxu0 %v3545
    %v3613 = vpop.f32.mrf.mxu0
    %v3614 = vadd.f32 0.0, %v3613
    %v3615 = vpop.f32.mrf.mxu0
    %3616 = vdwg.mxu0
    %v3618 = vsel %vm3459, %v3521, 0
    %3620 = vmatprep.subr.mxu0 0.0
    %3621 = vmatpush1.msra.mxu0 0.0
    %3622 = vmatprep.subr.mxu0 0.0
    %3623 = vmatpush1.msra.mxu0 0.0
    %3624 = vmatprep.subr.mxu0 0.0
    %3625 = vmatpush1.msra.mxu0 0.0
    %3626 = vmatprep.subr.mxu0 0.0
    %3627 = vmatpush1.msra.mxu0 0.0
    %3628 = vmatprep.subr.mxu0 0.0
    %3629 = vmatpush1.msra.mxu0 0.0
    %3630 = vmatprep.subr.mxu0 0.0
    %3631 = vmatpush1.msra.mxu0 0.0
    %3632 = vmatprep.subr.mxu0 0.0
    %3633 = vmatpush1.msra.mxu0 0.0
    %3634 = vmatprep.subr.mxu0 0.0
    %3635 = vmatpush1.msra.mxu0 0.0
    %3636 = vmatprep.subr.mxu0 0.0
    %3637 = vmatpush1.msra.mxu0 %v3529
    %3638 = vmatprep.subr.mxu0 0.0
    %3639 = vmatpush1.msra.mxu0 %v3528
    %3640 = vmatprep.subr.mxu0 0.0
    %3641 = vmatpush1.msra.mxu0 %v3527
    %3642 = vmatprep.subr.mxu0 0.0
    %3643 = vmatpush1.msra.mxu0 %v3526
    %3644 = vmatprep.subr.mxu0 0.0
    %3645 = vmatpush1.msra.mxu0 %v3525
    %3646 = vmatprep.subr.mxu0 0.0
    %3647 = vmatpush1.msra.mxu0 %v3524
    %3648 = vmatprep.subr.mxu0 0.0
    %3649 = vmatpush1.msra.mxu0 %v3523
    %3650 = vmatprep.subr.mxu0 0.0
    %3651 = vmatpush1.msra.mxu0 %v3522
    %3652 = vmatprep.subr.mxu0 0.0
    %3653 = vmatpush2.msra.mxu0 0.0
    %3654 = vmatprep.subr.mxu0 0.0
    %3655 = vmatpush2.msra.mxu0 0.0
    %3656 = vmatprep.subr.mxu0 0.0
    %3657 = vmatpush2.msra.mxu0 0.0
    %3658 = vmatprep.subr.mxu0 0.0
    %3659 = vmatpush2.msra.mxu0 0.0
    %3660 = vmatprep.subr.mxu0 0.0
    %3661 = vmatpush2.msra.mxu0 0.0
    %3662 = vmatprep.subr.mxu0 0.0
    %3663 = vmatpush2.msra.mxu0 0.0
    %3664 = vmatprep.subr.mxu0 0.0
    %3665 = vmatpush2.msra.mxu0 0.0
    %3666 = vmatprep.subr.mxu0 0.0
    %3667 = vmatpush2.msra.mxu0 0.0
    %3668 = vmatprep.subr.mxu0 0.0
    %3669 = vmatpush2.msra.mxu0 0.0
    %3670 = vmatprep.subr.mxu0 0.0
    %3671 = vmatpush2.msra.mxu0 0.0
    %3672 = vmatprep.subr.mxu0 0.0
    %3673 = vmatpush2.msra.mxu0 0.0
    %3674 = vmatprep.subr.mxu0 0.0
    %3675 = vmatpush2.msra.mxu0 0.0
    %3676 = vmatprep.subr.mxu0 0.0
    %3677 = vmatpush2.msra.mxu0 0.0
    %3678 = vmatprep.subr.mxu0 0.0
    %3679 = vmatpush2.msra.mxu0 0.0
    %3680 = vmatprep.subr.mxu0 0.0
    %3681 = vmatpush2.msra.mxu0 0.0
    %3682 = vmatprep.subr.mxu0 0.0
    %3683 = vmatpush2.msra.mxu0 0.0
    %3684 = vmatprep.mubr.f32.mxu0 0.0
    %3685 = vmatmul.mubr.f32.gmra.mxu0 %v3618
    %v3686 = vpop.f32.mrf.mxu0
    %v3687 = vadd.f32 %v3614, %v3686
    %v3688 = vpop.f32.mrf.mxu0
    %3689 = vdwg.mxu0
    %v3690 = vld [vmem:[#allocation5 + $0x2] sm:$0x1]
    %v3691 = vld [vmem:[#allocation5 + $0x8] sm:$0x1]
    %v3693 = vrot.slane %v3691, 7
    %v3695 = vsel %vm2128, %v3690, %v3693
    %v3696 = vld [vmem:[#allocation7 + $0x80] sm:$0xff]
    %v3697 = vld [vmem:[#allocation7 + $0x88] sm:$0xff]
    %v3698 = vld [vmem:[#allocation7 + $0x90] sm:$0xff]
    %v3699 = vld [vmem:[#allocation7 + $0x98] sm:$0xff]
    %v3700 = vld [vmem:[#allocation7 + $0xa0] sm:$0xff]
    %v3701 = vld [vmem:[#allocation7 + $0xa8] sm:$0xff]
    %v3702 = vld [vmem:[#allocation7 + $0xb0] sm:$0xff]
    %v3703 = vld [vmem:[#allocation7 + $0xb8] sm:$0xff]
    %v3705 = vsel %vm3459, %v3695, 0
    %3707 = vmatprep.subr.mxu0 0.0
    %3708 = vmatpush1.msra.mxu0 0.0
    %3709 = vmatprep.subr.mxu0 0.0
    %3710 = vmatpush1.msra.mxu0 0.0
    %3711 = vmatprep.subr.mxu0 0.0
    %3712 = vmatpush1.msra.mxu0 0.0
    %3713 = vmatprep.subr.mxu0 0.0
    %3714 = vmatpush1.msra.mxu0 0.0
    %3715 = vmatprep.subr.mxu0 0.0
    %3716 = vmatpush1.msra.mxu0 0.0
    %3717 = vmatprep.subr.mxu0 0.0
    %3718 = vmatpush1.msra.mxu0 0.0
    %3719 = vmatprep.subr.mxu0 0.0
    %3720 = vmatpush1.msra.mxu0 0.0
    %3721 = vmatprep.subr.mxu0 0.0
    %3722 = vmatpush1.msra.mxu0 0.0
    %3723 = vmatprep.subr.mxu0 0.0
    %3724 = vmatpush1.msra.mxu0 %v3703
    %3725 = vmatprep.subr.mxu0 0.0
    %3726 = vmatpush1.msra.mxu0 %v3702
    %3727 = vmatprep.subr.mxu0 0.0
    %3728 = vmatpush1.msra.mxu0 %v3701
    %3729 = vmatprep.subr.mxu0 0.0
    %3730 = vmatpush1.msra.mxu0 %v3700
    %3731 = vmatprep.subr.mxu0 0.0
    %3732 = vmatpush1.msra.mxu0 %v3699
    %3733 = vmatprep.subr.mxu0 0.0
    %3734 = vmatpush1.msra.mxu0 %v3698
    %3735 = vmatprep.subr.mxu0 0.0
    %3736 = vmatpush1.msra.mxu0 %v3697
    %3737 = vmatprep.subr.mxu0 0.0
    %3738 = vmatpush1.msra.mxu0 %v3696
    %3739 = vmatprep.subr.mxu0 0.0
    %3740 = vmatpush2.msra.mxu0 0.0
    %3741 = vmatprep.subr.mxu0 0.0
    %3742 = vmatpush2.msra.mxu0 0.0
    %3743 = vmatprep.subr.mxu0 0.0
    %3744 = vmatpush2.msra.mxu0 0.0
    %3745 = vmatprep.subr.mxu0 0.0
    %3746 = vmatpush2.msra.mxu0 0.0
    %3747 = vmatprep.subr.mxu0 0.0
    %3748 = vmatpush2.msra.mxu0 0.0
    %3749 = vmatprep.subr.mxu0 0.0
    %3750 = vmatpush2.msra.mxu0 0.0
    %3751 = vmatprep.subr.mxu0 0.0
    %3752 = vmatpush2.msra.mxu0 0.0
    %3753 = vmatprep.subr.mxu0 0.0
    %3754 = vmatpush2.msra.mxu0 0.0
    %3755 = vmatprep.subr.mxu0 0.0
    %3756 = vmatpush2.msra.mxu0 0.0
    %3757 = vmatprep.subr.mxu0 0.0
    %3758 = vmatpush2.msra.mxu0 0.0
    %3759 = vmatprep.subr.mxu0 0.0
    %3760 = vmatpush2.msra.mxu0 0.0
    %3761 = vmatprep.subr.mxu0 0.0
    %3762 = vmatpush2.msra.mxu0 0.0
    %3763 = vmatprep.subr.mxu0 0.0
    %3764 = vmatpush2.msra.mxu0 0.0
    %3765 = vmatprep.subr.mxu0 0.0
    %3766 = vmatpush2.msra.mxu0 0.0
    %3767 = vmatprep.subr.mxu0 0.0
    %3768 = vmatpush2.msra.mxu0 0.0
    %3769 = vmatprep.subr.mxu0 0.0
    %3770 = vmatpush2.msra.mxu0 0.0
    %3771 = vmatprep.mubr.f32.mxu0 0.0
    %3772 = vmatmul.mubr.f32.gmra.mxu0 %v3705
    %v3773 = vpop.f32.mrf.mxu0
    %v3774 = vadd.f32 0.0, %v3773
    %v3775 = vpop.f32.mrf.mxu0
    %3776 = vdwg.mxu0
    %v3777 = vadd.f32 %v3687, %v3774
    %v3778 = vld [vmem:[#allocation5 + $0x3] sm:$0x1]
    %v3779 = vld [vmem:[#allocation5 + $0x9] sm:$0x1]
    %v3781 = vrot.slane %v3779, 7
    %v3783 = vsel %vm2128, %v3778, %v3781
    %v3784 = vld [vmem:[#allocation7 + $0xc0] sm:$0xff]
    %v3785 = vld [vmem:[#allocation7 + $0xc8] sm:$0xff]
    %v3786 = vld [vmem:[#allocation7 + $0xd0] sm:$0xff]
    %v3787 = vld [vmem:[#allocation7 + $0xd8] sm:$0xff]
    %v3788 = vld [vmem:[#allocation7 + $0xe0] sm:$0xff]
    %v3789 = vld [vmem:[#allocation7 + $0xe8] sm:$0xff]
    %v3790 = vld [vmem:[#allocation7 + $0xf0] sm:$0xff]
    %v3791 = vld [vmem:[#allocation7 + $0xf8] sm:$0xff]
    %v3793 = vsel %vm3459, %v3783, 0
    %3795 = vmatprep.subr.mxu0 0.0
    %3796 = vmatpush1.msra.mxu0 0.0
    %3797 = vmatprep.subr.mxu0 0.0
    %3798 = vmatpush1.msra.mxu0 0.0
    %3799 = vmatprep.subr.mxu0 0.0
    %3800 = vmatpush1.msra.mxu0 0.0
    %3801 = vmatprep.subr.mxu0 0.0
    %3802 = vmatpush1.msra.mxu0 0.0
    %3803 = vmatprep.subr.mxu0 0.0
    %3804 = vmatpush1.msra.mxu0 0.0
    %3805 = vmatprep.subr.mxu0 0.0
    %3806 = vmatpush1.msra.mxu0 0.0
    %3807 = vmatprep.subr.mxu0 0.0
    %3808 = vmatpush1.msra.mxu0 0.0
    %3809 = vmatprep.subr.mxu0 0.0
    %3810 = vmatpush1.msra.mxu0 0.0
    %3811 = vmatprep.subr.mxu0 0.0
    %3812 = vmatpush1.msra.mxu0 %v3791
    %3813 = vmatprep.subr.mxu0 0.0
    %3814 = vmatpush1.msra.mxu0 %v3790
    %3815 = vmatprep.subr.mxu0 0.0
    %3816 = vmatpush1.msra.mxu0 %v3789
    %3817 = vmatprep.subr.mxu0 0.0
    %3818 = vmatpush1.msra.mxu0 %v3788
    %3819 = vmatprep.subr.mxu0 0.0
    %3820 = vmatpush1.msra.mxu0 %v3787
    %3821 = vmatprep.subr.mxu0 0.0
    %3822 = vmatpush1.msra.mxu0 %v3786
    %3823 = vmatprep.subr.mxu0 0.0
    %3824 = vmatpush1.msra.mxu0 %v3785
    %3825 = vmatprep.subr.mxu0 0.0
    %3826 = vmatpush1.msra.mxu0 %v3784
    %3827 = vmatprep.subr.mxu0 0.0
    %3828 = vmatpush2.msra.mxu0 0.0
    %3829 = vmatprep.subr.mxu0 0.0
    %3830 = vmatpush2.msra.mxu0 0.0
    %3831 = vmatprep.subr.mxu0 0.0
    %3832 = vmatpush2.msra.mxu0 0.0
    %3833 = vmatprep.subr.mxu0 0.0
    %3834 = vmatpush2.msra.mxu0 0.0
    %3835 = vmatprep.subr.mxu0 0.0
    %3836 = vmatpush2.msra.mxu0 0.0
    %3837 = vmatprep.subr.mxu0 0.0
    %3838 = vmatpush2.msra.mxu0 0.0
    %3839 = vmatprep.subr.mxu0 0.0
    %3840 = vmatpush2.msra.mxu0 0.0
    %3841 = vmatprep.subr.mxu0 0.0
    %3842 = vmatpush2.msra.mxu0 0.0
    %3843 = vmatprep.subr.mxu0 0.0
    %3844 = vmatpush2.msra.mxu0 0.0
    %3845 = vmatprep.subr.mxu0 0.0
    %3846 = vmatpush2.msra.mxu0 0.0
    %3847 = vmatprep.subr.mxu0 0.0
    %3848 = vmatpush2.msra.mxu0 0.0
    %3849 = vmatprep.subr.mxu0 0.0
    %3850 = vmatpush2.msra.mxu0 0.0
    %3851 = vmatprep.subr.mxu0 0.0
    %3852 = vmatpush2.msra.mxu0 0.0
    %3853 = vmatprep.subr.mxu0 0.0
    %3854 = vmatpush2.msra.mxu0 0.0
    %3855 = vmatprep.subr.mxu0 0.0
    %3856 = vmatpush2.msra.mxu0 0.0
    %3857 = vmatprep.subr.mxu0 0.0
    %3858 = vmatpush2.msra.mxu0 0.0
    %3859 = vmatprep.mubr.f32.mxu0 0.0
    %3860 = vmatmul.mubr.f32.gmra.mxu0 %v3793
    %v3861 = vpop.f32.mrf.mxu0
    %v3862 = vadd.f32 0.0, %v3861
    %v3863 = vpop.f32.mrf.mxu0
    %3864 = vdwg.mxu0
    %v3865 = vadd.f32 %v3777, %v3862
    %v3866 = vld [vmem:[#allocation5 + $0x4] sm:$0x1]
    %v3867 = vld [vmem:[#allocation5 + $0xa] sm:$0x1]
    %v3869 = vrot.slane %v3867, 7
    %v3871 = vsel %vm2128, %v3866, %v3869
    %v3872 = vld [vmem:[#allocation7 + $0x100] sm:$0xff]
    %v3873 = vld [vmem:[#allocation7 + $0x108] sm:$0xff]
    %v3874 = vld [vmem:[#allocation7 + $0x110] sm:$0xff]
    %v3875 = vld [vmem:[#allocation7 + $0x118] sm:$0xff]
    %v3876 = vld [vmem:[#allocation7 + $0x120] sm:$0xff]
    %v3877 = vld [vmem:[#allocation7 + $0x128] sm:$0xff]
    %v3878 = vld [vmem:[#allocation7 + $0x130] sm:$0xff]
    %v3879 = vld [vmem:[#allocation7 + $0x138] sm:$0xff]
    %v3881 = vsel %vm3459, %v3871, 0
    %3883 = vmatprep.subr.mxu0 0.0
    %3884 = vmatpush1.msra.mxu0 0.0
    %3885 = vmatprep.subr.mxu0 0.0
    %3886 = vmatpush1.msra.mxu0 0.0
    %3887 = vmatprep.subr.mxu0 0.0
    %3888 = vmatpush1.msra.mxu0 0.0
    %3889 = vmatprep.subr.mxu0 0.0
    %3890 = vmatpush1.msra.mxu0 0.0
    %3891 = vmatprep.subr.mxu0 0.0
    %3892 = vmatpush1.msra.mxu0 0.0
    %3893 = vmatprep.subr.mxu0 0.0
    %3894 = vmatpush1.msra.mxu0 0.0
    %3895 = vmatprep.subr.mxu0 0.0
    %3896 = vmatpush1.msra.mxu0 0.0
    %3897 = vmatprep.subr.mxu0 0.0
    %3898 = vmatpush1.msra.mxu0 0.0
    %3899 = vmatprep.subr.mxu0 0.0
    %3900 = vmatpush1.msra.mxu0 %v3879
    %3901 = vmatprep.subr.mxu0 0.0
    %3902 = vmatpush1.msra.mxu0 %v3878
    %3903 = vmatprep.subr.mxu0 0.0
    %3904 = vmatpush1.msra.mxu0 %v3877
    %3905 = vmatprep.subr.mxu0 0.0
    %3906 = vmatpush1.msra.mxu0 %v3876
    %3907 = vmatprep.subr.mxu0 0.0
    %3908 = vmatpush1.msra.mxu0 %v3875
    %3909 = vmatprep.subr.mxu0 0.0
    %3910 = vmatpush1.msra.mxu0 %v3874
    %3911 = vmatprep.subr.mxu0 0.0
    %3912 = vmatpush1.msra.mxu0 %v3873
    %3913 = vmatprep.subr.mxu0 0.0
    %3914 = vmatpush1.msra.mxu0 %v3872
    %3915 = vmatprep.subr.mxu0 0.0
    %3916 = vmatpush2.msra.mxu0 0.0
    %3917 = vmatprep.subr.mxu0 0.0
    %3918 = vmatpush2.msra.mxu0 0.0
    %3919 = vmatprep.subr.mxu0 0.0
    %3920 = vmatpush2.msra.mxu0 0.0
    %3921 = vmatprep.subr.mxu0 0.0
    %3922 = vmatpush2.msra.mxu0 0.0
    %3923 = vmatprep.subr.mxu0 0.0
    %3924 = vmatpush2.msra.mxu0 0.0
    %3925 = vmatprep.subr.mxu0 0.0
    %3926 = vmatpush2.msra.mxu0 0.0
    %3927 = vmatprep.subr.mxu0 0.0
    %3928 = vmatpush2.msra.mxu0 0.0
    %3929 = vmatprep.subr.mxu0 0.0
    %3930 = vmatpush2.msra.mxu0 0.0
    %3931 = vmatprep.subr.mxu0 0.0
    %3932 = vmatpush2.msra.mxu0 0.0
    %3933 = vmatprep.subr.mxu0 0.0
    %3934 = vmatpush2.msra.mxu0 0.0
    %3935 = vmatprep.subr.mxu0 0.0
    %3936 = vmatpush2.msra.mxu0 0.0
    %3937 = vmatprep.subr.mxu0 0.0
    %3938 = vmatpush2.msra.mxu0 0.0
    %3939 = vmatprep.subr.mxu0 0.0
    %3940 = vmatpush2.msra.mxu0 0.0
    %3941 = vmatprep.subr.mxu0 0.0
    %3942 = vmatpush2.msra.mxu0 0.0
    %3943 = vmatprep.subr.mxu0 0.0
    %3944 = vmatpush2.msra.mxu0 0.0
    %3945 = vmatprep.subr.mxu0 0.0
    %3946 = vmatpush2.msra.mxu0 0.0
    %3947 = vmatprep.mubr.f32.mxu0 0.0
    %3948 = vmatmul.mubr.f32.gmra.mxu0 %v3881
    %v3949 = vpop.f32.mrf.mxu0
    %v3950 = vadd.f32 0.0, %v3949
    %v3951 = vpop.f32.mrf.mxu0
    %3952 = vdwg.mxu0
    %v3953 = vadd.f32 %v3865, %v3950
    %v3954 = vsel %vm515, %v3953, 0.0
    %v3955 = vrot.slane %v3954, 4
    %v3956 = vadd.f32 %v3954, %v3955
    %v3957 = vrot.slane %v3956, 2
    %v3958 = vadd.f32 %v3956, %v3957
    %v3959 = vrot.slane %v3958, 1
    %v3960 = vadd.f32 %v3958, %v3959
    %v3961 = vmul.f32 %v3960, %v197
    %v3962 = vsub.f32 %v3953, %v3961
    %v3963 = vmul.f32 %v3962, %v3962
    %v3964 = vsel %vm515, %v3963, 0.0
    %v3965 = vrot.slane %v3964, 4
    %v3966 = vadd.f32 %v3964, %v3965
    %v3967 = vrot.slane %v3966, 2
    %v3968 = vadd.f32 %v3966, %v3967
    %v3969 = vrot.slane %v3968, 1
    %v3970 = vadd.f32 %v3968, %v3969
    %v3971 = vmul.f32 %v3970, %v197
    %v3972 = vadd.f32 %v3971, 1e-05
    %v3973 = vrsqrt.pop %v3972
    %v3974 = vmul.f32 %v3962, %v3973
    %v3975 = vld [vmem:[%s11] sm:$0x1]
    %v3977 = vlaneseq
    %v3978 = vshrl.u32 %v3977, 7
    %v3979 = vsub.s32 0, %v3978
    %v3980 = vrot.slane %v3975, %v3979
    %v3982 = vmul.f32 %v3974, %v3980
    %v3983 = vld [vmem:[%s12] sm:$0x1]
    %v3985 = vlaneseq
    %v3986 = vshrl.u32 %v3985, 7
    %v3987 = vsub.s32 0, %v3986
    %v3988 = vrot.slane %v3983, %v3987
    %v3990 = vadd.f32 %v3982, %v3988
    %v3991 = vmax.f32 %v3990, 0.0
    %v3992 = vld [vmem:[%s13] sm:$0xf]
    %v3993 = vld [vmem:[%s13 + $0x8] sm:$0xf]
    %v3994 = vld [vmem:[%s13] sm:$0xf0]
    %v3995 = vld [vmem:[%s13 + $0x8] sm:$0xf0]
    %v3996 = vld [vmem:[%s13 + $0x10] sm:$0xff]
    %v3997 = vld [vmem:[%s13 + $0x18] sm:$0xff]
    %v3998 = vld [vmem:[%s13 + $0x20] sm:$0xf]
    %v3999 = vld [vmem:[%s13 + $0x28] sm:$0xf]
    %v4006 = vrot.slane %v3994, 4
    %v4007 = vrot.slane %v3996, 4
    %v4008 = vsel %vm414, %v4006, %v4007
    %v4009 = vrot.slane %v3995, 4
    %v4010 = vrot.slane %v3997, 4
    %v4011 = vsel %vm414, %v4009, %v4010
    %v4012 = vrot.slane %v3998, 4
    %v4013 = vsel %vm414, %v4007, %v4012
    %v4014 = vrot.slane %v3999, 4
    %v4015 = vsel %vm414, %v4010, %v4014
    %v4021 = vsel %vm2925, %v2998, 0
    %4023 = vmatprep.subr.mxu0 0.0
    %4024 = vmatpush1.msra.mxu0 0.0
    %4025 = vmatprep.subr.mxu0 0.0
    %4026 = vmatpush1.msra.mxu0 0.0
    %4027 = vmatprep.subr.mxu0 0.0
    %4028 = vmatpush1.msra.mxu0 0.0
    %4029 = vmatprep.subr.mxu0 0.0
    %4030 = vmatpush1.msra.mxu0 0.0
    %4031 = vmatprep.subr.mxu0 0.0
    %4032 = vmatpush1.msra.mxu0 0.0
    %4033 = vmatprep.subr.mxu0 0.0
    %4034 = vmatpush1.msra.mxu0 0.0
    %4035 = vmatprep.subr.mxu0 0.0
    %4036 = vmatpush1.msra.mxu0 0.0
    %4037 = vmatprep.subr.mxu0 0.0
    %4038 = vmatpush1.msra.mxu0 0.0
    %4039 = vmatprep.subr.mxu0 0.0
    %4040 = vmatpush1.msra.mxu0 0.0
    %4041 = vmatprep.subr.mxu0 0.0
    %4042 = vmatpush1.msra.mxu0 0.0
    %4043 = vmatprep.subr.mxu0 0.0
    %4044 = vmatpush1.msra.mxu0 0.0
    %4045 = vmatprep.subr.mxu0 0.0
    %4046 = vmatpush1.msra.mxu0 0.0
    %4047 = vmatprep.subr.mxu0 0.0
    %4048 = vmatpush1.msra.mxu0 0.0
    %4049 = vmatprep.subr.mxu0 0.0
    %4050 = vmatpush1.msra.mxu0 0.0
    %4051 = vmatprep.subr.mxu0 %v4015
    %4052 = vmatpush1.msra.mxu0 %v4013
    %4053 = vmatprep.subr.mxu0 %v4011
    %4054 = vmatpush1.msra.mxu0 %v4008
    %4055 = vmatprep.subr.mxu0 0.0
    %4056 = vmatpush2.msra.mxu0 0.0
    %4057 = vmatprep.subr.mxu0 0.0
    %4058 = vmatpush2.msra.mxu0 0.0
    %4059 = vmatprep.subr.mxu0 0.0
    %4060 = vmatpush2.msra.mxu0 0.0
    %4061 = vmatprep.subr.mxu0 0.0
    %4062 = vmatpush2.msra.mxu0 0.0
    %4063 = vmatprep.subr.mxu0 0.0
    %4064 = vmatpush2.msra.mxu0 0.0
    %4065 = vmatprep.subr.mxu0 0.0
    %4066 = vmatpush2.msra.mxu0 0.0
    %4067 = vmatprep.subr.mxu0 0.0
    %4068 = vmatpush2.msra.mxu0 0.0
    %4069 = vmatprep.subr.mxu0 0.0
    %4070 = vmatpush2.msra.mxu0 0.0
    %4071 = vmatprep.subr.mxu0 0.0
    %4072 = vmatpush2.msra.mxu0 0.0
    %4073 = vmatprep.subr.mxu0 0.0
    %4074 = vmatpush2.msra.mxu0 0.0
    %4075 = vmatprep.subr.mxu0 0.0
    %4076 = vmatpush2.msra.mxu0 0.0
    %4077 = vmatprep.subr.mxu0 0.0
    %4078 = vmatpush2.msra.mxu0 0.0
    %4079 = vmatprep.subr.mxu0 0.0
    %4080 = vmatpush2.msra.mxu0 0.0
    %4081 = vmatprep.subr.mxu0 0.0
    %4082 = vmatpush2.msra.mxu0 0.0
    %4083 = vmatprep.subr.mxu0 0.0
    %4084 = vmatpush2.msra.mxu0 0.0
    %4085 = vmatprep.subr.mxu0 0.0
    %4086 = vmatpush2.msra.mxu0 0.0
    %4087 = vmatprep.mubr.f32.mxu0 0.0
    %4088 = vmatmul.mubr.f32.gmra.mxu0 %v4021
    %v4089 = vpop.f32.mrf.mxu0
    %v4090 = vadd.f32 0.0, %v4089
    %v4091 = vpop.f32.mrf.mxu0
    %v4092 = vadd.f32 0.0, %v4091
    %4093 = vdwg.mxu0
    %v4095 = vsel %vm1965, %v2129, 0
    %v4098 = vsel %vm414, %v3992, 0
    %v4101 = vsel %vm414, %v3993, 0
    %4103 = vmatprep.subr.mxu0 0.0
    %4104 = vmatpush1.msra.mxu0 0.0
    %4105 = vmatprep.subr.mxu0 0.0
    %4106 = vmatpush1.msra.mxu0 0.0
    %4107 = vmatprep.subr.mxu0 0.0
    %4108 = vmatpush1.msra.mxu0 0.0
    %4109 = vmatprep.subr.mxu0 0.0
    %4110 = vmatpush1.msra.mxu0 0.0
    %4111 = vmatprep.subr.mxu0 0.0
    %4112 = vmatpush1.msra.mxu0 0.0
    %4113 = vmatprep.subr.mxu0 0.0
    %4114 = vmatpush1.msra.mxu0 0.0
    %4115 = vmatprep.subr.mxu0 0.0
    %4116 = vmatpush1.msra.mxu0 0.0
    %4117 = vmatprep.subr.mxu0 0.0
    %4118 = vmatpush1.msra.mxu0 0.0
    %4119 = vmatprep.subr.mxu0 0.0
    %4120 = vmatpush1.msra.mxu0 0.0
    %4121 = vmatprep.subr.mxu0 0.0
    %4122 = vmatpush1.msra.mxu0 0.0
    %4123 = vmatprep.subr.mxu0 0.0
    %4124 = vmatpush1.msra.mxu0 0.0
    %4125 = vmatprep.subr.mxu0 0.0
    %4126 = vmatpush1.msra.mxu0 0.0
    %4127 = vmatprep.subr.mxu0 0.0
    %4128 = vmatpush1.msra.mxu0 0.0
    %4129 = vmatprep.subr.mxu0 0.0
    %4130 = vmatpush1.msra.mxu0 0.0
    %4131 = vmatprep.subr.mxu0 0.0
    %4132 = vmatpush1.msra.mxu0 0.0
    %4133 = vmatprep.subr.mxu0 %v4101
    %4134 = vmatpush1.msra.mxu0 %v4098
    %4135 = vmatprep.subr.mxu0 0.0
    %4136 = vmatpush2.msra.mxu0 0.0
    %4137 = vmatprep.subr.mxu0 0.0
    %4138 = vmatpush2.msra.mxu0 0.0
    %4139 = vmatprep.subr.mxu0 0.0
    %4140 = vmatpush2.msra.mxu0 0.0
    %4141 = vmatprep.subr.mxu0 0.0
    %4142 = vmatpush2.msra.mxu0 0.0
    %4143 = vmatprep.subr.mxu0 0.0
    %4144 = vmatpush2.msra.mxu0 0.0
    %4145 = vmatprep.subr.mxu0 0.0
    %4146 = vmatpush2.msra.mxu0 0.0
    %4147 = vmatprep.subr.mxu0 0.0
    %4148 = vmatpush2.msra.mxu0 0.0
    %4149 = vmatprep.subr.mxu0 0.0
    %4150 = vmatpush2.msra.mxu0 0.0
    %4151 = vmatprep.subr.mxu0 0.0
    %4152 = vmatpush2.msra.mxu0 0.0
    %4153 = vmatprep.subr.mxu0 0.0
    %4154 = vmatpush2.msra.mxu0 0.0
    %4155 = vmatprep.subr.mxu0 0.0
    %4156 = vmatpush2.msra.mxu0 0.0
    %4157 = vmatprep.subr.mxu0 0.0
    %4158 = vmatpush2.msra.mxu0 0.0
    %4159 = vmatprep.subr.mxu0 0.0
    %4160 = vmatpush2.msra.mxu0 0.0
    %4161 = vmatprep.subr.mxu0 0.0
    %4162 = vmatpush2.msra.mxu0 0.0
    %4163 = vmatprep.subr.mxu0 0.0
    %4164 = vmatpush2.msra.mxu0 0.0
    %4165 = vmatprep.subr.mxu0 0.0
    %4166 = vmatpush2.msra.mxu0 0.0
    %4167 = vmatprep.mubr.f32.mxu0 0.0
    %4168 = vmatmul.mubr.f32.gmra.mxu0 %v4095
    %v4169 = vpop.f32.mrf.mxu0
    %v4170 = vadd.f32 %v4090, %v4169
    %v4171 = vpop.f32.mrf.mxu0
    %v4172 = vadd.f32 %v4092, %v4171
    %4173 = vdwg.mxu0
    %v4174 = vld [vmem:[%s13 + $0x20] sm:$0xf0]
    %v4175 = vld [vmem:[%s13 + $0x28] sm:$0xf0]
    %v4176 = vld [vmem:[%s13 + $0x30] sm:$0xff]
    %v4177 = vld [vmem:[%s13 + $0x38] sm:$0xff]
    %v4178 = vld [vmem:[%s13 + $0x40] sm:$0xff]
    %v4179 = vld [vmem:[%s13 + $0x48] sm:$0xff]
    %v4180 = vld [vmem:[%s13 + $0x50] sm:$0xff]
    %v4181 = vld [vmem:[%s13 + $0x58] sm:$0xff]
    %v4182 = vld [vmem:[%s13 + $0x60] sm:$0xff]
    %v4183 = vld [vmem:[%s13 + $0x68] sm:$0xff]
    %v4184 = vld [vmem:[%s13 + $0x70] sm:$0xff]
    %v4185 = vld [vmem:[%s13 + $0x78] sm:$0xff]
    %v4186 = vld [vmem:[%s13 + $0x80] sm:$0xff]
    %v4187 = vld [vmem:[%s13 + $0x88] sm:$0xff]
    %v4188 = vld [vmem:[%s13 + $0x90] sm:$0xff]
    %v4189 = vld [vmem:[%s13 + $0x98] sm:$0xff]
    %v4190 = vld [vmem:[%s13 + $0xa0] sm:$0xf]
    %v4191 = vld [vmem:[%s13 + $0xa8] sm:$0xf]
    %v4210 = vrot.slane %v4174, 4
    %v4211 = vrot.slane %v4176, 4
    %v4212 = vsel %vm414, %v4210, %v4211
    %v4213 = vrot.slane %v4175, 4
    %v4214 = vrot.slane %v4177, 4
    %v4215 = vsel %vm414, %v4213, %v4214
    %v4216 = vrot.slane %v4178, 4
    %v4217 = vsel %vm414, %v4211, %v4216
    %v4218 = vrot.slane %v4179, 4
    %v4219 = vsel %vm414, %v4214, %v4218
    %v4220 = vrot.slane %v4180, 4
    %v4221 = vsel %vm414, %v4216, %v4220
    %v4222 = vrot.slane %v4181, 4
    %v4223 = vsel %vm414, %v4218, %v4222
    %v4224 = vrot.slane %v4182, 4
    %v4225 = vsel %vm414, %v4220, %v4224
    %v4226 = vrot.slane %v4183, 4
    %v4227 = vsel %vm414, %v4222, %v4226
    %v4228 = vrot.slane %v4184, 4
    %v4229 = vsel %vm414, %v4224, %v4228
    %v4230 = vrot.slane %v4185, 4
    %v4231 = vsel %vm414, %v4226, %v4230
    %v4232 = vrot.slane %v4186, 4
    %v4233 = vsel %vm414, %v4228, %v4232
    %v4234 = vrot.slane %v4187, 4
    %v4235 = vsel %vm414, %v4230, %v4234
    %v4236 = vrot.slane %v4188, 4
    %v4237 = vsel %vm414, %v4232, %v4236
    %v4238 = vrot.slane %v4189, 4
    %v4239 = vsel %vm414, %v4234, %v4238
    %v4240 = vrot.slane %v4190, 4
    %v4241 = vsel %vm414, %v4236, %v4240
    %v4242 = vrot.slane %v4191, 4
    %v4243 = vsel %vm414, %v4238, %v4242
    %v4261 = vsel %vm3459, %v3513, 0
    %4263 = vmatprep.subr.mxu0 0.0
    %4264 = vmatpush1.msra.mxu0 0.0
    %4265 = vmatprep.subr.mxu0 0.0
    %4266 = vmatpush1.msra.mxu0 0.0
    %4267 = vmatprep.subr.mxu0 0.0
    %4268 = vmatpush1.msra.mxu0 0.0
    %4269 = vmatprep.subr.mxu0 0.0
    %4270 = vmatpush1.msra.mxu0 0.0
    %4271 = vmatprep.subr.mxu0 0.0
    %4272 = vmatpush1.msra.mxu0 0.0
    %4273 = vmatprep.subr.mxu0 0.0
    %4274 = vmatpush1.msra.mxu0 0.0
    %4275 = vmatprep.subr.mxu0 0.0
    %4276 = vmatpush1.msra.mxu0 0.0
    %4277 = vmatprep.subr.mxu0 0.0
    %4278 = vmatpush1.msra.mxu0 0.0
    %4279 = vmatprep.subr.mxu0 %v4243
    %4280 = vmatpush1.msra.mxu0 %v4241
    %4281 = vmatprep.subr.mxu0 %v4239
    %4282 = vmatpush1.msra.mxu0 %v4237
    %4283 = vmatprep.subr.mxu0 %v4235
    %4284 = vmatpush1.msra.mxu0 %v4233
    %4285 = vmatprep.subr.mxu0 %v4231
    %4286 = vmatpush1.msra.mxu0 %v4229
    %4287 = vmatprep.subr.mxu0 %v4227
    %4288 = vmatpush1.msra.mxu0 %v4225
    %4289 = vmatprep.subr.mxu0 %v4223
    %4290 = vmatpush1.msra.mxu0 %v4221
    %4291 = vmatprep.subr.mxu0 %v4219
    %4292 = vmatpush1.msra.mxu0 %v4217
    %4293 = vmatprep.subr.mxu0 %v4215
    %4294 = vmatpush1.msra.mxu0 %v4212
    %4295 = vmatprep.subr.mxu0 0.0
    %4296 = vmatpush2.msra.mxu0 0.0
    %4297 = vmatprep.subr.mxu0 0.0
    %4298 = vmatpush2.msra.mxu0 0.0
    %4299 = vmatprep.subr.mxu0 0.0
    %4300 = vmatpush2.msra.mxu0 0.0
    %4301 = vmatprep.subr.mxu0 0.0
    %4302 = vmatpush2.msra.mxu0 0.0
    %4303 = vmatprep.subr.mxu0 0.0
    %4304 = vmatpush2.msra.mxu0 0.0
    %4305 = vmatprep.subr.mxu0 0.0
    %4306 = vmatpush2.msra.mxu0 0.0
    %4307 = vmatprep.subr.mxu0 0.0
    %4308 = vmatpush2.msra.mxu0 0.0
    %4309 = vmatprep.subr.mxu0 0.0
    %4310 = vmatpush2.msra.mxu0 0.0
    %4311 = vmatprep.subr.mxu0 0.0
    %4312 = vmatpush2.msra.mxu0 0.0
    %4313 = vmatprep.subr.mxu0 0.0
    %4314 = vmatpush2.msra.mxu0 0.0
    %4315 = vmatprep.subr.mxu0 0.0
    %4316 = vmatpush2.msra.mxu0 0.0
    %4317 = vmatprep.subr.mxu0 0.0
    %4318 = vmatpush2.msra.mxu0 0.0
    %4319 = vmatprep.subr.mxu0 0.0
    %4320 = vmatpush2.msra.mxu0 0.0
    %4321 = vmatprep.subr.mxu0 0.0
    %4322 = vmatpush2.msra.mxu0 0.0
    %4323 = vmatprep.subr.mxu0 0.0
    %4324 = vmatpush2.msra.mxu0 0.0
    %4325 = vmatprep.subr.mxu0 0.0
    %4326 = vmatpush2.msra.mxu0 0.0
    %4327 = vmatprep.mubr.f32.mxu0 0.0
    %4328 = vmatmul.mubr.f32.gmra.mxu0 %v4261
    %v4329 = vpop.f32.mrf.mxu0
    %v4330 = vadd.f32 0.0, %v4329
    %v4331 = vpop.f32.mrf.mxu0
    %v4332 = vadd.f32 0.0, %v4331
    %4333 = vdwg.mxu0
    %v4334 = vadd.f32 %v4170, %v4330
    %v4335 = vadd.f32 %v4172, %v4332
    %v4336 = vld [vmem:[%s13 + $0xa0] sm:$0xf0]
    %v4337 = vld [vmem:[%s13 + $0xa8] sm:$0xf0]
    %v4338 = vld [vmem:[%s13 + $0xb0] sm:$0xff]
    %v4339 = vld [vmem:[%s13 + $0xb8] sm:$0xff]
    %v4340 = vld [vmem:[%s13 + $0xc0] sm:$0xff]
    %v4341 = vld [vmem:[%s13 + $0xc8] sm:$0xff]
    %v4342 = vld [vmem:[%s13 + $0xd0] sm:$0xff]
    %v4343 = vld [vmem:[%s13 + $0xd8] sm:$0xff]
    %v4344 = vld [vmem:[%s13 + $0xe0] sm:$0xff]
    %v4345 = vld [vmem:[%s13 + $0xe8] sm:$0xff]
    %v4346 = vld [vmem:[%s13 + $0xf0] sm:$0xff]
    %v4347 = vld [vmem:[%s13 + $0xf8] sm:$0xff]
    %v4348 = vld [vmem:[%s13 + $0x100] sm:$0xff]
    %v4349 = vld [vmem:[%s13 + $0x108] sm:$0xff]
    %v4350 = vld [vmem:[%s13 + $0x110] sm:$0xff]
    %v4351 = vld [vmem:[%s13 + $0x118] sm:$0xff]
    %v4352 = vld [vmem:[%s13 + $0x120] sm:$0xff]
    %v4353 = vld [vmem:[%s13 + $0x128] sm:$0xff]
    %v4354 = vld [vmem:[%s13 + $0x130] sm:$0xff]
    %v4355 = vld [vmem:[%s13 + $0x138] sm:$0xff]
    %v4356 = vld [vmem:[%s13 + $0x140] sm:$0xff]
    %v4357 = vld [vmem:[%s13 + $0x148] sm:$0xff]
    %v4358 = vld [vmem:[%s13 + $0x150] sm:$0xff]
    %v4359 = vld [vmem:[%s13 + $0x158] sm:$0xff]
    %v4360 = vld [vmem:[%s13 + $0x160] sm:$0xff]
    %v4361 = vld [vmem:[%s13 + $0x168] sm:$0xff]
    %v4362 = vld [vmem:[%s13 + $0x170] sm:$0xff]
    %v4363 = vld [vmem:[%s13 + $0x178] sm:$0xff]
    %v4364 = vld [vmem:[%s13 + $0x180] sm:$0xff]
    %v4365 = vld [vmem:[%s13 + $0x188] sm:$0xff]
    %v4366 = vld [vmem:[%s13 + $0x190] sm:$0xff]
    %v4367 = vld [vmem:[%s13 + $0x198] sm:$0xff]
    %v4368 = vld [vmem:[%s13 + $0x1a0] sm:$0xf]
    %v4369 = vld [vmem:[%s13 + $0x1a8] sm:$0xf]
    %v4404 = vrot.slane %v4336, 4
    %v4405 = vrot.slane %v4338, 4
    %v4406 = vsel %vm414, %v4404, %v4405
    %v4407 = vrot.slane %v4337, 4
    %v4408 = vrot.slane %v4339, 4
    %v4409 = vsel %vm414, %v4407, %v4408
    %v4410 = vrot.slane %v4340, 4
    %v4411 = vsel %vm414, %v4405, %v4410
    %v4412 = vrot.slane %v4341, 4
    %v4413 = vsel %vm414, %v4408, %v4412
    %v4414 = vrot.slane %v4342, 4
    %v4415 = vsel %vm414, %v4410, %v4414
    %v4416 = vrot.slane %v4343, 4
    %v4417 = vsel %vm414, %v4412, %v4416
    %v4418 = vrot.slane %v4344, 4
    %v4419 = vsel %vm414, %v4414, %v4418
    %v4420 = vrot.slane %v4345, 4
    %v4421 = vsel %vm414, %v4416, %v4420
    %v4422 = vrot.slane %v4346, 4
    %v4423 = vsel %vm414, %v4418, %v4422
    %v4424 = vrot.slane %v4347, 4
    %v4425 = vsel %vm414, %v4420, %v4424
    %v4426 = vrot.slane %v4348, 4
    %v4427 = vsel %vm414, %v4422, %v4426
    %v4428 = vrot.slane %v4349, 4
    %v4429 = vsel %vm414, %v4424, %v4428
    %v4430 = vrot.slane %v4350, 4
    %v4431 = vsel %vm414, %v4426, %v4430
    %v4432 = vrot.slane %v4351, 4
    %v4433 = vsel %vm414, %v4428, %v4432
    %v4434 = vrot.slane %v4352, 4
    %v4435 = vsel %vm414, %v4430, %v4434
    %v4436 = vrot.slane %v4353, 4
    %v4437 = vsel %vm414, %v4432, %v4436
    %v4438 = vrot.slane %v4354, 4
    %v4439 = vsel %vm414, %v4434, %v4438
    %v4440 = vrot.slane %v4355, 4
    %v4441 = vsel %vm414, %v4436, %v4440
    %v4442 = vrot.slane %v4356, 4
    %v4443 = vsel %vm414, %v4438, %v4442
    %v4444 = vrot.slane %v4357, 4
    %v4445 = vsel %vm414, %v4440, %v4444
    %v4446 = vrot.slane %v4358, 4
    %v4447 = vsel %vm414, %v4442, %v4446
    %v4448 = vrot.slane %v4359, 4
    %v4449 = vsel %vm414, %v4444, %v4448
    %v4450 = vrot.slane %v4360, 4
    %v4451 = vsel %vm414, %v4446, %v4450
    %v4452 = vrot.slane %v4361, 4
    %v4453 = vsel %vm414, %v4448, %v4452
    %v4454 = vrot.slane %v4362, 4
    %v4455 = vsel %vm414, %v4450, %v4454
    %v4456 = vrot.slane %v4363, 4
    %v4457 = vsel %vm414, %v4452, %v4456
    %v4458 = vrot.slane %v4364, 4
    %v4459 = vsel %vm414, %v4454, %v4458
    %v4460 = vrot.slane %v4365, 4
    %v4461 = vsel %vm414, %v4456, %v4460
    %v4462 = vrot.slane %v4366, 4
    %v4463 = vsel %vm414, %v4458, %v4462
    %v4464 = vrot.slane %v4367, 4
    %v4465 = vsel %vm414, %v4460, %v4464
    %v4466 = vrot.slane %v4368, 4
    %v4467 = vsel %vm414, %v4462, %v4466
    %v4468 = vrot.slane %v4369, 4
    %v4469 = vsel %vm414, %v4464, %v4468
    %4502 = vmatprep.subr.mxu0 %v4469
    %4503 = vmatpush1.msra.mxu0 %v4467
    %4504 = vmatprep.subr.mxu0 %v4465
    %4505 = vmatpush1.msra.mxu0 %v4463
    %4506 = vmatprep.subr.mxu0 %v4461
    %4507 = vmatpush1.msra.mxu0 %v4459
    %4508 = vmatprep.subr.mxu0 %v4457
    %4509 = vmatpush1.msra.mxu0 %v4455
    %4510 = vmatprep.subr.mxu0 %v4453
    %4511 = vmatpush1.msra.mxu0 %v4451
    %4512 = vmatprep.subr.mxu0 %v4449
    %4513 = vmatpush1.msra.mxu0 %v4447
    %4514 = vmatprep.subr.mxu0 %v4445
    %4515 = vmatpush1.msra.mxu0 %v4443
    %4516 = vmatprep.subr.mxu0 %v4441
    %4517 = vmatpush1.msra.mxu0 %v4439
    %4518 = vmatprep.subr.mxu0 %v4437
    %4519 = vmatpush1.msra.mxu0 %v4435
    %4520 = vmatprep.subr.mxu0 %v4433
    %4521 = vmatpush1.msra.mxu0 %v4431
    %4522 = vmatprep.subr.mxu0 %v4429
    %4523 = vmatpush1.msra.mxu0 %v4427
    %4524 = vmatprep.subr.mxu0 %v4425
    %4525 = vmatpush1.msra.mxu0 %v4423
    %4526 = vmatprep.subr.mxu0 %v4421
    %4527 = vmatpush1.msra.mxu0 %v4419
    %4528 = vmatprep.subr.mxu0 %v4417
    %4529 = vmatpush1.msra.mxu0 %v4415
    %4530 = vmatprep.subr.mxu0 %v4413
    %4531 = vmatpush1.msra.mxu0 %v4411
    %4532 = vmatprep.subr.mxu0 %v4409
    %4533 = vmatpush1.msra.mxu0 %v4406
    %4534 = vmatprep.subr.mxu0 0.0
    %4535 = vmatpush2.msra.mxu0 0.0
    %4536 = vmatprep.subr.mxu0 0.0
    %4537 = vmatpush2.msra.mxu0 0.0
    %4538 = vmatprep.subr.mxu0 0.0
    %4539 = vmatpush2.msra.mxu0 0.0
    %4540 = vmatprep.subr.mxu0 0.0
    %4541 = vmatpush2.msra.mxu0 0.0
    %4542 = vmatprep.subr.mxu0 0.0
    %4543 = vmatpush2.msra.mxu0 0.0
    %4544 = vmatprep.subr.mxu0 0.0
    %4545 = vmatpush2.msra.mxu0 0.0
    %4546 = vmatprep.subr.mxu0 0.0
    %4547 = vmatpush2.msra.mxu0 0.0
    %4548 = vmatprep.subr.mxu0 0.0
    %4549 = vmatpush2.msra.mxu0 0.0
    %4550 = vmatprep.subr.mxu0 0.0
    %4551 = vmatpush2.msra.mxu0 0.0
    %4552 = vmatprep.subr.mxu0 0.0
    %4553 = vmatpush2.msra.mxu0 0.0
    %4554 = vmatprep.subr.mxu0 0.0
    %4555 = vmatpush2.msra.mxu0 0.0
    %4556 = vmatprep.subr.mxu0 0.0
    %4557 = vmatpush2.msra.mxu0 0.0
    %4558 = vmatprep.subr.mxu0 0.0
    %4559 = vmatpush2.msra.mxu0 0.0
    %4560 = vmatprep.subr.mxu0 0.0
    %4561 = vmatpush2.msra.mxu0 0.0
    %4562 = vmatprep.subr.mxu0 0.0
    %4563 = vmatpush2.msra.mxu0 0.0
    %4564 = vmatprep.subr.mxu0 0.0
    %4565 = vmatpush2.msra.mxu0 0.0
    %4566 = vmatprep.mubr.f32.mxu0 0.0
    %4567 = vmatmul.mubr.f32.gmra.mxu0 %v3991
    %v4568 = vpop.f32.mrf.mxu0
    %v4569 = vadd.f32 0.0, %v4568
    %v4570 = vpop.f32.mrf.mxu0
    %v4571 = vadd.f32 0.0, %v4570
    %4572 = vdwg.mxu0
    %v4573 = vadd.f32 %v4334, %v4569
    %v4574 = vadd.f32 %v4335, %v4571
    %v4575 = vsel %vm515, %v4573, 0.0
    %v4576 = vrot.slane %v4575, 4
    %v4577 = vadd.f32 %v4575, %v4576
    %v4578 = vrot.slane %v4577, 2
    %v4579 = vadd.f32 %v4577, %v4578
    %v4580 = vrot.slane %v4579, 1
    %v4581 = vadd.f32 %v4579, %v4580
    %vm4582 = vcmask 680960
    %v4583 = vsel %vm4582, %v4574, 0.0
    %v4584 = vrot.slane %v4583, 4
    %v4585 = vadd.f32 %v4583, %v4584
    %v4586 = vrot.slane %v4585, 2
    %v4587 = vadd.f32 %v4585, %v4586
    %v4588 = vrot.slane %v4587, 1
    %v4589 = vadd.f32 %v4587, %v4588
    %v4590 = vmul.f32 %v4581, %v197
    %v4591 = vmul.f32 %v4589, %v197
    %v4592 = vsub.f32 %v4573, %v4590
    %v4593 = vsub.f32 %v4574, %v4591
    %v4594 = vmul.f32 %v4592, %v4592
    %v4595 = vmul.f32 %v4593, %v4593
    %v4596 = vsel %vm515, %v4594, 0.0
    %v4597 = vrot.slane %v4596, 4
    %v4598 = vadd.f32 %v4596, %v4597
    %v4599 = vrot.slane %v4598, 2
    %v4600 = vadd.f32 %v4598, %v4599
    %v4601 = vrot.slane %v4600, 1
    %v4602 = vadd.f32 %v4600, %v4601
    %v4603 = vsel %vm4582, %v4595, 0.0
    %v4604 = vrot.slane %v4603, 4
    %v4605 = vadd.f32 %v4603, %v4604
    %v4606 = vrot.slane %v4605, 2
    %v4607 = vadd.f32 %v4605, %v4606
    %v4608 = vrot.slane %v4607, 1
    %v4609 = vadd.f32 %v4607, %v4608
    %v4610 = vmul.f32 %v4602, %v197
    %v4611 = vmul.f32 %v4609, %v197
    %v4612 = vadd.f32 %v4610, 1e-05
    %v4613 = vadd.f32 %v4611, 1e-05
    %v4614 = vrsqrt.pop %v4612
    %v4615 = vrsqrt.pop %v4613
    %v4616 = vmul.f32 %v4592, %v4614
    %v4617 = vmul.f32 %v4593, %v4615
    %v4618 = vld [vmem:[%s14] sm:$0x3]
    %v4620 = vlaneseq
    %v4621 = vshrl.u32 %v4620, 7
    %v4622 = vsub.s32 0, %v4621
    %v4623 = vrot.slane %v4618, %v4622
    %v4624 = vlaneseq
    %v4625 = vshrl.u32 %v4624, 7
    %v4626 = vsub.s32 1, %v4625
    %v4627 = vrot.slane %v4618, %v4626
    %v4630 = vmul.f32 %v4616, %v4623
    %v4631 = vmul.f32 %v4617, %v4627
    %v4632 = vld [vmem:[%s15] sm:$0x3]
    %v4634 = vlaneseq
    %v4635 = vshrl.u32 %v4634, 7
    %v4636 = vsub.s32 0, %v4635
    %v4637 = vrot.slane %v4632, %v4636
    %v4638 = vlaneseq
    %v4639 = vshrl.u32 %v4638, 7
    %v4640 = vsub.s32 1, %v4639
    %v4641 = vrot.slane %v4632, %v4640
    %v4644 = vadd.f32 %v4630, %v4637
    %v4645 = vadd.f32 %v4631, %v4641
    %v4646 = vmax.f32 %v4644, 0.0
    %v4647 = vmax.f32 %v4645, 0.0
    %v4648 = vld [vmem:[%s16] sm:$0xff]
    %v4649 = vld [vmem:[%s16 + $0x8] sm:$0xff]
    %v4650 = vld [vmem:[%s16 + $0x10] sm:$0xff]
    %v4651 = vld [vmem:[%s16 + $0x18] sm:$0xff]
    %v4652 = vld [vmem:[%s16 + $0x20] sm:$0xff]
    %v4653 = vld [vmem:[%s16 + $0x28] sm:$0xff]
    %v4654 = vld [vmem:[%s16 + $0x30] sm:$0xff]
    %v4655 = vld [vmem:[%s16 + $0x38] sm:$0xff]
    %v4656 = vld [vmem:[%s16 + $0x40] sm:$0xff]
    %v4657 = vld [vmem:[%s16 + $0x48] sm:$0xff]
    %v4658 = vld [vmem:[%s16 + $0x50] sm:$0xff]
    %v4659 = vld [vmem:[%s16 + $0x58] sm:$0xff]
    %v4660 = vld [vmem:[%s16 + $0x60] sm:$0xff]
    %v4661 = vld [vmem:[%s16 + $0x68] sm:$0xff]
    %v4662 = vld [vmem:[%s16 + $0x70] sm:$0xff]
    %v4663 = vld [vmem:[%s16 + $0x78] sm:$0xff]
    %v4664 = vld [vmem:[%s16 + $0x80] sm:$0xff]
    %v4665 = vld [vmem:[%s16 + $0x88] sm:$0xff]
    %v4666 = vld [vmem:[%s16 + $0x90] sm:$0xff]
    %v4667 = vld [vmem:[%s16 + $0x98] sm:$0xff]
    %v4668 = vld [vmem:[%s16 + $0xa0] sm:$0xff]
    %v4669 = vld [vmem:[%s16 + $0xa8] sm:$0xff]
    %v4670 = vld [vmem:[%s16 + $0xb0] sm:$0xff]
    %v4671 = vld [vmem:[%s16 + $0xb8] sm:$0xff]
    %v4672 = vld [vmem:[%s16 + $0xc0] sm:$0xff]
    %v4673 = vld [vmem:[%s16 + $0xc8] sm:$0xff]
    %v4674 = vld [vmem:[%s16 + $0xd0] sm:$0xf]
    %v4675 = vld [vmem:[#allocation6] sm:$0x1]
    %v4677 = vlaneseq
    %v4678 = vshrl.u32 %v4677, 7
    %v4679 = vsub.s32 0, %v4678
    %v4680 = vrot.slane %v4675, %v4679
    %vm4682 = vcmask 687104
    %v4684 = vsel %vm4682, %v4647, 0
    %v4687 = vsel %vm414, %v4674, 0
    %4689 = vmatprep.subr.mxu0 0.0
    %4690 = vmatpush1.msra.mxu0 %v4663
    %4691 = vmatprep.subr.mxu0 0.0
    %4692 = vmatpush1.msra.mxu0 %v4662
    %4693 = vmatprep.subr.mxu0 0.0
    %4694 = vmatpush1.msra.mxu0 %v4661
    %4695 = vmatprep.subr.mxu0 0.0
    %4696 = vmatpush1.msra.mxu0 %v4660
    %4697 = vmatprep.subr.mxu0 0.0
    %4698 = vmatpush1.msra.mxu0 %v4659
    %4699 = vmatprep.subr.mxu0 0.0
    %4700 = vmatpush1.msra.mxu0 %v4658
    %4701 = vmatprep.subr.mxu0 0.0
    %4702 = vmatpush1.msra.mxu0 %v4657
    %4703 = vmatprep.subr.mxu0 0.0
    %4704 = vmatpush1.msra.mxu0 %v4656
    %4705 = vmatprep.subr.mxu0 0.0
    %4706 = vmatpush1.msra.mxu0 %v4655
    %4707 = vmatprep.subr.mxu0 0.0
    %4708 = vmatpush1.msra.mxu0 %v4654
    %4709 = vmatprep.subr.mxu0 0.0
    %4710 = vmatpush1.msra.mxu0 %v4653
    %4711 = vmatprep.subr.mxu0 0.0
    %4712 = vmatpush1.msra.mxu0 %v4652
    %4713 = vmatprep.subr.mxu0 0.0
    %4714 = vmatpush1.msra.mxu0 %v4651
    %4715 = vmatprep.subr.mxu0 0.0
    %4716 = vmatpush1.msra.mxu0 %v4650
    %4717 = vmatprep.subr.mxu0 0.0
    %4718 = vmatpush1.msra.mxu0 %v4649
    %4719 = vmatprep.subr.mxu0 0.0
    %4720 = vmatpush1.msra.mxu0 %v4648
    %4721 = vmatprep.subr.mxu0 0.0
    %4722 = vmatpush2.msra.mxu0 0.0
    %4723 = vmatprep.subr.mxu0 0.0
    %4724 = vmatpush2.msra.mxu0 0.0
    %4725 = vmatprep.subr.mxu0 0.0
    %4726 = vmatpush2.msra.mxu0 0.0
    %4727 = vmatprep.subr.mxu0 0.0
    %4728 = vmatpush2.msra.mxu0 0.0
    %4729 = vmatprep.subr.mxu0 0.0
    %4730 = vmatpush2.msra.mxu0 0.0
    %4731 = vmatprep.subr.mxu0 0.0
    %4732 = vmatpush2.msra.mxu0 %v4687
    %4733 = vmatprep.subr.mxu0 0.0
    %4734 = vmatpush2.msra.mxu0 %v4673
    %4735 = vmatprep.subr.mxu0 0.0
    %4736 = vmatpush2.msra.mxu0 %v4672
    %4737 = vmatprep.subr.mxu0 0.0
    %4738 = vmatpush2.msra.mxu0 %v4671
    %4739 = vmatprep.subr.mxu0 0.0
    %4740 = vmatpush2.msra.mxu0 %v4670
    %4741 = vmatprep.subr.mxu0 0.0
    %4742 = vmatpush2.msra.mxu0 %v4669
    %4743 = vmatprep.subr.mxu0 0.0
    %4744 = vmatpush2.msra.mxu0 %v4668
    %4745 = vmatprep.subr.mxu0 0.0
    %4746 = vmatpush2.msra.mxu0 %v4667
    %4747 = vmatprep.subr.mxu0 0.0
    %4748 = vmatpush2.msra.mxu0 %v4666
    %4749 = vmatprep.subr.mxu0 0.0
    %4750 = vmatpush2.msra.mxu0 %v4665
    %4751 = vmatprep.subr.mxu0 0.0
    %4752 = vmatpush2.msra.mxu0 %v4664
    %4753 = vmatprep.mubr.f32.mxu0 %v4684
    %4754 = vmatmul.mubr.f32.gmra.mxu0 %v4646
    %v4755 = vpop.f32.mrf.mxu0
    %v4756 = vadd.f32 %v4680, %v4755
    %v4757 = vpop.f32.mrf.mxu0
    %4758 = vdwg.mxu0
    %vm4759 = vcmask 1024
    %4760 = vst.msk [vmem:[%s18] sm:$0x3] %vm4759, %v4756
    // Predicated region
    $region78: #{net_forward.1} parent=1 // pred_check
      _
    $region79: #{net_forward.1} parent=1 // pred_check_branch
      %4762 = sbr.rel (0) target = $region81
    $region80: #{net_forward.1} parent=1 // pred_region
      _
    $region81: #{net_forward.1} parent=1 // pred_fallthru
      _
    // Predicated region
    $region82: #{net_forward.1} parent=1 // pred_check
      _
    $region83: #{net_forward.1} parent=1 // pred_check_branch
      %4764 = sbr.rel (0) target = $region85
    $region84: #{net_forward.1} parent=1 // pred_region
      _
    $region85: #{net_forward.1} parent=1 // pred_fallthru
      _
    %4765 = vsyncpa [#allocation8], 1

</llo_original>
